<compile_context>
chip_gen: v5e
topology: v5e:2x2
jax: 0.10.0
libtpu: 0.0.40
codegen_flags: <defaults>
</compile_context>

<pallas_src>
import math
from functools import partial

import jax
import jax.numpy as jnp
from jax.experimental import pallas as pl
from jax.experimental.pallas import tpu as pltpu


# NOTE: the reference repo's custom LayerNorm defaults to eps=1e-12
# (torch.nn.LayerNorm would be 1e-5); keep 1e-12 to match the source module.
LN_EPS = 1e-12

_PARALLEL1 = pltpu.CompilerParams(dimension_semantics=("parallel",))


def _pick_block_rows(m, target=256):
    """Largest row-block <= target that tiles M cleanly (multiple of 8)."""
    if m <= target:
        return m
    for bm in range(min(target, m), 7, -1):
        if m % bm == 0 and bm % 8 == 0:
            return bm
    return m  # fallback: single block


def _layernorm_f32(y, gamma, beta, eps):
    """LayerNorm over the last dim; y is f32, gamma/beta broadcast as [1, D]."""
    mean = jnp.mean(y, axis=-1, keepdims=True)
    var = jnp.mean(jnp.square(y - mean), axis=-1, keepdims=True)  # biased var
    return (y - mean) * jax.lax.rsqrt(var + eps) * gamma + beta


def _attn_heads(q_all, kv_all, mask, *, n_head, d_head, scale,
                q_off, k_off, v_off):
    """Multi-head attention on fused [S, H*Dh] layouts; returns f32 [Sq, H*Dh]."""
    neg = jnp.float32(-1e9)
    outs = []
    for h in range(n_head):
        q = q_all[:, q_off + h * d_head: q_off + (h + 1) * d_head]
        k = kv_all[:, k_off + h * d_head: k_off + (h + 1) * d_head]
        v = kv_all[:, v_off + h * d_head: v_off + (h + 1) * d_head]

        s = jnp.dot(q, k.T, preferred_element_type=jnp.float32) * scale
        s = jnp.where(mask > 0, s, neg)              # masked positions -> -1e9
        s = s - jnp.max(s, axis=-1, keepdims=True)
        p = jnp.exp(s)
        p = p * pl.reciprocal(jnp.sum(p, axis=-1, keepdims=True), approx=True)
        outs.append(jnp.dot(p.astype(v.dtype), v,
                            preferred_element_type=jnp.float32))
    return jnp.concatenate(outs, axis=-1)


# --------------------------- matmul + bias kernel ---------------------------

def _matmul_bias_kernel(x_ref, w_ref, b_ref, o_ref):
    o_ref[...] = (jnp.dot(x_ref[...], w_ref[...],
                          preferred_element_type=jnp.float32)
                  + b_ref[...]).astype(o_ref.dtype)


def matmul_bias(x, w, b, *, block_rows=256):
    M, K = x.shape
    N = w.shape[1]
    bm = _pick_block_rows(M, block_rows)
    return pl.pallas_call(
        _matmul_bias_kernel,
        out_shape=jax.ShapeDtypeStruct((M, N), x.dtype),
        grid=(M // bm,),
        in_specs=[pl.BlockSpec((bm, K), lambda i: (i, 0)),
                  pl.BlockSpec((K, N), lambda i: (0, 0)),
                  pl.BlockSpec((1, N), lambda i: (0, 0))],
        out_specs=pl.BlockSpec((bm, N), lambda i: (i, 0)),
        compiler_params=_PARALLEL1,
    )(x, w, b.reshape(1, N))


# ---- self-attention + out-proj + residual + LN1 + cross-attn Q-proj --------

def _self_attn_block_kernel(qkv_ref, mask_ref, res_ref, wo_ref, bo_ref,
                            g1_ref, beta1_ref, wq_ref, bq_ref,
                            x_ref, q_ref, *, n_head, d_head, scale, eps):
    d_model = n_head * d_head
    qkv = qkv_ref[0]                      # [Sq, 3D]
    mask = mask_ref[0, 0]                 # [Sq, Sq]

    ctx = _attn_heads(qkv, qkv, mask, n_head=n_head, d_head=d_head,
                      scale=scale, q_off=0, k_off=d_model, v_off=2 * d_model)

    # output projection + residual + LayerNorm1
    y = (jnp.dot(ctx.astype(wo_ref.dtype), wo_ref[...],
                 preferred_element_type=jnp.float32)
         + bo_ref[...] + res_ref[0].astype(jnp.float32))
    x1 = _layernorm_f32(y, g1_ref[...], beta1_ref[...], eps)
    x_ref[0] = x1.astype(x_ref.dtype)

    # cross-attention Q projection fused into the epilogue (x1 stays in VMEM)
    q_ref[0] = (jnp.dot(x1.astype(wq_ref.dtype), wq_ref[...],
                        preferred_element_type=jnp.float32)
                + bq_ref[...]).astype(q_ref.dtype)


def self_attn_block(qkv, t_mask, dec, wo, bo, g1, b1, wq, bq,
                    *, n_head, d_head, eps=LN_EPS):
    B, Sq, D3 = qkv.shape
    D = n_head * d_head
    scale = 1.0 / math.sqrt(d_head)
    kern = partial(_self_attn_block_kernel, n_head=n_head, d_head=d_head,
                   scale=scale, eps=eps)
    return pl.pallas_call(
        kern,
        out_shape=(jax.ShapeDtypeStruct((B, Sq, D), qkv.dtype),
                   jax.ShapeDtypeStruct((B, Sq, D), qkv.dtype)),
        grid=(B,),
        in_specs=[pl.BlockSpec((1, Sq, D3), lambda b: (b, 0, 0)),
                  pl.BlockSpec((1, 1, Sq, Sq), lambda b: (b, 0, 0, 0)),
                  pl.BlockSpec((1, Sq, D), lambda b: (b, 0, 0)),
                  pl.BlockSpec((D, D), lambda b: (0, 0)),
                  pl.BlockSpec((1, D), lambda b: (0, 0)),
                  pl.BlockSpec((1, D), lambda b: (0, 0)),
                  pl.BlockSpec((1, D), lambda b: (0, 0)),
                  pl.BlockSpec((D, D), lambda b: (0, 0)),
                  pl.BlockSpec((1, D), lambda b: (0, 0))],
        out_specs=(pl.BlockSpec((1, Sq, D), lambda b: (b, 0, 0)),
                   pl.BlockSpec((1, Sq, D), lambda b: (b, 0, 0))),
        compiler_params=_PARALLEL1,
    )(qkv, t_mask, dec, wo, bo.reshape(1, D), g1.reshape(1, D),
      b1.reshape(1, D), wq, bq.reshape(1, D))


# ---- cross-attention + out-proj + LN2 + FFN + LN3 (fully fused per batch) ---

def _cross_attn_ffn_kernel(q_ref, kv_ref, mask_ref, res_ref, wo_ref, bo_ref,
                           g2_ref, beta2_ref, w1_ref, b1_ref, w2_ref, b2_ref,
                           g3_ref, beta3_ref, o_ref,
                           *, n_head, d_head, scale, eps):
    d_model = n_head * d_head
    q_all = q_ref[0]                      # [Sq, D]
    kv_all = kv_ref[0]                    # [Sk, 2D]
    mask = mask_ref[0, 0]                 # [Sq, Sk]

    ctx = _attn_heads(q_all, kv_all, mask, n_head=n_head, d_head=d_head,
                      scale=scale, q_off=0, k_off=0, v_off=d_model)

    # output projection + residual + LayerNorm2
    y = (jnp.dot(ctx.astype(wo_ref.dtype), wo_ref[...],
                 preferred_element_type=jnp.float32)
         + bo_ref[...] + res_ref[0].astype(jnp.float32))
    z = _layernorm_f32(y, g2_ref[...], beta2_ref[...], eps)

    # positionwise FFN + residual + LayerNorm3 (residual == FFN input z)
    h = (jnp.dot(z.astype(w1_ref.dtype), w1_ref[...],
                 preferred_element_type=jnp.float32) + b1_ref[...])
    h = jnp.maximum(h, 0.0)                                          # ReLU
    f = (jnp.dot(h.astype(w2_ref.dtype), w2_ref[...],
                 preferred_element_type=jnp.float32) + b2_ref[...] + z)
    out = _layernorm_f32(f, g3_ref[...], beta3_ref[...], eps)
    o_ref[0] = out.astype(o_ref.dtype)


def cross_attn_ffn_block(q, kv, s_mask, x1, wo, bo, g2, b2,
                         w1, b1, w2, bd, g3, b3, *, n_head, d_head, eps=LN_EPS):
    B, Sq, D = q.shape
    Sk = kv.shape[1]
    H = w1.shape[1]
    scale = 1.0 / math.sqrt(d_head)
    kern = partial(_cross_attn_ffn_kernel, n_head=n_head, d_head=d_head,
                   scale=scale, eps=eps)
    return pl.pallas_call(
        kern,
        out_shape=jax.ShapeDtypeStruct((B, Sq, D), q.dtype),
        grid=(B,),
        in_specs=[pl.BlockSpec((1, Sq, D), lambda b: (b, 0, 0)),
                  pl.BlockSpec((1, Sk, 2 * D), lambda b: (b, 0, 0)),
                  pl.BlockSpec((1, 1, Sq, Sk), lambda b: (b, 0, 0, 0)),
                  pl.BlockSpec((1, Sq, D), lambda b: (b, 0, 0)),
                  pl.BlockSpec((D, D), lambda b: (0, 0)),
                  pl.BlockSpec((1, D), lambda b: (0, 0)),
                  pl.BlockSpec((1, D), lambda b: (0, 0)),
                  pl.BlockSpec((1, D), lambda b: (0, 0)),
                  pl.BlockSpec((D, H), lambda b: (0, 0)),
                  pl.BlockSpec((1, H), lambda b: (0, 0)),
                  pl.BlockSpec((H, D), lambda b: (0, 0)),
                  pl.BlockSpec((1, D), lambda b: (0, 0)),
                  pl.BlockSpec((1, D), lambda b: (0, 0)),
                  pl.BlockSpec((1, D), lambda b: (0, 0))],
        out_specs=pl.BlockSpec((1, Sq, D), lambda b: (b, 0, 0)),
        compiler_params=_PARALLEL1,
    )(q, kv, s_mask, x1, wo, bo.reshape(1, D), g2.reshape(1, D),
      b2.reshape(1, D), w1, b1.reshape(1, H), w2, bd.reshape(1, D),
      g3.reshape(1, D), b3.reshape(1, D))


# ------------------------------ module glue --------------------------------

def decoder_layer(dec, enc, t_mask, s_mask, params, n_head, eps=LN_EPS):
    # NOTE: dropout layers are identity in eval mode (forward semantics only).
    B, Sd, D = dec.shape
    Se = enc.shape[1]
    dh = D // n_head

    dec_flat = dec.reshape(B * Sd, D)
    enc_flat = enc.reshape(B * Se, D)

    p1 = params["attn1"]
    p2 = params["attn2"]

    # --- masked self attention: fused QKV proj, then fused attn block ---
    qkv = matmul_bias(dec_flat, p1["wqkv"], p1["bqkv"]).reshape(B, Sd, 3 * D)
    x1, q2 = self_attn_block(qkv, t_mask, dec, p1["wo"], p1["bo"],
                             params["ln1_g"], params["ln1_b"],
                             p2["wq"], p2["bq"],
                             n_head=n_head, d_head=dh, eps=eps)

    # --- cross attention (fused KV on encoder) + FFN, all add&norm fused ---
    kv = matmul_bias(enc_flat, p2["wkv"], p2["bkv"]).reshape(B, Se, 2 * D)
    out = cross_attn_ffn_block(q2, kv, s_mask, x1, p2["wo"], p2["bo"],
                               params["ln2_g"], params["ln2_b"],
                               params["ffn_w1"], params["ffn_b1"],
                               params["ffn_w2"], params["ffn_b2"],
                               params["ln3_g"], params["ln3_b"],
                               n_head=n_head, d_head=dh, eps=eps)
    return out


def init_params(key, d_model, ffn_hidden):
    ks = jax.random.split(key, 10)
    s = 0.02

    def lin(k, fan_in, fan_out):
        return (s * jax.random.normal(k, (fan_in, fan_out), jnp.float32),
                jnp.zeros((fan_out,), jnp.float32))

    # self-attention: Q/K/V weights stored pre-fused as one [D, 3D] matmul
    wq1, bq1 = lin(ks[0], d_model, d_model)
    wk1, bk1 = lin(ks[1], d_model, d_model)
    wv1, bv1 = lin(ks[2], d_model, d_model)
    wo1, bo1 = lin(ks[3], d_model, d_model)
    attn1 = dict(wqkv=jnp.concatenate([wq1, wk1, wv1], axis=1),
                 bqkv=jnp.concatenate([bq1, bk1, bv1]),
                 wo=wo1, bo=bo1)

    # cross-attention: Q separate (decoder input), K/V fused (encoder input)
    wq2, bq2 = lin(ks[4], d_model, d_model)
    wk2, bk2 = lin(ks[5], d_model, d_model)
    wv2, bv2 = lin(ks[6], d_model, d_model)
    wo2, bo2 = lin(ks[7], d_model, d_model)
    attn2 = dict(wq=wq2, bq=bq2,
                 wkv=jnp.concatenate([wk2, wv2], axis=1),
                 bkv=jnp.concatenate([bk2, bv2]),
                 wo=wo2, bo=bo2)

    w1, b1 = lin(ks[8], d_model, ffn_hidden)
    w2, b2 = lin(ks[9], ffn_hidden, d_model)
    return dict(
        attn1=attn1, attn2=attn2,
        ffn_w1=w1, ffn_b1=b1, ffn_w2=w2, ffn_b2=b2,
        ln1_g=jnp.ones((d_model,), jnp.float32), ln1_b=jnp.zeros((d_model,), jnp.float32),
        ln2_g=jnp.ones((d_model,), jnp.float32), ln2_b=jnp.zeros((d_model,), jnp.float32),
        ln3_g=jnp.ones((d_model,), jnp.float32), ln3_b=jnp.zeros((d_model,), jnp.float32),
    )


if __name__ == "__main__":
    B, S_dec, S_enc = 2, 8, 8
    d_model, n_head, ffn_hidden = 32, 4, 64

    key = jax.random.PRNGKey(0)
    k_dec, k_enc, k_params = jax.random.split(key, 3)

    dec = jax.random.normal(k_dec, (B, S_dec, d_model), jnp.float32)
    enc = jax.random.normal(k_enc, (B, S_enc, d_model), jnp.float32)

    # t_mask: causal mask for self-attention, s_mask: all-visible for cross-attn.
    t_mask = jnp.tril(jnp.ones((S_dec, S_dec), jnp.float32))[None, None]
    t_mask = jnp.broadcast_to(t_mask, (B, 1, S_dec, S_dec))
    s_mask = jnp.ones((B, 1, S_dec, S_enc), jnp.float32)

    params = init_params(k_params, d_model, ffn_hidden)

    layer = jax.jit(lambda d, e, tm, sm, p: decoder_layer(d, e, tm, sm, p, n_head))
    out = layer(dec, enc, t_mask, s_mask, params)
    out = jax.block_until_ready(out)

    assert out.shape == (B, S_dec, d_model)
    assert jnp.all(jnp.isfinite(out))
    print("KERNEL_OK")
</pallas_src>

<mosaic_0001>
module attributes {stable_mosaic.version = 11 : i64} {
  func.func @_matmul_bias_kernel(%arg0: i32, %arg1: memref<16x32xf32, #tpu.memory_space<vmem>>, %arg2: memref<32x64xf32, #tpu.memory_space<vmem>>, %arg3: memref<1x64xf32, #tpu.memory_space<vmem>>, %arg4: memref<16x64xf32, #tpu.memory_space<vmem>>) attributes {dimension_semantics = [#tpu.dimension_semantics<parallel>], iteration_bounds = array<i64: 1>, scalar_prefetch = 0 : i64, scratch_operands = 0 : i64, tpu.core_type = #tpu.core_type<tc>, window_params = [{transform_indices = @transform_0, window_bounds = array<i64: 16, 32>}, {pipeline_mode = #tpu.pipeline_mode<synchronous>, transform_indices = @transform_1, window_bounds = array<i64: 32, 64>}, {pipeline_mode = #tpu.pipeline_mode<synchronous>, transform_indices = @transform_2, window_bounds = array<i64: 1, 64>}, {transform_indices = @transform_3, window_bounds = array<i64: 16, 64>}]} {
    %c0 = arith.constant 0 : index
    %c0_0 = arith.constant 0 : index
    %0 = vector.load %arg1[%c0, %c0_0] : memref<16x32xf32, #tpu.memory_space<vmem>>, vector<16x32xf32>
    %c0_1 = arith.constant 0 : index
    %c0_2 = arith.constant 0 : index
    %1 = vector.load %arg2[%c0_1, %c0_2] : memref<32x64xf32, #tpu.memory_space<vmem>>, vector<32x64xf32>
    %cst = arith.constant dense<0.000000e+00> : vector<16x64xf32>
    %2 = tpu.matmul %0, %1, %cst {dimension_numbers = #tpu.dot_dimension_numbers<[1], [0], [0], [1], [0, 0, 1, 1], [], []>} : vector<16x32xf32>, vector<32x64xf32>, vector<16x64xf32> -> vector<16x64xf32>
    %c0_3 = arith.constant 0 : index
    %c0_4 = arith.constant 0 : index
    %3 = vector.load %arg3[%c0_3, %c0_4] : memref<1x64xf32, #tpu.memory_space<vmem>>, vector<1x64xf32>
    %4 = vector.broadcast %3 : vector<1x64xf32> to vector<16x64xf32>
    %5 = arith.addf %2, %4 : vector<16x64xf32>
    %c0_5 = arith.constant 0 : index
    %c0_6 = arith.constant 0 : index
    %6 = vector.load %arg4[%c0_5, %c0_6] : memref<16x64xf32, #tpu.memory_space<vmem>>, vector<16x64xf32>
    tpu.vector_store %arg4[%c0_5, %c0_6], %5 {strides = array<i32>} : memref<16x64xf32, #tpu.memory_space<vmem>>, vector<16x64xf32>,
    return
  }
  func.func @transform_0(%arg0: i32) -> (i32, i32) {
    %c0_i32 = arith.constant 0 : i32
    %c0_i32_0 = arith.constant 0 : i32
    return %arg0, %c0_i32 : i32, i32
  }
  func.func @transform_1(%arg0: i32) -> (i32, i32) {
    %c0_i32 = arith.constant 0 : i32
    %c0_i32_0 = arith.constant 0 : i32
    %c0_i32_1 = arith.constant 0 : i32
    return %c0_i32, %c0_i32_0 : i32, i32
  }
  func.func @transform_2(%arg0: i32) -> (i32, i32) {
    %c0_i32 = arith.constant 0 : i32
    %c0_i32_0 = arith.constant 0 : i32
    %c0_i32_1 = arith.constant 0 : i32
    return %c0_i32, %c0_i32_0 : i32, i32
  }
  func.func @transform_3(%arg0: i32) -> (i32, i32) {
    %c0_i32 = arith.constant 0 : i32
    %c0_i32_0 = arith.constant 0 : i32
    return %arg0, %c0_i32 : i32, i32
  }
}

module attributes {stable_mosaic.version = 11 : i64} {
  func.func @_self_attn_block_kernel(%arg0: i32, %arg1: memref<1x8x96xf32, #tpu.memory_space<vmem>>, %arg2: memref<1x1x8x8xf32, #tpu.memory_space<vmem>>, %arg3: memref<1x8x32xf32, #tpu.memory_space<vmem>>, %arg4: memref<32x32xf32, #tpu.memory_space<vmem>>, %arg5: memref<1x32xf32, #tpu.memory_space<vmem>>, %arg6: memref<1x32xf32, #tpu.memory_space<vmem>>, %arg7: memref<1x32xf32, #tpu.memory_space<vmem>>, %arg8: memref<32x32xf32, #tpu.memory_space<vmem>>, %arg9: memref<1x32xf32, #tpu.memory_space<vmem>>, %arg10: memref<1x8x32xf32, #tpu.memory_space<vmem>>, %arg11: memref<1x8x32xf32, #tpu.memory_space<vmem>>) attributes {dimension_semantics = [#tpu.dimension_semantics<parallel>], iteration_bounds = array<i64: 2>, scalar_prefetch = 0 : i64, scratch_operands = 0 : i64, tpu.core_type = #tpu.core_type<tc>, window_params = [{transform_indices = @transform_0, window_bounds = array<i64: 1, 8, 96>}, {transform_indices = @transform_1, window_bounds = array<i64: 1, 1, 8, 8>}, {transform_indices = @transform_2, window_bounds = array<i64: 1, 8, 32>}, {pipeline_mode = #tpu.pipeline_mode<synchronous>, transform_indices = @transform_3, window_bounds = array<i64: 32, 32>}, {pipeline_mode = #tpu.pipeline_mode<synchronous>, transform_indices = @transform_4, window_bounds = array<i64: 1, 32>}, {pipeline_mode = #tpu.pipeline_mode<synchronous>, transform_indices = @transform_5, window_bounds = array<i64: 1, 32>}, {pipeline_mode = #tpu.pipeline_mode<synchronous>, transform_indices = @transform_6, window_bounds = array<i64: 1, 32>}, {pipeline_mode = #tpu.pipeline_mode<synchronous>, transform_indices = @transform_7, window_bounds = array<i64: 32, 32>}, {pipeline_mode = #tpu.pipeline_mode<synchronous>, transform_indices = @transform_8, window_bounds = array<i64: 1, 32>}, {transform_indices = @transform_9, window_bounds = array<i64: 1, 8, 32>}, {transform_indices = @transform_10, window_bounds = array<i64: 1, 8, 32>}]} {
    %c0 = arith.constant 0 : index
    %c0_0 = arith.constant 0 : index
    %c0_1 = arith.constant 0 : index
    %0 = vector.load %arg1[%c0, %c0_0, %c0_1] : memref<1x8x96xf32, #tpu.memory_space<vmem>>, vector<1x8x96xf32>
    %1 = vector.shape_cast %0 : vector<1x8x96xf32> to vector<8x96xf32>
    %c0_2 = arith.constant 0 : index
    %c0_3 = arith.constant 0 : index
    %c0_4 = arith.constant 0 : index
    %c0_5 = arith.constant 0 : index
    %2 = vector.load %arg2[%c0_2, %c0_3, %c0_4, %c0_5] : memref<1x1x8x8xf32, #tpu.memory_space<vmem>>, vector<1x1x8x8xf32>
    %3 = vector.shape_cast %2 : vector<1x1x8x8xf32> to vector<8x8xf32>
    %4 = vector.extract_strided_slice %1 {offsets = [0, 0], sizes = [8, 8], strides = [1, 1]} : vector<8x96xf32> to vector<8x8xf32>
    %5 = vector.extract_strided_slice %1 {offsets = [0, 32], sizes = [8, 8], strides = [1, 1]} : vector<8x96xf32> to vector<8x8xf32>
    %6 = vector.extract_strided_slice %1 {offsets = [0, 64], sizes = [8, 8], strides = [1, 1]} : vector<8x96xf32> to vector<8x8xf32>
    %7 = tpu.transpose %5, [1, 0] : vector<8x8xf32> -> vector<8x8xf32>
    %cst = arith.constant dense<0.000000e+00> : vector<8x8xf32>
    %8 = tpu.matmul %4, %7, %cst {dimension_numbers = #tpu.dot_dimension_numbers<[1], [0], [0], [1], [0, 0, 1, 1], [], []>} : vector<8x8xf32>, vector<8x8xf32>, vector<8x8xf32> -> vector<8x8xf32>
    %cst_6 = arith.constant 0.353553385 : f32
    %9 = vector.broadcast %cst_6 : f32 to vector<8x8xf32>
    %10 = arith.mulf %8, %9 : vector<8x8xf32>
    %cst_7 = arith.constant 0.000000e+00 : f32
    %11 = vector.broadcast %cst_7 : f32 to vector<8x8xf32>
    %12 = arith.cmpf ogt, %3, %11 : vector<8x8xf32>
    %cst_8 = arith.constant -1.000000e+09 : f32
    %13 = vector.broadcast %cst_8 : f32 to vector<8x8xf32>
    %14 = arith.select %12, %10, %13 : vector<8x8xi1>, vector<8x8xf32>
    %cst_9 = arith.constant dense<0xFF800000> : vector<8xf32>
    %15 = vector.multi_reduction <maximumf>, %14, %cst_9 [1] : vector<8x8xf32> to vector<8xf32>
    %16 = vector.shape_cast %15 : vector<8xf32> to vector<8x1xf32>
    %17 = vector.broadcast %16 : vector<8x1xf32> to vector<8x8xf32>
    %18 = arith.subf %14, %17 : vector<8x8xf32>
    %19 = math.exp %18 : vector<8x8xf32>
    %cst_10 = arith.constant dense<0.000000e+00> : vector<8xf32>
    %20 = vector.multi_reduction <add>, %19, %cst_10 [1] : vector<8x8xf32> to vector<8xf32>
    %21 = vector.shape_cast %20 : vector<8xf32> to vector<8x1xf32>
    %22 = tpu.reciprocal %21 {approx = true} : vector<8x1xf32> -> vector<8x1xf32>
    %23 = vector.broadcast %22 : vector<8x1xf32> to vector<8x8xf32>
    %24 = arith.mulf %19, %23 : vector<8x8xf32>
    %cst_11 = arith.constant dense<0.000000e+00> : vector<8x8xf32>
    %25 = tpu.matmul %24, %6, %cst_11 {dimension_numbers = #tpu.dot_dimension_numbers<[1], [0], [0], [1], [0, 0, 1, 1], [], []>} : vector<8x8xf32>, vector<8x8xf32>, vector<8x8xf32> -> vector<8x8xf32>
    %26 = vector.extract_strided_slice %1 {offsets = [0, 8], sizes = [8, 8], strides = [1, 1]} : vector<8x96xf32> to vector<8x8xf32>
    %27 = vector.extract_strided_slice %1 {offsets = [0, 40], sizes = [8, 8], strides = [1, 1]} : vector<8x96xf32> to vector<8x8xf32>
    %28 = vector.extract_strided_slice %1 {offsets = [0, 72], sizes = [8, 8], strides = [1, 1]} : vector<8x96xf32> to vector<8x8xf32>
    %29 = tpu.transpose %27, [1, 0] : vector<8x8xf32> -> vector<8x8xf32>
    %cst_12 = arith.constant dense<0.000000e+00> : vector<8x8xf32>
    %30 = tpu.matmul %26, %29, %cst_12 {dimension_numbers = #tpu.dot_dimension_numbers<[1], [0], [0], [1], [0, 0, 1, 1], [], []>} : vector<8x8xf32>, vector<8x8xf32>, vector<8x8xf32> -> vector<8x8xf32>
    %cst_13 = arith.constant 0.353553385 : f32
    %31 = vector.broadcast %cst_13 : f32 to vector<8x8xf32>
    %32 = arith.mulf %30, %31 : vector<8x8xf32>
    %cst_14 = arith.constant 0.000000e+00 : f32
    %33 = vector.broadcast %cst_14 : f32 to vector<8x8xf32>
    %34 = arith.cmpf ogt, %3, %33 : vector<8x8xf32>
    %cst_15 = arith.constant -1.000000e+09 : f32
    %35 = vector.broadcast %cst_15 : f32 to vector<8x8xf32>
    %36 = arith.select %34, %32, %35 : vector<8x8xi1>, vector<8x8xf32>
    %cst_16 = arith.constant dense<0xFF800000> : vector<8xf32>
    %37 = vector.multi_reduction <maximumf>, %36, %cst_16 [1] : vector<8x8xf32> to vector<8xf32>
    %38 = vector.shape_cast %37 : vector<8xf32> to vector<8x1xf32>
    %39 = vector.broadcast %38 : vector<8x1xf32> to vector<8x8xf32>
    %40 = arith.subf %36, %39 : vector<8x8xf32>
    %41 = math.exp %40 : vector<8x8xf32>
    %cst_17 = arith.constant dense<0.000000e+00> : vector<8xf32>
    %42 = vector.multi_reduction <add>, %41, %cst_17 [1] : vector<8x8xf32> to vector<8xf32>
    %43 = vector.shape_cast %42 : vector<8xf32> to vector<8x1xf32>
    %44 = tpu.reciprocal %43 {approx = true} : vector<8x1xf32> -> vector<8x1xf32>
    %45 = vector.broadcast %44 : vector<8x1xf32> to vector<8x8xf32>
    %46 = arith.mulf %41, %45 : vector<8x8xf32>
    %cst_18 = arith.constant dense<0.000000e+00> : vector<8x8xf32>
    %47 = tpu.matmul %46, %28, %cst_18 {dimension_numbers = #tpu.dot_dimension_numbers<[1], [0], [0], [1], [0, 0, 1, 1], [], []>} : vector<8x8xf32>, vector<8x8xf32>, vector<8x8xf32> -> vector<8x8xf32>
    %48 = vector.extract_strided_slice %1 {offsets = [0, 16], sizes = [8, 8], strides = [1, 1]} : vector<8x96xf32> to vector<8x8xf32>
    %49 = vector.extract_strided_slice %1 {offsets = [0, 48], sizes = [8, 8], strides = [1, 1]} : vector<8x96xf32> to vector<8x8xf32>
    %50 = vector.extract_strided_slice %1 {offsets = [0, 80], sizes = [8, 8], strides = [1, 1]} : vector<8x96xf32> to vector<8x8xf32>
    %51 = tpu.transpose %49, [1, 0] : vector<8x8xf32> -> vector<8x8xf32>
    %cst_19 = arith.constant dense<0.000000e+00> : vector<8x8xf32>
    %52 = tpu.matmul %48, %51, %cst_19 {dimension_numbers = #tpu.dot_dimension_numbers<[1], [0], [0], [1], [0, 0, 1, 1], [], []>} : vector<8x8xf32>, vector<8x8xf32>, vector<8x8xf32> -> vector<8x8xf32>
    %cst_20 = arith.constant 0.353553385 : f32
    %53 = vector.broadcast %cst_20 : f32 to vector<8x8xf32>
    %54 = arith.mulf %52, %53 : vector<8x8xf32>
    %cst_21 = arith.constant 0.000000e+00 : f32
    %55 = vector.broadcast %cst_21 : f32 to vector<8x8xf32>
    %56 = arith.cmpf ogt, %3, %55 : vector<8x8xf32>
    %cst_22 = arith.constant -1.000000e+09 : f32
    %57 = vector.broadcast %cst_22 : f32 to vector<8x8xf32>
    %58 = arith.select %56, %54, %57 : vector<8x8xi1>, vector<8x8xf32>
    %cst_23 = arith.constant dense<0xFF800000> : vector<8xf32>
    %59 = vector.multi_reduction <maximumf>, %58, %cst_23 [1] : vector<8x8xf32> to vector<8xf32>
    %60 = vector.shape_cast %59 : vector<8xf32> to vector<8x1xf32>
    %61 = vector.broadcast %60 : vector<8x1xf32> to vector<8x8xf32>
    %62 = arith.subf %58, %61 : vector<8x8xf32>
    %63 = math.exp %62 : vector<8x8xf32>
    %cst_24 = arith.constant dense<0.000000e+00> : vector<8xf32>
    %64 = vector.multi_reduction <add>, %63, %cst_24 [1] : vector<8x8xf32> to vector<8xf32>
    %65 = vector.shape_cast %64 : vector<8xf32> to vector<8x1xf32>
    %66 = tpu.reciprocal %65 {approx = true} : vector<8x1xf32> -> vector<8x1xf32>
    %67 = vector.broadcast %66 : vector<8x1xf32> to vector<8x8xf32>
    %68 = arith.mulf %63, %67 : vector<8x8xf32>
    %cst_25 = arith.constant dense<0.000000e+00> : vector<8x8xf32>
    %69 = tpu.matmul %68, %50, %cst_25 {dimension_numbers = #tpu.dot_dimension_numbers<[1], [0], [0], [1], [0, 0, 1, 1], [], []>} : vector<8x8xf32>, vector<8x8xf32>, vector<8x8xf32> -> vector<8x8xf32>
    %70 = vector.extract_strided_slice %1 {offsets = [0, 24], sizes = [8, 8], strides = [1, 1]} : vector<8x96xf32> to vector<8x8xf32>
    %71 = vector.extract_strided_slice %1 {offsets = [0, 56], sizes = [8, 8], strides = [1, 1]} : vector<8x96xf32> to vector<8x8xf32>
    %72 = vector.extract_strided_slice %1 {offsets = [0, 88], sizes = [8, 8], strides = [1, 1]} : vector<8x96xf32> to vector<8x8xf32>
    %73 = tpu.transpose %71, [1, 0] : vector<8x8xf32> -> vector<8x8xf32>
    %cst_26 = arith.constant dense<0.000000e+00> : vector<8x8xf32>
    %74 = tpu.matmul %70, %73, %cst_26 {dimension_numbers = #tpu.dot_dimension_numbers<[1], [0], [0], [1], [0, 0, 1, 1], [], []>} : vector<8x8xf32>, vector<8x8xf32>, vector<8x8xf32> -> vector<8x8xf32>
    %cst_27 = arith.constant 0.353553385 : f32
    %75 = vector.broadcast %cst_27 : f32 to vector<8x8xf32>
    %76 = arith.mulf %74, %75 : vector<8x8xf32>
    %cst_28 = arith.constant 0.000000e+00 : f32
    %77 = vector.broadcast %cst_28 : f32 to vector<8x8xf32>
    %78 = arith.cmpf ogt, %3, %77 : vector<8x8xf32>
    %cst_29 = arith.constant -1.000000e+09 : f32
    %79 = vector.broadcast %cst_29 : f32 to vector<8x8xf32>
    %80 = arith.select %78, %76, %79 : vector<8x8xi1>, vector<8x8xf32>
    %cst_30 = arith.constant dense<0xFF800000> : vector<8xf32>
    %81 = vector.multi_reduction <maximumf>, %80, %cst_30 [1] : vector<8x8xf32> to vector<8xf32>
    %82 = vector.shape_cast %81 : vector<8xf32> to vector<8x1xf32>
    %83 = vector.broadcast %82 : vector<8x1xf32> to vector<8x8xf32>
    %84 = arith.subf %80, %83 : vector<8x8xf32>
    %85 = math.exp %84 : vector<8x8xf32>
    %cst_31 = arith.constant dense<0.000000e+00> : vector<8xf32>
    %86 = vector.multi_reduction <add>, %85, %cst_31 [1] : vector<8x8xf32> to vector<8xf32>
    %87 = vector.shape_cast %86 : vector<8xf32> to vector<8x1xf32>
    %88 = tpu.reciprocal %87 {approx = true} : vector<8x1xf32> -> vector<8x1xf32>
    %89 = vector.broadcast %88 : vector<8x1xf32> to vector<8x8xf32>
    %90 = arith.mulf %85, %89 : vector<8x8xf32>
    %cst_32 = arith.constant dense<0.000000e+00> : vector<8x8xf32>
    %91 = tpu.matmul %90, %72, %cst_32 {dimension_numbers = #tpu.dot_dimension_numbers<[1], [0], [0], [1], [0, 0, 1, 1], [], []>} : vector<8x8xf32>, vector<8x8xf32>, vector<8x8xf32> -> vector<8x8xf32>
    %92 = tpu.concatenate %25, %47, %69, %91 in 1 : vector<8x8xf32>, vector<8x8xf32>, vector<8x8xf32>, vector<8x8xf32> -> vector<8x32xf32>
    %c0_33 = arith.constant 0 : index
    %c0_34 = arith.constant 0 : index
    %93 = vector.load %arg4[%c0_33, %c0_34] : memref<32x32xf32, #tpu.memory_space<vmem>>, vector<32x32xf32>
    %cst_35 = arith.constant dense<0.000000e+00> : vector<8x32xf32>
    %94 = tpu.matmul %92, %93, %cst_35 {dimension_numbers = #tpu.dot_dimension_numbers<[1], [0], [0], [1], [0, 0, 1, 1], [], []>} : vector<8x32xf32>, vector<32x32xf32>, vector<8x32xf32> -> vector<8x32xf32>
    %c0_36 = arith.constant 0 : index
    %c0_37 = arith.constant 0 : index
    %95 = vector.load %arg5[%c0_36, %c0_37] : memref<1x32xf32, #tpu.memory_space<vmem>>, vector<1x32xf32>
    %96 = vector.broadcast %95 : vector<1x32xf32> to vector<8x32xf32>
    %97 = arith.addf %94, %96 : vector<8x32xf32>
    %c0_38 = arith.constant 0 : index
    %c0_39 = arith.constant 0 : index
    %c0_40 = arith.constant 0 : index
    %98 = vector.load %arg3[%c0_38, %c0_39, %c0_40] : memref<1x8x32xf32, #tpu.memory_space<vmem>>, vector<1x8x32xf32>
    %99 = vector.shape_cast %98 : vector<1x8x32xf32> to vector<8x32xf32>
    %100 = arith.addf %97, %99 : vector<8x32xf32>
    %c0_41 = arith.constant 0 : index
    %c0_42 = arith.constant 0 : index
    %101 = vector.load %arg6[%c0_41, %c0_42] : memref<1x32xf32, #tpu.memory_space<vmem>>, vector<1x32xf32>
    %c0_43 = arith.constant 0 : index
    %c0_44 = arith.constant 0 : index
    %102 = vector.load %arg7[%c0_43, %c0_44] : memref<1x32xf32, #tpu.memory_space<vmem>>, vector<1x32xf32>
    %cst_45 = arith.constant dense<0.000000e+00> : vector<8xf32>
    %103 = vector.multi_reduction <add>, %100, %cst_45 [1] : vector<8x32xf32> to vector<8xf32>
    %104 = vector.shape_cast %103 : vector<8xf32> to vector<8x1xf32>
    %cst_46 = arith.constant 3.200000e+01 : f32
    %105 = vector.broadcast %cst_46 : f32 to vector<8x1xf32>
    %106 = arith.divf %104, %105 : vector<8x1xf32>
    %107 = vector.broadcast %106 : vector<8x1xf32> to vector<8x32xf32>
    %108 = arith.subf %100, %107 : vector<8x32xf32>
    %109 = arith.mulf %108, %108 : vector<8x32xf32>
    %cst_47 = arith.constant dense<0.000000e+00> : vector<8xf32>
    %110 = vector.multi_reduction <add>, %109, %cst_47 [1] : vector<8x32xf32> to vector<8xf32>
    %111 = vector.shape_cast %110 : vector<8xf32> to vector<8x1xf32>
    %cst_48 = arith.constant 3.200000e+01 : f32
    %112 = vector.broadcast %cst_48 : f32 to vector<8x1xf32>
    %113 = arith.divf %111, %112 : vector<8x1xf32>
    %114 = vector.broadcast %106 : vector<8x1xf32> to vector<8x32xf32>
    %115 = arith.subf %100, %114 : vector<8x32xf32>
    %cst_49 = arith.constant 9.99999996E-13 : f32
    %116 = vector.broadcast %cst_49 : f32 to vector<8x1xf32>
    %117 = arith.addf %113, %116 : vector<8x1xf32>
    %118 = math.rsqrt %117 : vector<8x1xf32>
    %119 = vector.broadcast %118 : vector<8x1xf32> to vector<8x32xf32>
    %120 = arith.mulf %115, %119 : vector<8x32xf32>
    %121 = vector.broadcast %101 : vector<1x32xf32> to vector<8x32xf32>
    %122 = arith.mulf %120, %121 : vector<8x32xf32>
    %123 = vector.broadcast %102 : vector<1x32xf32> to vector<8x32xf32>
    %124 = arith.addf %122, %123 : vector<8x32xf32>
    %c0_50 = arith.constant 0 : index
    %c0_51 = arith.constant 0 : index
    %c0_52 = arith.constant 0 : index
    %125 = vector.load %arg10[%c0_50, %c0_51, %c0_52] : memref<1x8x32xf32, #tpu.memory_space<vmem>>, vector<1x8x32xf32>
    %126 = vector.shape_cast %125 : vector<1x8x32xf32> to vector<8x32xf32>
    %127 = vector.shape_cast %124 : vector<8x32xf32> to vector<1x8x32xf32>
    tpu.vector_store %arg10[%c0_50, %c0_51, %c0_52], %127 {strides = array<i32>} : memref<1x8x32xf32, #tpu.memory_space<vmem>>, vector<1x8x32xf32>,
    %c0_53 = arith.constant 0 : index
    %c0_54 = arith.constant 0 : index
    %128 = vector.load %arg8[%c0_53, %c0_54] : memref<32x32xf32, #tpu.memory_space<vmem>>, vector<32x32xf32>
    %cst_55 = arith.constant dense<0.000000e+00> : vector<8x32xf32>
    %129 = tpu.matmul %124, %128, %cst_55 {dimension_numbers = #tpu.dot_dimension_numbers<[1], [0], [0], [1], [0, 0, 1, 1], [], []>} : vector<8x32xf32>, vector<32x32xf32>, vector<8x32xf32> -> vector<8x32xf32>
    %c0_56 = arith.constant 0 : index
    %c0_57 = arith.constant 0 : index
    %130 = vector.load %arg9[%c0_56, %c0_57] : memref<1x32xf32, #tpu.memory_space<vmem>>, vector<1x32xf32>
    %131 = vector.broadcast %130 : vector<1x32xf32> to vector<8x32xf32>
    %132 = arith.addf %129, %131 : vector<8x32xf32>
    %c0_58 = arith.constant 0 : index
    %c0_59 = arith.constant 0 : index
    %c0_60 = arith.constant 0 : index
    %133 = vector.load %arg11[%c0_58, %c0_59, %c0_60] : memref<1x8x32xf32, #tpu.memory_space<vmem>>, vector<1x8x32xf32>
    %134 = vector.shape_cast %133 : vector<1x8x32xf32> to vector<8x32xf32>
    %135 = vector.shape_cast %132 : vector<8x32xf32> to vector<1x8x32xf32>
    tpu.vector_store %arg11[%c0_58, %c0_59, %c0_60], %135 {strides = array<i32>} : memref<1x8x32xf32, #tpu.memory_space<vmem>>, vector<1x8x32xf32>,
    return
  }
  func.func @transform_0(%arg0: i32) -> (i32, i32, i32) {
    %c0_i32 = arith.constant 0 : i32
    %c0_i32_0 = arith.constant 0 : i32
    %c0_i32_1 = arith.constant 0 : i32
    return %arg0, %c0_i32, %c0_i32_0 : i32, i32, i32
  }
  func.func @transform_1(%arg0: i32) -> (i32, i32, i32, i32) {
    %c0_i32 = arith.constant 0 : i32
    %c0_i32_0 = arith.constant 0 : i32
    %c0_i32_1 = arith.constant 0 : i32
    %c0_i32_2 = arith.constant 0 : i32
    return %arg0, %c0_i32, %c0_i32_0, %c0_i32_1 : i32, i32, i32, i32
  }
  func.func @transform_2(%arg0: i32) -> (i32, i32, i32) {
    %c0_i32 = arith.constant 0 : i32
    %c0_i32_0 = arith.constant 0 : i32
    %c0_i32_1 = arith.constant 0 : i32
    return %arg0, %c0_i32, %c0_i32_0 : i32, i32, i32
  }
  func.func @transform_3(%arg0: i32) -> (i32, i32) {
    %c0_i32 = arith.constant 0 : i32
    %c0_i32_0 = arith.constant 0 : i32
    %c0_i32_1 = arith.constant 0 : i32
    return %c0_i32, %c0_i32_0 : i32, i32
  }
  func.func @transform_4(%arg0: i32) -> (i32, i32) {
    %c0_i32 = arith.constant 0 : i32
    %c0_i32_0 = arith.constant 0 : i32
    %c0_i32_1 = arith.constant 0 : i32
    return %c0_i32, %c0_i32_0 : i32, i32
  }
  func.func @transform_5(%arg0: i32) -> (i32, i32) {
    %c0_i32 = arith.constant 0 : i32
    %c0_i32_0 = arith.constant 0 : i32
    %c0_i32_1 = arith.constant 0 : i32
    return %c0_i32, %c0_i32_0 : i32, i32
  }
  func.func @transform_6(%arg0: i32) -> (i32, i32) {
    %c0_i32 = arith.constant 0 : i32
    %c0_i32_0 = arith.constant 0 : i32
    %c0_i32_1 = arith.constant 0 : i32
    return %c0_i32, %c0_i32_0 : i32, i32
  }
  func.func @transform_7(%arg0: i32) -> (i32, i32) {
    %c0_i32 = arith.constant 0 : i32
    %c0_i32_0 = arith.constant 0 : i32
    %c0_i32_1 = arith.constant 0 : i32
    return %c0_i32, %c0_i32_0 : i32, i32
  }
  func.func @transform_8(%arg0: i32) -> (i32, i32) {
    %c0_i32 = arith.constant 0 : i32
    %c0_i32_0 = arith.constant 0 : i32
    %c0_i32_1 = arith.constant 0 : i32
    return %c0_i32, %c0_i32_0 : i32, i32
  }
  func.func @transform_9(%arg0: i32) -> (i32, i32, i32) {
    %c0_i32 = arith.constant 0 : i32
    %c0_i32_0 = arith.constant 0 : i32
    %c0_i32_1 = arith.constant 0 : i32
    return %arg0, %c0_i32, %c0_i32_0 : i32, i32, i32
  }
  func.func @transform_10(%arg0: i32) -> (i32, i32, i32) {
    %c0_i32 = arith.constant 0 : i32
    %c0_i32_0 = arith.constant 0 : i32
    %c0_i32_1 = arith.constant 0 : i32
    return %arg0, %c0_i32, %c0_i32_0 : i32, i32, i32
  }
}

module attributes {stable_mosaic.version = 11 : i64} {
  func.func @_matmul_bias_kernel(%arg0: i32, %arg1: memref<16x32xf32, #tpu.memory_space<vmem>>, %arg2: memref<32x96xf32, #tpu.memory_space<vmem>>, %arg3: memref<1x96xf32, #tpu.memory_space<vmem>>, %arg4: memref<16x96xf32, #tpu.memory_space<vmem>>) attributes {dimension_semantics = [#tpu.dimension_semantics<parallel>], iteration_bounds = array<i64: 1>, scalar_prefetch = 0 : i64, scratch_operands = 0 : i64, tpu.core_type = #tpu.core_type<tc>, window_params = [{transform_indices = @transform_0, window_bounds = array<i64: 16, 32>}, {pipeline_mode = #tpu.pipeline_mode<synchronous>, transform_indices = @transform_1, window_bounds = array<i64: 32, 96>}, {pipeline_mode = #tpu.pipeline_mode<synchronous>, transform_indices = @transform_2, window_bounds = array<i64: 1, 96>}, {transform_indices = @transform_3, window_bounds = array<i64: 16, 96>}]} {
    %c0 = arith.constant 0 : index
    %c0_0 = arith.constant 0 : index
    %0 = vector.load %arg1[%c0, %c0_0] : memref<16x32xf32, #tpu.memory_space<vmem>>, vector<16x32xf32>
    %c0_1 = arith.constant 0 : index
    %c0_2 = arith.constant 0 : index
    %1 = vector.load %arg2[%c0_1, %c0_2] : memref<32x96xf32, #tpu.memory_space<vmem>>, vector<32x96xf32>
    %cst = arith.constant dense<0.000000e+00> : vector<16x96xf32>
    %2 = tpu.matmul %0, %1, %cst {dimension_numbers = #tpu.dot_dimension_numbers<[1], [0], [0], [1], [0, 0, 1, 1], [], []>} : vector<16x32xf32>, vector<32x96xf32>, vector<16x96xf32> -> vector<16x96xf32>
    %c0_3 = arith.constant 0 : index
    %c0_4 = arith.constant 0 : index
    %3 = vector.load %arg3[%c0_3, %c0_4] : memref<1x96xf32, #tpu.memory_space<vmem>>, vector<1x96xf32>
    %4 = vector.broadcast %3 : vector<1x96xf32> to vector<16x96xf32>
    %5 = arith.addf %2, %4 : vector<16x96xf32>
    %c0_5 = arith.constant 0 : index
    %c0_6 = arith.constant 0 : index
    %6 = vector.load %arg4[%c0_5, %c0_6] : memref<16x96xf32, #tpu.memory_space<vmem>>, vector<16x96xf32>
    tpu.vector_store %arg4[%c0_5, %c0_6], %5 {strides = array<i32>} : memref<16x96xf32, #tpu.memory_space<vmem>>, vector<16x96xf32>,
    return
  }
  func.func @transform_0(%arg0: i32) -> (i32, i32) {
    %c0_i32 = arith.constant 0 : i32
    %c0_i32_0 = arith.constant 0 : i32
    return %arg0, %c0_i32 : i32, i32
  }
  func.func @transform_1(%arg0: i32) -> (i32, i32) {
    %c0_i32 = arith.constant 0 : i32
    %c0_i32_0 = arith.constant 0 : i32
    %c0_i32_1 = arith.constant 0 : i32
    return %c0_i32, %c0_i32_0 : i32, i32
  }
  func.func @transform_2(%arg0: i32) -> (i32, i32) {
    %c0_i32 = arith.constant 0 : i32
    %c0_i32_0 = arith.constant 0 : i32
    %c0_i32_1 = arith.constant 0 : i32
    return %c0_i32, %c0_i32_0 : i32, i32
  }
  func.func @transform_3(%arg0: i32) -> (i32, i32) {
    %c0_i32 = arith.constant 0 : i32
    %c0_i32_0 = arith.constant 0 : i32
    return %arg0, %c0_i32 : i32, i32
  }
}

module attributes {stable_mosaic.version = 11 : i64} {
  func.func @_cross_attn_ffn_kernel(%arg0: i32, %arg1: memref<1x8x32xf32, #tpu.memory_space<vmem>>, %arg2: memref<1x8x64xf32, #tpu.memory_space<vmem>>, %arg3: memref<1x1x8x8xf32, #tpu.memory_space<vmem>>, %arg4: memref<1x8x32xf32, #tpu.memory_space<vmem>>, %arg5: memref<32x32xf32, #tpu.memory_space<vmem>>, %arg6: memref<1x32xf32, #tpu.memory_space<vmem>>, %arg7: memref<1x32xf32, #tpu.memory_space<vmem>>, %arg8: memref<1x32xf32, #tpu.memory_space<vmem>>, %arg9: memref<32x64xf32, #tpu.memory_space<vmem>>, %arg10: memref<1x64xf32, #tpu.memory_space<vmem>>, %arg11: memref<64x32xf32, #tpu.memory_space<vmem>>, %arg12: memref<1x32xf32, #tpu.memory_space<vmem>>, %arg13: memref<1x32xf32, #tpu.memory_space<vmem>>, %arg14: memref<1x32xf32, #tpu.memory_space<vmem>>, %arg15: memref<1x8x32xf32, #tpu.memory_space<vmem>>) attributes {dimension_semantics = [#tpu.dimension_semantics<parallel>], iteration_bounds = array<i64: 2>, scalar_prefetch = 0 : i64, scratch_operands = 0 : i64, tpu.core_type = #tpu.core_type<tc>, window_params = [{transform_indices = @transform_0, window_bounds = array<i64: 1, 8, 32>}, {transform_indices = @transform_1, window_bounds = array<i64: 1, 8, 64>}, {transform_indices = @transform_2, window_bounds = array<i64: 1, 1, 8, 8>}, {transform_indices = @transform_3, window_bounds = array<i64: 1, 8, 32>}, {pipeline_mode = #tpu.pipeline_mode<synchronous>, transform_indices = @transform_4, window_bounds = array<i64: 32, 32>}, {pipeline_mode = #tpu.pipeline_mode<synchronous>, transform_indices = @transform_5, window_bounds = array<i64: 1, 32>}, {pipeline_mode = #tpu.pipeline_mode<synchronous>, transform_indices = @transform_6, window_bounds = array<i64: 1, 32>}, {pipeline_mode = #tpu.pipeline_mode<synchronous>, transform_indices = @transform_7, window_bounds = array<i64: 1, 32>}, {pipeline_mode = #tpu.pipeline_mode<synchronous>, transform_indices = @transform_8, window_bounds = array<i64: 32, 64>}, {pipeline_mode = #tpu.pipeline_mode<synchronous>, transform_indices = @transform_9, window_bounds = array<i64: 1, 64>}, {pipeline_mode = #tpu.pipeline_mode<synchronous>, transform_indices = @transform_10, window_bounds = array<i64: 64, 32>}, {pipeline_mode = #tpu.pipeline_mode<synchronous>, transform_indices = @transform_11, window_bounds = array<i64: 1, 32>}, {pipeline_mode = #tpu.pipeline_mode<synchronous>, transform_indices = @transform_12, window_bounds = array<i64: 1, 32>}, {pipeline_mode = #tpu.pipeline_mode<synchronous>, transform_indices = @transform_13, window_bounds = array<i64: 1, 32>}, {transform_indices = @transform_14, window_bounds = array<i64: 1, 8, 32>}]} {
    %c0 = arith.constant 0 : index
    %c0_0 = arith.constant 0 : index
    %c0_1 = arith.constant 0 : index
    %0 = vector.load %arg1[%c0, %c0_0, %c0_1] : memref<1x8x32xf32, #tpu.memory_space<vmem>>, vector<1x8x32xf32>
    %1 = vector.shape_cast %0 : vector<1x8x32xf32> to vector<8x32xf32>
    %c0_2 = arith.constant 0 : index
    %c0_3 = arith.constant 0 : index
    %c0_4 = arith.constant 0 : index
    %2 = vector.load %arg2[%c0_2, %c0_3, %c0_4] : memref<1x8x64xf32, #tpu.memory_space<vmem>>, vector<1x8x64xf32>
    %3 = vector.shape_cast %2 : vector<1x8x64xf32> to vector<8x64xf32>
    %c0_5 = arith.constant 0 : index
    %c0_6 = arith.constant 0 : index
    %c0_7 = arith.constant 0 : index
    %c0_8 = arith.constant 0 : index
    %4 = vector.load %arg3[%c0_5, %c0_6, %c0_7, %c0_8] : memref<1x1x8x8xf32, #tpu.memory_space<vmem>>, vector<1x1x8x8xf32>
    %5 = vector.shape_cast %4 : vector<1x1x8x8xf32> to vector<8x8xf32>
    %6 = vector.extract_strided_slice %1 {offsets = [0, 0], sizes = [8, 8], strides = [1, 1]} : vector<8x32xf32> to vector<8x8xf32>
    %7 = vector.extract_strided_slice %3 {offsets = [0, 0], sizes = [8, 8], strides = [1, 1]} : vector<8x64xf32> to vector<8x8xf32>
    %8 = vector.extract_strided_slice %3 {offsets = [0, 32], sizes = [8, 8], strides = [1, 1]} : vector<8x64xf32> to vector<8x8xf32>
    %9 = tpu.transpose %7, [1, 0] : vector<8x8xf32> -> vector<8x8xf32>
    %cst = arith.constant dense<0.000000e+00> : vector<8x8xf32>
    %10 = tpu.matmul %6, %9, %cst {dimension_numbers = #tpu.dot_dimension_numbers<[1], [0], [0], [1], [0, 0, 1, 1], [], []>} : vector<8x8xf32>, vector<8x8xf32>, vector<8x8xf32> -> vector<8x8xf32>
    %cst_9 = arith.constant 0.353553385 : f32
    %11 = vector.broadcast %cst_9 : f32 to vector<8x8xf32>
    %12 = arith.mulf %10, %11 : vector<8x8xf32>
    %cst_10 = arith.constant 0.000000e+00 : f32
    %13 = vector.broadcast %cst_10 : f32 to vector<8x8xf32>
    %14 = arith.cmpf ogt, %5, %13 : vector<8x8xf32>
    %cst_11 = arith.constant -1.000000e+09 : f32
    %15 = vector.broadcast %cst_11 : f32 to vector<8x8xf32>
    %16 = arith.select %14, %12, %15 : vector<8x8xi1>, vector<8x8xf32>
    %cst_12 = arith.constant dense<0xFF800000> : vector<8xf32>
    %17 = vector.multi_reduction <maximumf>, %16, %cst_12 [1] : vector<8x8xf32> to vector<8xf32>
    %18 = vector.shape_cast %17 : vector<8xf32> to vector<8x1xf32>
    %19 = vector.broadcast %18 : vector<8x1xf32> to vector<8x8xf32>
    %20 = arith.subf %16, %19 : vector<8x8xf32>
    %21 = math.exp %20 : vector<8x8xf32>
    %cst_13 = arith.constant dense<0.000000e+00> : vector<8xf32>
    %22 = vector.multi_reduction <add>, %21, %cst_13 [1] : vector<8x8xf32> to vector<8xf32>
    %23 = vector.shape_cast %22 : vector<8xf32> to vector<8x1xf32>
    %24 = tpu.reciprocal %23 {approx = true} : vector<8x1xf32> -> vector<8x1xf32>
    %25 = vector.broadcast %24 : vector<8x1xf32> to vector<8x8xf32>
    %26 = arith.mulf %21, %25 : vector<8x8xf32>
    %cst_14 = arith.constant dense<0.000000e+00> : vector<8x8xf32>
    %27 = tpu.matmul %26, %8, %cst_14 {dimension_numbers = #tpu.dot_dimension_numbers<[1], [0], [0], [1], [0, 0, 1, 1], [], []>} : vector<8x8xf32>, vector<8x8xf32>, vector<8x8xf32> -> vector<8x8xf32>
    %28 = vector.extract_strided_slice %1 {offsets = [0, 8], sizes = [8, 8], strides = [1, 1]} : vector<8x32xf32> to vector<8x8xf32>
    %29 = vector.extract_strided_slice %3 {offsets = [0, 8], sizes = [8, 8], strides = [1, 1]} : vector<8x64xf32> to vector<8x8xf32>
    %30 = vector.extract_strided_slice %3 {offsets = [0, 40], sizes = [8, 8], strides = [1, 1]} : vector<8x64xf32> to vector<8x8xf32>
    %31 = tpu.transpose %29, [1, 0] : vector<8x8xf32> -> vector<8x8xf32>
    %cst_15 = arith.constant dense<0.000000e+00> : vector<8x8xf32>
    %32 = tpu.matmul %28, %31, %cst_15 {dimension_numbers = #tpu.dot_dimension_numbers<[1], [0], [0], [1], [0, 0, 1, 1], [], []>} : vector<8x8xf32>, vector<8x8xf32>, vector<8x8xf32> -> vector<8x8xf32>
    %cst_16 = arith.constant 0.353553385 : f32
    %33 = vector.broadcast %cst_16 : f32 to vector<8x8xf32>
    %34 = arith.mulf %32, %33 : vector<8x8xf32>
    %cst_17 = arith.constant 0.000000e+00 : f32
    %35 = vector.broadcast %cst_17 : f32 to vector<8x8xf32>
    %36 = arith.cmpf ogt, %5, %35 : vector<8x8xf32>
    %cst_18 = arith.constant -1.000000e+09 : f32
    %37 = vector.broadcast %cst_18 : f32 to vector<8x8xf32>
    %38 = arith.select %36, %34, %37 : vector<8x8xi1>, vector<8x8xf32>
    %cst_19 = arith.constant dense<0xFF800000> : vector<8xf32>
    %39 = vector.multi_reduction <maximumf>, %38, %cst_19 [1] : vector<8x8xf32> to vector<8xf32>
    %40 = vector.shape_cast %39 : vector<8xf32> to vector<8x1xf32>
    %41 = vector.broadcast %40 : vector<8x1xf32> to vector<8x8xf32>
    %42 = arith.subf %38, %41 : vector<8x8xf32>
    %43 = math.exp %42 : vector<8x8xf32>
    %cst_20 = arith.constant dense<0.000000e+00> : vector<8xf32>
    %44 = vector.multi_reduction <add>, %43, %cst_20 [1] : vector<8x8xf32> to vector<8xf32>
    %45 = vector.shape_cast %44 : vector<8xf32> to vector<8x1xf32>
    %46 = tpu.reciprocal %45 {approx = true} : vector<8x1xf32> -> vector<8x1xf32>
    %47 = vector.broadcast %46 : vector<8x1xf32> to vector<8x8xf32>
    %48 = arith.mulf %43, %47 : vector<8x8xf32>
    %cst_21 = arith.constant dense<0.000000e+00> : vector<8x8xf32>
    %49 = tpu.matmul %48, %30, %cst_21 {dimension_numbers = #tpu.dot_dimension_numbers<[1], [0], [0], [1], [0, 0, 1, 1], [], []>} : vector<8x8xf32>, vector<8x8xf32>, vector<8x8xf32> -> vector<8x8xf32>
    %50 = vector.extract_strided_slice %1 {offsets = [0, 16], sizes = [8, 8], strides = [1, 1]} : vector<8x32xf32> to vector<8x8xf32>
    %51 = vector.extract_strided_slice %3 {offsets = [0, 16], sizes = [8, 8], strides = [1, 1]} : vector<8x64xf32> to vector<8x8xf32>
    %52 = vector.extract_strided_slice %3 {offsets = [0, 48], sizes = [8, 8], strides = [1, 1]} : vector<8x64xf32> to vector<8x8xf32>
    %53 = tpu.transpose %51, [1, 0] : vector<8x8xf32> -> vector<8x8xf32>
    %cst_22 = arith.constant dense<0.000000e+00> : vector<8x8xf32>
    %54 = tpu.matmul %50, %53, %cst_22 {dimension_numbers = #tpu.dot_dimension_numbers<[1], [0], [0], [1], [0, 0, 1, 1], [], []>} : vector<8x8xf32>, vector<8x8xf32>, vector<8x8xf32> -> vector<8x8xf32>
    %cst_23 = arith.constant 0.353553385 : f32
    %55 = vector.broadcast %cst_23 : f32 to vector<8x8xf32>
    %56 = arith.mulf %54, %55 : vector<8x8xf32>
    %cst_24 = arith.constant 0.000000e+00 : f32
    %57 = vector.broadcast %cst_24 : f32 to vector<8x8xf32>
    %58 = arith.cmpf ogt, %5, %57 : vector<8x8xf32>
    %cst_25 = arith.constant -1.000000e+09 : f32
    %59 = vector.broadcast %cst_25 : f32 to vector<8x8xf32>
    %60 = arith.select %58, %56, %59 : vector<8x8xi1>, vector<8x8xf32>
    %cst_26 = arith.constant dense<0xFF800000> : vector<8xf32>
    %61 = vector.multi_reduction <maximumf>, %60, %cst_26 [1] : vector<8x8xf32> to vector<8xf32>
    %62 = vector.shape_cast %61 : vector<8xf32> to vector<8x1xf32>
    %63 = vector.broadcast %62 : vector<8x1xf32> to vector<8x8xf32>
    %64 = arith.subf %60, %63 : vector<8x8xf32>
    %65 = math.exp %64 : vector<8x8xf32>
    %cst_27 = arith.constant dense<0.000000e+00> : vector<8xf32>
    %66 = vector.multi_reduction <add>, %65, %cst_27 [1] : vector<8x8xf32> to vector<8xf32>
    %67 = vector.shape_cast %66 : vector<8xf32> to vector<8x1xf32>
    %68 = tpu.reciprocal %67 {approx = true} : vector<8x1xf32> -> vector<8x1xf32>
    %69 = vector.broadcast %68 : vector<8x1xf32> to vector<8x8xf32>
    %70 = arith.mulf %65, %69 : vector<8x8xf32>
    %cst_28 = arith.constant dense<0.000000e+00> : vector<8x8xf32>
    %71 = tpu.matmul %70, %52, %cst_28 {dimension_numbers = #tpu.dot_dimension_numbers<[1], [0], [0], [1], [0, 0, 1, 1], [], []>} : vector<8x8xf32>, vector<8x8xf32>, vector<8x8xf32> -> vector<8x8xf32>
    %72 = vector.extract_strided_slice %1 {offsets = [0, 24], sizes = [8, 8], strides = [1, 1]} : vector<8x32xf32> to vector<8x8xf32>
    %73 = vector.extract_strided_slice %3 {offsets = [0, 24], sizes = [8, 8], strides = [1, 1]} : vector<8x64xf32> to vector<8x8xf32>
    %74 = vector.extract_strided_slice %3 {offsets = [0, 56], sizes = [8, 8], strides = [1, 1]} : vector<8x64xf32> to vector<8x8xf32>
    %75 = tpu.transpose %73, [1, 0] : vector<8x8xf32> -> vector<8x8xf32>
    %cst_29 = arith.constant dense<0.000000e+00> : vector<8x8xf32>
    %76 = tpu.matmul %72, %75, %cst_29 {dimension_numbers = #tpu.dot_dimension_numbers<[1], [0], [0], [1], [0, 0, 1, 1], [], []>} : vector<8x8xf32>, vector<8x8xf32>, vector<8x8xf32> -> vector<8x8xf32>
    %cst_30 = arith.constant 0.353553385 : f32
    %77 = vector.broadcast %cst_30 : f32 to vector<8x8xf32>
    %78 = arith.mulf %76, %77 : vector<8x8xf32>
    %cst_31 = arith.constant 0.000000e+00 : f32
    %79 = vector.broadcast %cst_31 : f32 to vector<8x8xf32>
    %80 = arith.cmpf ogt, %5, %79 : vector<8x8xf32>
    %cst_32 = arith.constant -1.000000e+09 : f32
    %81 = vector.broadcast %cst_32 : f32 to vector<8x8xf32>
    %82 = arith.select %80, %78, %81 : vector<8x8xi1>, vector<8x8xf32>
    %cst_33 = arith.constant dense<0xFF800000> : vector<8xf32>
    %83 = vector.multi_reduction <maximumf>, %82, %cst_33 [1] : vector<8x8xf32> to vector<8xf32>
    %84 = vector.shape_cast %83 : vector<8xf32> to vector<8x1xf32>
    %85 = vector.broadcast %84 : vector<8x1xf32> to vector<8x8xf32>
    %86 = arith.subf %82, %85 : vector<8x8xf32>
    %87 = math.exp %86 : vector<8x8xf32>
    %cst_34 = arith.constant dense<0.000000e+00> : vector<8xf32>
    %88 = vector.multi_reduction <add>, %87, %cst_34 [1] : vector<8x8xf32> to vector<8xf32>
    %89 = vector.shape_cast %88 : vector<8xf32> to vector<8x1xf32>
    %90 = tpu.reciprocal %89 {approx = true} : vector<8x1xf32> -> vector<8x1xf32>
    %91 = vector.broadcast %90 : vector<8x1xf32> to vector<8x8xf32>
    %92 = arith.mulf %87, %91 : vector<8x8xf32>
    %cst_35 = arith.constant dense<0.000000e+00> : vector<8x8xf32>
    %93 = tpu.matmul %92, %74, %cst_35 {dimension_numbers = #tpu.dot_dimension_numbers<[1], [0], [0], [1], [0, 0, 1, 1], [], []>} : vector<8x8xf32>, vector<8x8xf32>, vector<8x8xf32> -> vector<8x8xf32>
    %94 = tpu.concatenate %27, %49, %71, %93 in 1 : vector<8x8xf32>, vector<8x8xf32>, vector<8x8xf32>, vector<8x8xf32> -> vector<8x32xf32>
    %c0_36 = arith.constant 0 : index
    %c0_37 = arith.constant 0 : index
    %95 = vector.load %arg5[%c0_36, %c0_37] : memref<32x32xf32, #tpu.memory_space<vmem>>, vector<32x32xf32>
    %cst_38 = arith.constant dense<0.000000e+00> : vector<8x32xf32>
    %96 = tpu.matmul %94, %95, %cst_38 {dimension_numbers = #tpu.dot_dimension_numbers<[1], [0], [0], [1], [0, 0, 1, 1], [], []>} : vector<8x32xf32>, vector<32x32xf32>, vector<8x32xf32> -> vector<8x32xf32>
    %c0_39 = arith.constant 0 : index
    %c0_40 = arith.constant 0 : index
    %97 = vector.load %arg6[%c0_39, %c0_40] : memref<1x32xf32, #tpu.memory_space<vmem>>, vector<1x32xf32>
    %98 = vector.broadcast %97 : vector<1x32xf32> to vector<8x32xf32>
    %99 = arith.addf %96, %98 : vector<8x32xf32>
    %c0_41 = arith.constant 0 : index
    %c0_42 = arith.constant 0 : index
    %c0_43 = arith.constant 0 : index
    %100 = vector.load %arg4[%c0_41, %c0_42, %c0_43] : memref<1x8x32xf32, #tpu.memory_space<vmem>>, vector<1x8x32xf32>
    %101 = vector.shape_cast %100 : vector<1x8x32xf32> to vector<8x32xf32>
    %102 = arith.addf %99, %101 : vector<8x32xf32>
    %c0_44 = arith.constant 0 : index
    %c0_45 = arith.constant 0 : index
    %103 = vector.load %arg7[%c0_44, %c0_45] : memref<1x32xf32, #tpu.memory_space<vmem>>, vector<1x32xf32>
    %c0_46 = arith.constant 0 : index
    %c0_47 = arith.constant 0 : index
    %104 = vector.load %arg8[%c0_46, %c0_47] : memref<1x32xf32, #tpu.memory_space<vmem>>, vector<1x32xf32>
    %cst_48 = arith.constant dense<0.000000e+00> : vector<8xf32>
    %105 = vector.multi_reduction <add>, %102, %cst_48 [1] : vector<8x32xf32> to vector<8xf32>
    %106 = vector.shape_cast %105 : vector<8xf32> to vector<8x1xf32>
    %cst_49 = arith.constant 3.200000e+01 : f32
    %107 = vector.broadcast %cst_49 : f32 to vector<8x1xf32>
    %108 = arith.divf %106, %107 : vector<8x1xf32>
    %109 = vector.broadcast %108 : vector<8x1xf32> to vector<8x32xf32>
    %110 = arith.subf %102, %109 : vector<8x32xf32>
    %111 = arith.mulf %110, %110 : vector<8x32xf32>
    %cst_50 = arith.constant dense<0.000000e+00> : vector<8xf32>
    %112 = vector.multi_reduction <add>, %111, %cst_50 [1] : vector<8x32xf32> to vector<8xf32>
    %113 = vector.shape_cast %112 : vector<8xf32> to vector<8x1xf32>
    %cst_51 = arith.constant 3.200000e+01 : f32
    %114 = vector.broadcast %cst_51 : f32 to vector<8x1xf32>
    %115 = arith.divf %113, %114 : vector<8x1xf32>
    %116 = vector.broadcast %108 : vector<8x1xf32> to vector<8x32xf32>
    %117 = arith.subf %102, %116 : vector<8x32xf32>
    %cst_52 = arith.constant 9.99999996E-13 : f32
    %118 = vector.broadcast %cst_52 : f32 to vector<8x1xf32>
    %119 = arith.addf %115, %118 : vector<8x1xf32>
    %120 = math.rsqrt %119 : vector<8x1xf32>
    %121 = vector.broadcast %120 : vector<8x1xf32> to vector<8x32xf32>
    %122 = arith.mulf %117, %121 : vector<8x32xf32>
    %123 = vector.broadcast %103 : vector<1x32xf32> to vector<8x32xf32>
    %124 = arith.mulf %122, %123 : vector<8x32xf32>
    %125 = vector.broadcast %104 : vector<1x32xf32> to vector<8x32xf32>
    %126 = arith.addf %124, %125 : vector<8x32xf32>
    %c0_53 = arith.constant 0 : index
    %c0_54 = arith.constant 0 : index
    %127 = vector.load %arg9[%c0_53, %c0_54] : memref<32x64xf32, #tpu.memory_space<vmem>>, vector<32x64xf32>
    %cst_55 = arith.constant dense<0.000000e+00> : vector<8x64xf32>
    %128 = tpu.matmul %126, %127, %cst_55 {dimension_numbers = #tpu.dot_dimension_numbers<[1], [0], [0], [1], [0, 0, 1, 1], [], []>} : vector<8x32xf32>, vector<32x64xf32>, vector<8x64xf32> -> vector<8x64xf32>
    %c0_56 = arith.constant 0 : index
    %c0_57 = arith.constant 0 : index
    %129 = vector.load %arg10[%c0_56, %c0_57] : memref<1x64xf32, #tpu.memory_space<vmem>>, vector<1x64xf32>
    %130 = vector.broadcast %129 : vector<1x64xf32> to vector<8x64xf32>
    %131 = arith.addf %128, %130 : vector<8x64xf32>
    %cst_58 = arith.constant 0.000000e+00 : f32
    %132 = vector.broadcast %cst_58 : f32 to vector<8x64xf32>
    %133 = arith.maximumf %131, %132 : vector<8x64xf32>
    %c0_59 = arith.constant 0 : index
    %c0_60 = arith.constant 0 : index
    %134 = vector.load %arg11[%c0_59, %c0_60] : memref<64x32xf32, #tpu.memory_space<vmem>>, vector<64x32xf32>
    %cst_61 = arith.constant dense<0.000000e+00> : vector<8x32xf32>
    %135 = tpu.matmul %133, %134, %cst_61 {dimension_numbers = #tpu.dot_dimension_numbers<[1], [0], [0], [1], [0, 0, 1, 1], [], []>} : vector<8x64xf32>, vector<64x32xf32>, vector<8x32xf32> -> vector<8x32xf32>
    %c0_62 = arith.constant 0 : index
    %c0_63 = arith.constant 0 : index
    %136 = vector.load %arg12[%c0_62, %c0_63] : memref<1x32xf32, #tpu.memory_space<vmem>>, vector<1x32xf32>
    %137 = vector.broadcast %136 : vector<1x32xf32> to vector<8x32xf32>
    %138 = arith.addf %135, %137 : vector<8x32xf32>
    %139 = arith.addf %138, %126 : vector<8x32xf32>
    %c0_64 = arith.constant 0 : index
    %c0_65 = arith.constant 0 : index
    %140 = vector.load %arg13[%c0_64, %c0_65] : memref<1x32xf32, #tpu.memory_space<vmem>>, vector<1x32xf32>
    %c0_66 = arith.constant 0 : index
    %c0_67 = arith.constant 0 : index
    %141 = vector.load %arg14[%c0_66, %c0_67] : memref<1x32xf32, #tpu.memory_space<vmem>>, vector<1x32xf32>
    %cst_68 = arith.constant dense<0.000000e+00> : vector<8xf32>
    %142 = vector.multi_reduction <add>, %139, %cst_68 [1] : vector<8x32xf32> to vector<8xf32>
    %143 = vector.shape_cast %142 : vector<8xf32> to vector<8x1xf32>
    %cst_69 = arith.constant 3.200000e+01 : f32
    %144 = vector.broadcast %cst_69 : f32 to vector<8x1xf32>
    %145 = arith.divf %143, %144 : vector<8x1xf32>
    %146 = vector.broadcast %145 : vector<8x1xf32> to vector<8x32xf32>
    %147 = arith.subf %139, %146 : vector<8x32xf32>
    %148 = arith.mulf %147, %147 : vector<8x32xf32>
    %cst_70 = arith.constant dense<0.000000e+00> : vector<8xf32>
    %149 = vector.multi_reduction <add>, %148, %cst_70 [1] : vector<8x32xf32> to vector<8xf32>
    %150 = vector.shape_cast %149 : vector<8xf32> to vector<8x1xf32>
    %cst_71 = arith.constant 3.200000e+01 : f32
    %151 = vector.broadcast %cst_71 : f32 to vector<8x1xf32>
    %152 = arith.divf %150, %151 : vector<8x1xf32>
    %153 = vector.broadcast %145 : vector<8x1xf32> to vector<8x32xf32>
    %154 = arith.subf %139, %153 : vector<8x32xf32>
    %cst_72 = arith.constant 9.99999996E-13 : f32
    %155 = vector.broadcast %cst_72 : f32 to vector<8x1xf32>
    %156 = arith.addf %152, %155 : vector<8x1xf32>
    %157 = math.rsqrt %156 : vector<8x1xf32>
    %158 = vector.broadcast %157 : vector<8x1xf32> to vector<8x32xf32>
    %159 = arith.mulf %154, %158 : vector<8x32xf32>
    %160 = vector.broadcast %140 : vector<1x32xf32> to vector<8x32xf32>
    %161 = arith.mulf %159, %160 : vector<8x32xf32>
    %162 = vector.broadcast %141 : vector<1x32xf32> to vector<8x32xf32>
    %163 = arith.addf %161, %162 : vector<8x32xf32>
    %c0_73 = arith.constant 0 : index
    %c0_74 = arith.constant 0 : index
    %c0_75 = arith.constant 0 : index
    %164 = vector.load %arg15[%c0_73, %c0_74, %c0_75] : memref<1x8x32xf32, #tpu.memory_space<vmem>>, vector<1x8x32xf32>
    %165 = vector.shape_cast %164 : vector<1x8x32xf32> to vector<8x32xf32>
    %166 = vector.shape_cast %163 : vector<8x32xf32> to vector<1x8x32xf32>
    tpu.vector_store %arg15[%c0_73, %c0_74, %c0_75], %166 {strides = array<i32>} : memref<1x8x32xf32, #tpu.memory_space<vmem>>, vector<1x8x32xf32>,
    return
  }
  func.func @transform_0(%arg0: i32) -> (i32, i32, i32) {
    %c0_i32 = arith.constant 0 : i32
    %c0_i32_0 = arith.constant 0 : i32
    %c0_i32_1 = arith.constant 0 : i32
    return %arg0, %c0_i32, %c0_i32_0 : i32, i32, i32
  }
  func.func @transform_1(%arg0: i32) -> (i32, i32, i32) {
    %c0_i32 = arith.constant 0 : i32
    %c0_i32_0 = arith.constant 0 : i32
    %c0_i32_1 = arith.constant 0 : i32
    return %arg0, %c0_i32, %c0_i32_0 : i32, i32, i32
  }
  func.func @transform_2(%arg0: i32) -> (i32, i32, i32, i32) {
    %c0_i32 = arith.constant 0 : i32
    %c0_i32_0 = arith.constant 0 : i32
    %c0_i32_1 = arith.constant 0 : i32
    %c0_i32_2 = arith.constant 0 : i32
    return %arg0, %c0_i32, %c0_i32_0, %c0_i32_1 : i32, i32, i32, i32
  }
  func.func @transform_3(%arg0: i32) -> (i32, i32, i32) {
    %c0_i32 = arith.constant 0 : i32
    %c0_i32_0 = arith.constant 0 : i32
    %c0_i32_1 = arith.constant 0 : i32
    return %arg0, %c0_i32, %c0_i32_0 : i32, i32, i32
  }
  func.func @transform_4(%arg0: i32) -> (i32, i32) {
    %c0_i32 = arith.constant 0 : i32
    %c0_i32_0 = arith.constant 0 : i32
    %c0_i32_1 = arith.constant 0 : i32
    return %c0_i32, %c0_i32_0 : i32, i32
  }
  func.func @transform_5(%arg0: i32) -> (i32, i32) {
    %c0_i32 = arith.constant 0 : i32
    %c0_i32_0 = arith.constant 0 : i32
    %c0_i32_1 = arith.constant 0 : i32
    return %c0_i32, %c0_i32_0 : i32, i32
  }
  func.func @transform_6(%arg0: i32) -> (i32, i32) {
    %c0_i32 = arith.constant 0 : i32
    %c0_i32_0 = arith.constant 0 : i32
    %c0_i32_1 = arith.constant 0 : i32
    return %c0_i32, %c0_i32_0 : i32, i32
  }
  func.func @transform_7(%arg0: i32) -> (i32, i32) {
    %c0_i32 = arith.constant 0 : i32
    %c0_i32_0 = arith.constant 0 : i32
    %c0_i32_1 = arith.constant 0 : i32
    return %c0_i32, %c0_i32_0 : i32, i32
  }
  func.func @transform_8(%arg0: i32) -> (i32, i32) {
    %c0_i32 = arith.constant 0 : i32
    %c0_i32_0 = arith.constant 0 : i32
    %c0_i32_1 = arith.constant 0 : i32
    return %c0_i32, %c0_i32_0 : i32, i32
  }
  func.func @transform_9(%arg0: i32) -> (i32, i32) {
    %c0_i32 = arith.constant 0 : i32
    %c0_i32_0 = arith.constant 0 : i32
    %c0_i32_1 = arith.constant 0 : i32
    return %c0_i32, %c0_i32_0 : i32, i32
  }
  func.func @transform_10(%arg0: i32) -> (i32, i32) {
    %c0_i32 = arith.constant 0 : i32
    %c0_i32_0 = arith.constant 0 : i32
    %c0_i32_1 = arith.constant 0 : i32
    return %c0_i32, %c0_i32_0 : i32, i32
  }
  func.func @transform_11(%arg0: i32) -> (i32, i32) {
    %c0_i32 = arith.constant 0 : i32
    %c0_i32_0 = arith.constant 0 : i32
    %c0_i32_1 = arith.constant 0 : i32
    return %c0_i32, %c0_i32_0 : i32, i32
  }
  func.func @transform_12(%arg0: i32) -> (i32, i32) {
    %c0_i32 = arith.constant 0 : i32
    %c0_i32_0 = arith.constant 0 : i32
    %c0_i32_1 = arith.constant 0 : i32
    return %c0_i32, %c0_i32_0 : i32, i32
  }
  func.func @transform_13(%arg0: i32) -> (i32, i32) {
    %c0_i32 = arith.constant 0 : i32
    %c0_i32_0 = arith.constant 0 : i32
    %c0_i32_1 = arith.constant 0 : i32
    return %c0_i32, %c0_i32_0 : i32, i32
  }
  func.func @transform_14(%arg0: i32) -> (i32, i32, i32) {
    %c0_i32 = arith.constant 0 : i32
    %c0_i32_0 = arith.constant 0 : i32
    %c0_i32_1 = arith.constant 0 : i32
    return %arg0, %c0_i32, %c0_i32_0 : i32, i32, i32
  }
}

</mosaic_0001>

<llo_original>
// kernel: _lambda_.4
$region0: #{_lambda_.4}
  #allocation0 [shape = 'u32[]', space=smem, size = 0x4, offset = 0x4, fixed_abs, tag = 'smem constant byte address 0x4 - core index']
  #allocation1 [shape = 'u32[72,128]{1,0:T(1,128)}', space=vmem, size = 0x9000, scoped, tag = 'internal scratch']
  %s0 = inlined_call_operand.hbm [shape: f32[16,32], index: 0, kind: input, shape index: {}]
  %s1 = inlined_call_operand.hbm [shape: f32[32,96], index: 1, kind: input, shape index: {}]
  %s2 = inlined_call_operand.hbm [shape: f32[1,96], index: 2, kind: input, shape index: {}]
  %s3 = inlined_call_operand.vmem [shape: f32[16,96], index: 3, kind: output, shape index: {}]
  %s4 = sld [smem:[#allocation0]]
  $region34: #{_lambda_.4} parent=0
    _
  %s6 = ssub.s32 1, %s4
  %s7 = scalar_select 0, %s6, %s4
  $region1: #{_lambda_.4} parent=0
    #allocation2 [shape = 'u8[8192]{0}', space=vmem, size = 0x2000, scoped, tag = 'input window, operand 0, single buffered']
    #allocation3 [shape = 's32[1]{0}', space=sflag, size = 0x4, scoped, tag = 'scoped memory for _lambda_.4']
    #allocation4 [shape = 'u8[16384]{0}', space=vmem, size = 0x4000, scoped, tag = 'input window, operand 1, single buffered']
    #allocation5 [shape = 's32[1]{0}', space=sflag, size = 0x4, scoped, tag = 'scoped memory for _lambda_.4']
    #allocation6 [shape = 'u8[512]{0}', space=vmem, size = 0x400, scoped, tag = 'input window, operand 2, single buffered']
    %8 = vsyncpa [#allocation3], 0
    %9 = vsyncpa [#allocation5], 0
    // Predicated region
    $region2: #{_lambda_.4} parent=1 // pred_check
      _
    $region3: #{_lambda_.4} parent=1 // pred_check_branch
      %11 = sbr.rel (0) target = $region5
    $region4: #{_lambda_.4} parent=1 // pred_region
      %13 = vsyncadd [#allocation3], 0
      %s14 = sshll.u32 %s0, 4
      %s15 = int_to_ptr.hbm [resolvable:$true] %s14
      %s16 = sshll.u32 [#allocation2], 4
      %s17 = int_to_ptr.vmem [resolvable:$true] %s16
      %22 = dma.hbm_to_vmem [thread:$0]  %s15, 256, %s17, [#allocation3], 128, 128, 8
    $region5: #{_lambda_.4} parent=1 // pred_fallthru
      _
    // Predicated region
    $region6: #{_lambda_.4} parent=1 // pred_check
      _
    $region7: #{_lambda_.4} parent=1 // pred_check_branch
      %24 = sbr.rel (0) target = $region9
    $region8: #{_lambda_.4} parent=1 // pred_region
      %26 = vsyncadd [#allocation5], 0
      %s27 = sshll.u32 %s1, 4
      %s28 = int_to_ptr.hbm [resolvable:$true] %s27
      %s29 = sshll.u32 [#allocation4], 4
      %s30 = int_to_ptr.vmem [resolvable:$true] %s29
      %35 = dma.hbm_to_vmem [thread:$0]  %s28, 512, %s30, [#allocation5], 128, 128, 8
    $region9: #{_lambda_.4} parent=1 // pred_fallthru
      _
    // Predicated region
    $region10: #{_lambda_.4} parent=1 // pred_check
      _
    $region11: #{_lambda_.4} parent=1 // pred_check_branch
      %37 = sbr.rel (0) target = $region13
    $region12: #{_lambda_.4} parent=1 // pred_region
      %39 = vsyncadd [#allocation5], 0
      %s41 = sshll.u32 %s2, 4
      %s42 = int_to_ptr.hbm [resolvable:$true] %s41
      %s43 = sshll.u32 [#allocation6], 4
      %s44 = int_to_ptr.vmem [resolvable:$true] %s43
      %46 = dma.hbm_to_vmem [thread:$0]  %s42, 16, %s44, [#allocation5]
    $region13: #{_lambda_.4} parent=1 // pred_fallthru
      _
    // Predicated region
    $region14: #{_lambda_.4} parent=1 // pred_check
      _
    $region15: #{_lambda_.4} parent=1 // pred_check_branch
      %48 = sbr.rel (0) target = $region17
    $region16: #{_lambda_.4} parent=1 // pred_region
      %50 = dma.done [#allocation3], 256
    $region17: #{_lambda_.4} parent=1 // pred_fallthru
      _
    // Predicated region
    $region18: #{_lambda_.4} parent=1 // pred_check
      _
    $region19: #{_lambda_.4} parent=1 // pred_check_branch
      %52 = sbr.rel (0) target = $region21
    $region20: #{_lambda_.4} parent=1 // pred_region
      %54 = dma.done [#allocation5], 512
    $region21: #{_lambda_.4} parent=1 // pred_fallthru
      _
    // Predicated region
    $region22: #{_lambda_.4} parent=1 // pred_check
      _
    $region23: #{_lambda_.4} parent=1 // pred_check_branch
      %56 = sbr.rel (0) target = $region25
    $region24: #{_lambda_.4} parent=1 // pred_region
      %58 = dma.done [#allocation5], 16
    $region25: #{_lambda_.4} parent=1 // pred_fallthru
      _
    %v59 = vld [vmem:[#allocation2] sm:$0xff]
    %v60 = vld [vmem:[#allocation2 + $0x8] sm:$0xff]
    %v61 = vld [vmem:[#allocation4] sm:$0xff]
    %v62 = vld [vmem:[#allocation4 + $0x8] sm:$0xff]
    %v63 = vld [vmem:[#allocation4 + $0x10] sm:$0xff]
    %v64 = vld [vmem:[#allocation4 + $0x18] sm:$0xff]
    %v65 = vld [vmem:[#allocation6] sm:$0x1]
    %v67 = vperm.slane %v65, 0
    %vm69 = vcmask 261120
    %v71 = vsel %vm69, %v59, 0
    %v74 = vsel %vm69, %v60, 0
    %76 = vmatpush.msra.mxu0 0.0
    %77 = vmatpush.msra.mxu0 0.0
    %78 = vmatpush.msra.mxu0 0.0
    %79 = vmatpush.msra.mxu0 0.0
    %80 = vmatpush.msra.mxu0 0.0
    %81 = vmatpush.msra.mxu0 0.0
    %82 = vmatpush.msra.mxu0 0.0
    %83 = vmatpush.msra.mxu0 0.0
    %84 = vmatpush.msra.mxu0 0.0
    %85 = vmatpush.msra.mxu0 0.0
    %86 = vmatpush.msra.mxu0 0.0
    %87 = vmatpush.msra.mxu0 0.0
    %88 = vmatpush.msra.mxu0 %v64
    %89 = vmatpush.msra.mxu0 %v63
    %90 = vmatpush.msra.mxu0 %v62
    %91 = vmatpush.msra.mxu0 %v61
    %92 = vmatmul.f32.gmra.mxu0 %v71
    %v93 = vpop.f32.mrf.mxu0
    %v94 = vadd.f32 %v67, %v93
    %95 = vmatmul.f32.gmra.mxu0 %v74
    %v96 = vpop.f32.mrf.mxu0
    %v97 = vadd.f32 %v67, %v96
    %98 = vdwg.mxu0
    %vm99 = vcmask 785408
    %100 = vst.msk [vmem:[%s3] sm:$0xff] %vm99, %v94
    %101 = vst.msk [vmem:[%s3 + $0x8] sm:$0xff] %vm99, %v97
    // Predicated region
    $region26: #{_lambda_.4} parent=1 // pred_check
      _
    $region27: #{_lambda_.4} parent=1 // pred_check_branch
      %103 = sbr.rel (0) target = $region29
    $region28: #{_lambda_.4} parent=1 // pred_region
      _
    $region29: #{_lambda_.4} parent=1 // pred_fallthru
      _
    // Predicated region
    $region30: #{_lambda_.4} parent=1 // pred_check
      _
    $region31: #{_lambda_.4} parent=1 // pred_check_branch
      %105 = sbr.rel (0) target = $region33
    $region32: #{_lambda_.4} parent=1 // pred_region
      _
    $region33: #{_lambda_.4} parent=1 // pred_fallthru
      _
    %106 = vsyncpa [#allocation3], 1
    %107 = vsyncpa [#allocation5], 1

// kernel: _lambda_.6
$region0: #{_lambda_.6}
  #allocation0 [shape = 'u32[]', space=smem, size = 0x4, offset = 0x4, fixed_abs, tag = 'smem constant byte address 0x4 - core index']
  #allocation1 [shape = 'u32[72,128]{1,0:T(1,128)}', space=vmem, size = 0x9000, scoped, tag = 'internal scratch']
  %s0 = inlined_call_operand.hbm [shape: f32[16,32], index: 0, kind: input, shape index: {}]
  %s1 = inlined_call_operand.hbm [shape: f32[32,64], index: 1, kind: input, shape index: {}]
  %s2 = inlined_call_operand.hbm [shape: f32[1,64], index: 2, kind: input, shape index: {}]
  %s3 = inlined_call_operand.vmem [shape: f32[16,64], index: 3, kind: output, shape index: {}]
  %s4 = sld [smem:[#allocation0]]
  $region34: #{_lambda_.6} parent=0
    _
  %s6 = ssub.s32 1, %s4
  %s7 = scalar_select 0, %s6, %s4
  $region1: #{_lambda_.6} parent=0
    #allocation2 [shape = 'u8[8192]{0}', space=vmem, size = 0x2000, scoped, tag = 'input window, operand 0, single buffered']
    #allocation3 [shape = 's32[1]{0}', space=sflag, size = 0x4, scoped, tag = 'scoped memory for _lambda_.6']
    #allocation4 [shape = 'u8[16384]{0}', space=vmem, size = 0x4000, scoped, tag = 'input window, operand 1, single buffered']
    #allocation5 [shape = 's32[1]{0}', space=sflag, size = 0x4, scoped, tag = 'scoped memory for _lambda_.6']
    #allocation6 [shape = 'u8[512]{0}', space=vmem, size = 0x400, scoped, tag = 'input window, operand 2, single buffered']
    %8 = vsyncpa [#allocation3], 0
    %9 = vsyncpa [#allocation5], 0
    // Predicated region
    $region2: #{_lambda_.6} parent=1 // pred_check
      _
    $region3: #{_lambda_.6} parent=1 // pred_check_branch
      %11 = sbr.rel (0) target = $region5
    $region4: #{_lambda_.6} parent=1 // pred_region
      %13 = vsyncadd [#allocation3], 0
      %s14 = sshll.u32 %s0, 4
      %s15 = int_to_ptr.hbm [resolvable:$true] %s14
      %s16 = sshll.u32 [#allocation2], 4
      %s17 = int_to_ptr.vmem [resolvable:$true] %s16
      %22 = dma.hbm_to_vmem [thread:$0]  %s15, 256, %s17, [#allocation3], 128, 128, 8
    $region5: #{_lambda_.6} parent=1 // pred_fallthru
      _
    // Predicated region
    $region6: #{_lambda_.6} parent=1 // pred_check
      _
    $region7: #{_lambda_.6} parent=1 // pred_check_branch
      %24 = sbr.rel (0) target = $region9
    $region8: #{_lambda_.6} parent=1 // pred_region
      %26 = vsyncadd [#allocation5], 0
      %s27 = sshll.u32 %s1, 4
      %s28 = int_to_ptr.hbm [resolvable:$true] %s27
      %s29 = sshll.u32 [#allocation4], 4
      %s30 = int_to_ptr.vmem [resolvable:$true] %s29
      %35 = dma.hbm_to_vmem [thread:$0]  %s28, 512, %s30, [#allocation5], 128, 128, 8
    $region9: #{_lambda_.6} parent=1 // pred_fallthru
      _
    // Predicated region
    $region10: #{_lambda_.6} parent=1 // pred_check
      _
    $region11: #{_lambda_.6} parent=1 // pred_check_branch
      %37 = sbr.rel (0) target = $region13
    $region12: #{_lambda_.6} parent=1 // pred_region
      %39 = vsyncadd [#allocation5], 0
      %s41 = sshll.u32 %s2, 4
      %s42 = int_to_ptr.hbm [resolvable:$true] %s41
      %s43 = sshll.u32 [#allocation6], 4
      %s44 = int_to_ptr.vmem [resolvable:$true] %s43
      %46 = dma.hbm_to_vmem [thread:$0]  %s42, 16, %s44, [#allocation5]
    $region13: #{_lambda_.6} parent=1 // pred_fallthru
      _
    // Predicated region
    $region14: #{_lambda_.6} parent=1 // pred_check
      _
    $region15: #{_lambda_.6} parent=1 // pred_check_branch
      %48 = sbr.rel (0) target = $region17
    $region16: #{_lambda_.6} parent=1 // pred_region
      %50 = dma.done [#allocation3], 256
    $region17: #{_lambda_.6} parent=1 // pred_fallthru
      _
    // Predicated region
    $region18: #{_lambda_.6} parent=1 // pred_check
      _
    $region19: #{_lambda_.6} parent=1 // pred_check_branch
      %52 = sbr.rel (0) target = $region21
    $region20: #{_lambda_.6} parent=1 // pred_region
      %54 = dma.done [#allocation5], 512
    $region21: #{_lambda_.6} parent=1 // pred_fallthru
      _
    // Predicated region
    $region22: #{_lambda_.6} parent=1 // pred_check
      _
    $region23: #{_lambda_.6} parent=1 // pred_check_branch
      %56 = sbr.rel (0) target = $region25
    $region24: #{_lambda_.6} parent=1 // pred_region
      %58 = dma.done [#allocation5], 16
    $region25: #{_lambda_.6} parent=1 // pred_fallthru
      _
    %v59 = vld [vmem:[#allocation2] sm:$0xff]
    %v60 = vld [vmem:[#allocation2 + $0x8] sm:$0xff]
    %v61 = vld [vmem:[#allocation4] sm:$0xff]
    %v62 = vld [vmem:[#allocation4 + $0x8] sm:$0xff]
    %v63 = vld [vmem:[#allocation4 + $0x10] sm:$0xff]
    %v64 = vld [vmem:[#allocation4 + $0x18] sm:$0xff]
    %v65 = vld [vmem:[#allocation6] sm:$0x1]
    %v67 = vperm.slane %v65, 0
    %vm69 = vcmask 261120
    %v71 = vsel %vm69, %v59, 0
    %v74 = vsel %vm69, %v60, 0
    %76 = vmatpush.msra.mxu0 0.0
    %77 = vmatpush.msra.mxu0 0.0
    %78 = vmatpush.msra.mxu0 0.0
    %79 = vmatpush.msra.mxu0 0.0
    %80 = vmatpush.msra.mxu0 0.0
    %81 = vmatpush.msra.mxu0 0.0
    %82 = vmatpush.msra.mxu0 0.0
    %83 = vmatpush.msra.mxu0 0.0
    %84 = vmatpush.msra.mxu0 0.0
    %85 = vmatpush.msra.mxu0 0.0
    %86 = vmatpush.msra.mxu0 0.0
    %87 = vmatpush.msra.mxu0 0.0
    %88 = vmatpush.msra.mxu0 %v64
    %89 = vmatpush.msra.mxu0 %v63
    %90 = vmatpush.msra.mxu0 %v62
    %91 = vmatpush.msra.mxu0 %v61
    %92 = vmatmul.f32.gmra.mxu0 %v71
    %v93 = vpop.f32.mrf.mxu0
    %v94 = vadd.f32 %v67, %v93
    %95 = vmatmul.f32.gmra.mxu0 %v74
    %v96 = vpop.f32.mrf.mxu0
    %v97 = vadd.f32 %v67, %v96
    %98 = vdwg.mxu0
    %vm99 = vcmask 523264
    %100 = vst.msk [vmem:[%s3] sm:$0xff] %vm99, %v94
    %101 = vst.msk [vmem:[%s3 + $0x8] sm:$0xff] %vm99, %v97
    // Predicated region
    $region26: #{_lambda_.6} parent=1 // pred_check
      _
    $region27: #{_lambda_.6} parent=1 // pred_check_branch
      %103 = sbr.rel (0) target = $region29
    $region28: #{_lambda_.6} parent=1 // pred_region
      _
    $region29: #{_lambda_.6} parent=1 // pred_fallthru
      _
    // Predicated region
    $region30: #{_lambda_.6} parent=1 // pred_check
      _
    $region31: #{_lambda_.6} parent=1 // pred_check_branch
      %105 = sbr.rel (0) target = $region33
    $region32: #{_lambda_.6} parent=1 // pred_region
      _
    $region33: #{_lambda_.6} parent=1 // pred_fallthru
      _
    %106 = vsyncpa [#allocation3], 1
    %107 = vsyncpa [#allocation5], 1

// kernel: _lambda_.5
$region0: #{_lambda_.5}
  #allocation0 [shape = 'u32[]', space=smem, size = 0x4, offset = 0x4, fixed_abs, tag = 'smem constant byte address 0x4 - core index']
  #allocation1 [shape = 'u32[72,128]{1,0:T(1,128)}', space=vmem, size = 0x9000, scoped, tag = 'internal scratch']
  %s0 = inlined_call_operand.vmem [shape: f32[2,8,96], index: 0, kind: input, shape index: {}]
  %s1 = inlined_call_operand.hbm [shape: f32[2,1,8,8], index: 1, kind: input, shape index: {}]
  %s2 = inlined_call_operand.hbm [shape: f32[2,8,32], index: 2, kind: input, shape index: {}]
  %s3 = inlined_call_operand.hbm [shape: f32[32,32], index: 3, kind: input, shape index: {}]
  %s4 = inlined_call_operand.vmem [shape: f32[1,32], index: 4, kind: input, shape index: {}]
  %s5 = inlined_call_operand.vmem [shape: f32[1,32], index: 5, kind: input, shape index: {}]
  %s6 = inlined_call_operand.hbm [shape: f32[1,32], index: 6, kind: input, shape index: {}]
  %s7 = inlined_call_operand.hbm [shape: f32[32,32], index: 7, kind: input, shape index: {}]
  %s8 = inlined_call_operand.hbm [shape: f32[1,32], index: 8, kind: input, shape index: {}]
  %s9 = inlined_call_operand.vmem [shape: f32[2,8,32], index: 9, kind: output, shape index: {0}]
  %s10 = inlined_call_operand.vmem [shape: f32[2,8,32], index: 10, kind: output, shape index: {1}]
  %11 = xla_tuple %s9, %s10
  %s12 = sld [smem:[#allocation0]]
  $region101: #{_lambda_.5} parent=0
    _
  %s14 = ssub.s32 1, %s12
  %s15 = scalar_select 0, %s14, %s12
  $region1: #{_lambda_.5} parent=0
    #allocation2 [shape = 'u8[8192]{0}', space=vmem, size = 0x2000, scoped, tag = 'input window, operand 1']
    #allocation3 [shape = 's32[2]{0}', space=sflag, size = 0x8, scoped, tag = 'scoped memory for _lambda_.5']
    #allocation4 [shape = 'u8[8192]{0}', space=vmem, size = 0x2000, scoped, tag = 'input window, operand 2']
    #allocation5 [shape = 's32[2]{0}', space=sflag, size = 0x8, scoped, tag = 'scoped memory for _lambda_.5']
    #allocation6 [shape = 'u8[16384]{0}', space=vmem, size = 0x4000, scoped, tag = 'input window, operand 3, single buffered']
    #allocation7 [shape = 'u8[512]{0}', space=vmem, size = 0x400, scoped, tag = 'input window, operand 6, single buffered']
    #allocation8 [shape = 's32[1]{0}', space=sflag, size = 0x4, scoped, tag = 'scoped memory for _lambda_.5']
    #allocation9 [shape = 'u8[16384]{0}', space=vmem, size = 0x4000, scoped, tag = 'input window, operand 7, single buffered']
    #allocation10 [shape = 'u8[512]{0}', space=vmem, size = 0x400, scoped, tag = 'input window, operand 8, single buffered']
    #allocation11 [shape = 's32[1]{0}', space=sflag, size = 0x4, scoped, tag = 'scoped memory for _lambda_.5']
    %16 = vsyncpa [#allocation3], 0
    %s17 = scalar_lea.sflag [#allocation3], 1
    %18 = vsyncpa %s17, 0
    %19 = vsyncpa [#allocation5], 0
    %s20 = scalar_lea.sflag [#allocation5], 1
    %21 = vsyncpa %s20, 0
    %22 = vsyncpa [#allocation8], 0
    %23 = vsyncpa [#allocation11], 0
    loop: start=0, step=1, limit=4
    $region2: #{_lambda_.5} parent=1 // loop_pre_header
      _
    $region3: #{_lambda_.5} parent=1 // loop_header
      %s25 = sphi 0, %s29
      %p26 = scmp.ge.s32.totalorder %s25, 4
      %s35 = sphi 0, %s37
      %s38 = sphi 0, %s35
      %s39 = sphi 0, %s38
      %s55 = sphi 0, %s39
      %s61 = sphi 0, %s63
      %s64 = sphi 0, %s61
      %s65 = sphi 0, %s64
      %s81 = sphi 0, %s65
      %s87 = sphi 0, %s89
      %s90 = sphi 0, %s87
      %s91 = sphi 0, %s90
      %s107 = sphi 0, %s91
      %s111 = sphi 0, %s111
      %s113 = sphi 0, %s111
      %s114 = sphi 0, %s113
      %s128 = sphi 0, %s114
      %s132 = sphi 0, %s132
      %s134 = sphi 0, %s132
      %s135 = sphi 0, %s134
      %s149 = sphi 0, %s135
      %s153 = sphi 0, %s153
      %s155 = sphi 0, %s153
      %s156 = sphi 0, %s155
      %s170 = sphi 0, %s156
      %s174 = sphi 0, %s174
      %s176 = sphi 0, %s174
      %s177 = sphi 0, %s176
      %s191 = sphi 0, %s177
      %s195 = sphi 0, %s195
      %s197 = sphi 0, %s195
      %s198 = sphi 0, %s197
      %s212 = sphi 0, %s198
      %s216 = sphi 0, %s216
      %s218 = sphi 0, %s216
      %s219 = sphi 0, %s218
      %s233 = sphi 0, %s219
      %s239 = sphi 0, %s241
      %s242 = sphi 0, %s239
      %s243 = sphi 0, %s242
      %s259 = sphi 0, %s243
      %s265 = sphi 0, %s267
      %s268 = sphi 0, %s265
      %s269 = sphi 0, %s268
      %s285 = sphi 0, %s269
    $region4: #{_lambda_.5} parent=1 // loop_header_branch
      %28 = sbr.rel (%p26) target = $region8
    $region5: #{_lambda_.5} parent=1 // loop_body
      %s30 = ssub.s32 %s25, 1
      %s31 = ssub.s32 %s25, 2
      %s32 = sadd.s32 %s25, 1
      %s33 = ssub.s32 %s25, %s32
      %p34 = scmp.eq.s32.totalorder %s33, 0
      %s36 = sadd.s32 %s35, 1
      %s37 = scalar_select %p34, %s35, %s36
      %p40 = pneg %p34
      %p41 = scmp.eq.s32.totalorder %s25, 1
      %p42 = por %p40, %p41
      %p43 = scmp.ne.s32.totalorder %s35, %s38
      %p44 = scmp.eq.s32.totalorder %s25, 0
      %p45 = por %p43, %p44
      %p46 = scmp.ne.s32.totalorder %s35, %s38
      %p47 = scmp.eq.s32.totalorder %s30, 1
      %p48 = por %p46, %p47
      %p49 = scmp.ne.s32.totalorder %s38, %s39
      %p50 = scmp.eq.s32.totalorder %s30, 0
      %p51 = por %p49, %p50
      %p52 = scmp.ne.s32.totalorder %s38, %s39
      %p53 = scmp.eq.s32.totalorder %s31, 1
      %p54 = por %p52, %p53
      %p56 = scmp.ne.s32.totalorder %s39, %s55
      %p57 = scmp.eq.s32.totalorder %s31, 0
      %p58 = por %p56, %p57
      %s59 = ssub.s32 %s25, %s32
      %p60 = scmp.eq.s32.totalorder %s59, 0
      %s62 = sadd.s32 %s61, 1
      %s63 = scalar_select %p60, %s61, %s62
      %p66 = pneg %p60
      %p67 = scmp.eq.s32.totalorder %s25, 1
      %p68 = por %p66, %p67
      %p69 = scmp.ne.s32.totalorder %s61, %s64
      %p70 = scmp.eq.s32.totalorder %s25, 0
      %p71 = por %p69, %p70
      %p72 = scmp.ne.s32.totalorder %s61, %s64
      %p73 = scmp.eq.s32.totalorder %s30, 1
      %p74 = por %p72, %p73
      %p75 = scmp.ne.s32.totalorder %s64, %s65
      %p76 = scmp.eq.s32.totalorder %s30, 0
      %p77 = por %p75, %p76
      %p78 = scmp.ne.s32.totalorder %s64, %s65
      %p79 = scmp.eq.s32.totalorder %s31, 1
      %p80 = por %p78, %p79
      %p82 = scmp.ne.s32.totalorder %s65, %s81
      %p83 = scmp.eq.s32.totalorder %s31, 0
      %p84 = por %p82, %p83
      %s85 = ssub.s32 %s25, %s32
      %p86 = scmp.eq.s32.totalorder %s85, 0
      %s88 = sadd.s32 %s87, 1
      %s89 = scalar_select %p86, %s87, %s88
      %p92 = pneg %p86
      %p93 = scmp.eq.s32.totalorder %s25, 1
      %p94 = por %p92, %p93
      %p95 = scmp.ne.s32.totalorder %s87, %s90
      %p96 = scmp.eq.s32.totalorder %s25, 0
      %p97 = por %p95, %p96
      %p98 = scmp.ne.s32.totalorder %s87, %s90
      %p99 = scmp.eq.s32.totalorder %s30, 1
      %p100 = por %p98, %p99
      %p101 = scmp.ne.s32.totalorder %s90, %s91
      %p102 = scmp.eq.s32.totalorder %s30, 0
      %p103 = por %p101, %p102
      %p104 = scmp.ne.s32.totalorder %s90, %s91
      %p105 = scmp.eq.s32.totalorder %s31, 1
      %p106 = por %p104, %p105
      %p108 = scmp.ne.s32.totalorder %s91, %s107
      %p109 = scmp.eq.s32.totalorder %s31, 0
      %p110 = por %p108, %p109
      %s112 = sadd.s32 %s111, 1
      %p115 = scmp.eq.s32.totalorder %s25, 1
      %p116 = scmp.ne.s32.totalorder %s111, %s113
      %p117 = scmp.eq.s32.totalorder %s25, 0
      %p118 = por %p116, %p117
      %p119 = scmp.ne.s32.totalorder %s111, %s113
      %p120 = scmp.eq.s32.totalorder %s30, 1
      %p121 = por %p119, %p120
      %p122 = scmp.ne.s32.totalorder %s113, %s114
      %p123 = scmp.eq.s32.totalorder %s30, 0
      %p124 = por %p122, %p123
      %p125 = scmp.ne.s32.totalorder %s113, %s114
      %p126 = scmp.eq.s32.totalorder %s31, 1
      %p127 = por %p125, %p126
      %p129 = scmp.ne.s32.totalorder %s114, %s128
      %p130 = scmp.eq.s32.totalorder %s31, 0
      %p131 = por %p129, %p130
      %s133 = sadd.s32 %s132, 1
      %p136 = scmp.eq.s32.totalorder %s25, 1
      %p137 = scmp.ne.s32.totalorder %s132, %s134
      %p138 = scmp.eq.s32.totalorder %s25, 0
      %p139 = por %p137, %p138
      %p140 = scmp.ne.s32.totalorder %s132, %s134
      %p141 = scmp.eq.s32.totalorder %s30, 1
      %p142 = por %p140, %p141
      %p143 = scmp.ne.s32.totalorder %s134, %s135
      %p144 = scmp.eq.s32.totalorder %s30, 0
      %p145 = por %p143, %p144
      %p146 = scmp.ne.s32.totalorder %s134, %s135
      %p147 = scmp.eq.s32.totalorder %s31, 1
      %p148 = por %p146, %p147
      %p150 = scmp.ne.s32.totalorder %s135, %s149
      %p151 = scmp.eq.s32.totalorder %s31, 0
      %p152 = por %p150, %p151
      %s154 = sadd.s32 %s153, 1
      %p157 = scmp.eq.s32.totalorder %s25, 1
      %p158 = scmp.ne.s32.totalorder %s153, %s155
      %p159 = scmp.eq.s32.totalorder %s25, 0
      %p160 = por %p158, %p159
      %p161 = scmp.ne.s32.totalorder %s153, %s155
      %p162 = scmp.eq.s32.totalorder %s30, 1
      %p163 = por %p161, %p162
      %p164 = scmp.ne.s32.totalorder %s155, %s156
      %p165 = scmp.eq.s32.totalorder %s30, 0
      %p166 = por %p164, %p165
      %p167 = scmp.ne.s32.totalorder %s155, %s156
      %p168 = scmp.eq.s32.totalorder %s31, 1
      %p169 = por %p167, %p168
      %p171 = scmp.ne.s32.totalorder %s156, %s170
      %p172 = scmp.eq.s32.totalorder %s31, 0
      %p173 = por %p171, %p172
      %s175 = sadd.s32 %s174, 1
      %p178 = scmp.eq.s32.totalorder %s25, 1
      %p179 = scmp.ne.s32.totalorder %s174, %s176
      %p180 = scmp.eq.s32.totalorder %s25, 0
      %p181 = por %p179, %p180
      %p182 = scmp.ne.s32.totalorder %s174, %s176
      %p183 = scmp.eq.s32.totalorder %s30, 1
      %p184 = por %p182, %p183
      %p185 = scmp.ne.s32.totalorder %s176, %s177
      %p186 = scmp.eq.s32.totalorder %s30, 0
      %p187 = por %p185, %p186
      %p188 = scmp.ne.s32.totalorder %s176, %s177
      %p189 = scmp.eq.s32.totalorder %s31, 1
      %p190 = por %p188, %p189
      %p192 = scmp.ne.s32.totalorder %s177, %s191
      %p193 = scmp.eq.s32.totalorder %s31, 0
      %p194 = por %p192, %p193
      %s196 = sadd.s32 %s195, 1
      %p199 = scmp.eq.s32.totalorder %s25, 1
      %p200 = scmp.ne.s32.totalorder %s195, %s197
      %p201 = scmp.eq.s32.totalorder %s25, 0
      %p202 = por %p200, %p201
      %p203 = scmp.ne.s32.totalorder %s195, %s197
      %p204 = scmp.eq.s32.totalorder %s30, 1
      %p205 = por %p203, %p204
      %p206 = scmp.ne.s32.totalorder %s197, %s198
      %p207 = scmp.eq.s32.totalorder %s30, 0
      %p208 = por %p206, %p207
      %p209 = scmp.ne.s32.totalorder %s197, %s198
      %p210 = scmp.eq.s32.totalorder %s31, 1
      %p211 = por %p209, %p210
      %p213 = scmp.ne.s32.totalorder %s198, %s212
      %p214 = scmp.eq.s32.totalorder %s31, 0
      %p215 = por %p213, %p214
      %s217 = sadd.s32 %s216, 1
      %p220 = scmp.eq.s32.totalorder %s25, 1
      %p221 = scmp.ne.s32.totalorder %s216, %s218
      %p222 = scmp.eq.s32.totalorder %s25, 0
      %p223 = por %p221, %p222
      %p224 = scmp.ne.s32.totalorder %s216, %s218
      %p225 = scmp.eq.s32.totalorder %s30, 1
      %p226 = por %p224, %p225
      %p227 = scmp.ne.s32.totalorder %s218, %s219
      %p228 = scmp.eq.s32.totalorder %s30, 0
      %p229 = por %p227, %p228
      %p230 = scmp.ne.s32.totalorder %s218, %s219
      %p231 = scmp.eq.s32.totalorder %s31, 1
      %p232 = por %p230, %p231
      %p234 = scmp.ne.s32.totalorder %s219, %s233
      %p235 = scmp.eq.s32.totalorder %s31, 0
      %p236 = por %p234, %p235
      %s237 = ssub.s32 %s25, %s32
      %p238 = scmp.eq.s32.totalorder %s237, 0
      %s240 = sadd.s32 %s239, 1
      %s241 = scalar_select %p238, %s239, %s240
      %p244 = pneg %p238
      %p245 = scmp.eq.s32.totalorder %s25, 1
      %p246 = por %p244, %p245
      %p247 = scmp.ne.s32.totalorder %s239, %s242
      %p248 = scmp.eq.s32.totalorder %s25, 0
      %p249 = por %p247, %p248
      %p250 = scmp.ne.s32.totalorder %s239, %s242
      %p251 = scmp.eq.s32.totalorder %s30, 1
      %p252 = por %p250, %p251
      %p253 = scmp.ne.s32.totalorder %s242, %s243
      %p254 = scmp.eq.s32.totalorder %s30, 0
      %p255 = por %p253, %p254
      %p256 = scmp.ne.s32.totalorder %s242, %s243
      %p257 = scmp.eq.s32.totalorder %s31, 1
      %p258 = por %p256, %p257
      %p260 = scmp.ne.s32.totalorder %s243, %s259
      %p261 = scmp.eq.s32.totalorder %s31, 0
      %p262 = por %p260, %p261
      %s263 = ssub.s32 %s25, %s32
      %p264 = scmp.eq.s32.totalorder %s263, 0
      %s266 = sadd.s32 %s265, 1
      %s267 = scalar_select %p264, %s265, %s266
      %p270 = pneg %p264
      %p271 = scmp.eq.s32.totalorder %s25, 1
      %p272 = por %p270, %p271
      %p273 = scmp.ne.s32.totalorder %s265, %s268
      %p274 = scmp.eq.s32.totalorder %s25, 0
      %p275 = por %p273, %p274
      %p276 = scmp.ne.s32.totalorder %s265, %s268
      %p277 = scmp.eq.s32.totalorder %s30, 1
      %p278 = por %p276, %p277
      %p279 = scmp.ne.s32.totalorder %s268, %s269
      %p280 = scmp.eq.s32.totalorder %s30, 0
      %p281 = por %p279, %p280
      %p282 = scmp.ne.s32.totalorder %s268, %s269
      %p283 = scmp.eq.s32.totalorder %s31, 1
      %p284 = por %p282, %p283
      %p286 = scmp.ne.s32.totalorder %s269, %s285
      %p287 = scmp.eq.s32.totalorder %s31, 0
      %p288 = por %p286, %p287
      %p289 = scmp.le.s32.totalorder 1, %s25
      %p290 = scmp.lt.s32.totalorder %s25, 3
      %p291 = pnand %p289, %p290
      %p292 = pneg %p291
      // Predicated region
      $region9: #{_lambda_.5} parent=5 // pred_check
        _
      $region10: #{_lambda_.5} parent=5 // pred_check_branch
        %294 = sbr.rel (%p291) target = $region12
      $region11: #{_lambda_.5} parent=5 // pred_region
        %s295 = ssub.s32 %s25, 1
        // Predicated region
        $region13: #{_lambda_.5} parent=11 // pred_check
          %p296 = pneg %p124
        $region14: #{_lambda_.5} parent=11 // pred_check_branch
          %298 = sbr.rel (%p296) target = $region16
        $region15: #{_lambda_.5} parent=11 // pred_region
          %300 = vsyncadd [#allocation5], 0
          %s301 = sshll.u32 %s3, 4
          %s302 = int_to_ptr.hbm [resolvable:$true] %s301
          %s303 = sshll.u32 [#allocation6], 4
          %s304 = int_to_ptr.vmem [resolvable:$true] %s303
          %309 = dma.hbm_to_vmem [thread:$0]  %s302, 512, %s304, [#allocation5], 128, 128, 8
        $region16: #{_lambda_.5} parent=11 // pred_fallthru
          _
        // Predicated region
        $region17: #{_lambda_.5} parent=11 // pred_check
          %p310 = pneg %p145
        $region18: #{_lambda_.5} parent=11 // pred_check_branch
          %312 = sbr.rel (%p310) target = $region20
        $region19: #{_lambda_.5} parent=11 // pred_region
          _
        $region20: #{_lambda_.5} parent=11 // pred_fallthru
          _
        // Predicated region
        $region21: #{_lambda_.5} parent=11 // pred_check
          %p313 = pneg %p166
        $region22: #{_lambda_.5} parent=11 // pred_check_branch
          %315 = sbr.rel (%p313) target = $region24
        $region23: #{_lambda_.5} parent=11 // pred_region
          _
        $region24: #{_lambda_.5} parent=11 // pred_fallthru
          _
        // Predicated region
        $region25: #{_lambda_.5} parent=11 // pred_check
          %p316 = pneg %p187
        $region26: #{_lambda_.5} parent=11 // pred_check_branch
          %318 = sbr.rel (%p316) target = $region28
        $region27: #{_lambda_.5} parent=11 // pred_region
          %320 = vsyncadd [#allocation8], 0
          %s322 = sshll.u32 %s6, 4
          %s323 = int_to_ptr.hbm [resolvable:$true] %s322
          %s324 = sshll.u32 [#allocation7], 4
          %s325 = int_to_ptr.vmem [resolvable:$true] %s324
          %327 = dma.hbm_to_vmem [thread:$0]  %s323, 16, %s325, [#allocation8]
        $region28: #{_lambda_.5} parent=11 // pred_fallthru
          _
        // Predicated region
        $region29: #{_lambda_.5} parent=11 // pred_check
          %p328 = pneg %p208
        $region30: #{_lambda_.5} parent=11 // pred_check_branch
          %330 = sbr.rel (%p328) target = $region32
        $region31: #{_lambda_.5} parent=11 // pred_region
          %332 = vsyncadd [#allocation8], 0
          %s333 = sshll.u32 %s7, 4
          %s334 = int_to_ptr.hbm [resolvable:$true] %s333
          %s335 = sshll.u32 [#allocation9], 4
          %s336 = int_to_ptr.vmem [resolvable:$true] %s335
          %341 = dma.hbm_to_vmem [thread:$0]  %s334, 512, %s336, [#allocation8], 128, 128, 8
        $region32: #{_lambda_.5} parent=11 // pred_fallthru
          _
        // Predicated region
        $region33: #{_lambda_.5} parent=11 // pred_check
          %p342 = pneg %p229
        $region34: #{_lambda_.5} parent=11 // pred_check_branch
          %344 = sbr.rel (%p342) target = $region36
        $region35: #{_lambda_.5} parent=11 // pred_region
          %346 = vsyncadd [#allocation11], 0
          %s348 = sshll.u32 %s8, 4
          %s349 = int_to_ptr.hbm [resolvable:$true] %s348
          %s350 = sshll.u32 [#allocation10], 4
          %s351 = int_to_ptr.vmem [resolvable:$true] %s350
          %353 = dma.hbm_to_vmem [thread:$0]  %s349, 16, %s351, [#allocation11]
        $region36: #{_lambda_.5} parent=11 // pred_fallthru
          _
      $region12: #{_lambda_.5} parent=5 // pred_fallthru
        _
      %p354 = scmp.lt.s32.totalorder %s25, 2
      // Predicated region
      $region37: #{_lambda_.5} parent=5 // pred_check
        %p355 = pneg %p354
      $region38: #{_lambda_.5} parent=5 // pred_check_branch
        %357 = sbr.rel (%p355) target = $region40
      $region39: #{_lambda_.5} parent=5 // pred_region
        // Predicated region
        $region41: #{_lambda_.5} parent=39 // pred_check
          %p358 = pneg %p45
        $region42: #{_lambda_.5} parent=39 // pred_check_branch
          %360 = sbr.rel (%p358) target = $region44
        $region43: #{_lambda_.5} parent=39 // pred_region
          %p361 = scmp.lt.s32.totalorder %s25, 1
          %s362 = scalar_select %p361, %s25, 1
          %s363 = smul.addr %s362, 8
          %s364 = scalar_lea.vmem %s0, %s363
        $region44: #{_lambda_.5} parent=39 // pred_fallthru
          _
        // Predicated region
        $region45: #{_lambda_.5} parent=39 // pred_check
          %p365 = pneg %p71
        $region46: #{_lambda_.5} parent=39 // pred_check_branch
          %367 = sbr.rel (%p365) target = $region48
        $region47: #{_lambda_.5} parent=39 // pred_region
          %s368 = sand.u32 %s61, 1
          %s369 = scalar_lea.sflag [#allocation3], %s368
          %s370 = sand.u32 %s61, 1
          %s371 = smul.addr %s370, 8
          %s372 = scalar_lea.vmem [#allocation2], %s371
          %374 = vsyncadd %s369, 0
          %s375 = smul.addr %s25, 8
          %s376 = scalar_lea.hbm %s1, %s375
          %s378 = sshll.u32 %s376, 4
          %s379 = int_to_ptr.hbm [resolvable:$true] %s378
          %s380 = sshll.u32 %s372, 4
          %s381 = int_to_ptr.vmem [resolvable:$true] %s380
          %383 = dma.hbm_to_vmem [thread:$0]  %s379, 128, %s381, %s369
        $region48: #{_lambda_.5} parent=39 // pred_fallthru
          _
        // Predicated region
        $region49: #{_lambda_.5} parent=39 // pred_check
          %p384 = pneg %p97
        $region50: #{_lambda_.5} parent=39 // pred_check_branch
          %386 = sbr.rel (%p384) target = $region52
        $region51: #{_lambda_.5} parent=39 // pred_region
          %s387 = sand.u32 %s25, 1
          %s388 = scalar_lea.sflag [#allocation5], %s387
          %s389 = sand.u32 %s87, 1
          %s390 = smul.addr %s389, 8
          %s391 = scalar_lea.vmem [#allocation4], %s390
          %393 = vsyncadd %s388, 0
          %s394 = smul.addr %s25, 8
          %s395 = scalar_lea.hbm %s2, %s394
          %s397 = sshll.u32 %s395, 4
          %s398 = int_to_ptr.hbm [resolvable:$true] %s397
          %s399 = sshll.u32 %s391, 4
          %s400 = int_to_ptr.vmem [resolvable:$true] %s399
          %402 = dma.hbm_to_vmem [thread:$0]  %s398, 128, %s400, %s388
        $region52: #{_lambda_.5} parent=39 // pred_fallthru
          _
      $region40: #{_lambda_.5} parent=5 // pred_fallthru
        _
      %p403 = scmp.le.s32.totalorder 1, %s25
      %p404 = scmp.lt.s32.totalorder %s25, 3
      %p405 = pnand %p403, %p404
      %p406 = pneg %p405
      // Predicated region
      $region53: #{_lambda_.5} parent=5 // pred_check
        _
      $region54: #{_lambda_.5} parent=5 // pred_check_branch
        %408 = sbr.rel (%p405) target = $region56
      $region55: #{_lambda_.5} parent=5 // pred_region
        %s409 = ssub.s32 %s25, 1
        %s410 = sand.u32 %s64, 1
        %s411 = scalar_lea.sflag [#allocation3], %s410
        %s412 = sand.u32 %s64, 1
        %s413 = smul.addr %s412, 8
        %s414 = scalar_lea.vmem [#allocation2], %s413
        // Predicated region
        $region57: #{_lambda_.5} parent=55 // pred_check
          %p415 = pneg %p77
        $region58: #{_lambda_.5} parent=55 // pred_check_branch
          %417 = sbr.rel (%p415) target = $region60
        $region59: #{_lambda_.5} parent=55 // pred_region
          %419 = dma.done %s411, 128
        $region60: #{_lambda_.5} parent=55 // pred_fallthru
          _
        %s420 = sand.u32 %s30, 1
        %s421 = scalar_lea.sflag [#allocation5], %s420
        %s422 = sand.u32 %s90, 1
        %s423 = smul.addr %s422, 8
        %s424 = scalar_lea.vmem [#allocation4], %s423
        // Predicated region
        $region61: #{_lambda_.5} parent=55 // pred_check
          %p425 = pneg %p103
        $region62: #{_lambda_.5} parent=55 // pred_check_branch
          %427 = sbr.rel (%p425) target = $region64
        $region63: #{_lambda_.5} parent=55 // pred_region
          %429 = dma.done %s421, 128
        $region64: #{_lambda_.5} parent=55 // pred_fallthru
          _
        // Predicated region
        $region65: #{_lambda_.5} parent=55 // pred_check
          %p430 = pneg %p124
        $region66: #{_lambda_.5} parent=55 // pred_check_branch
          %432 = sbr.rel (%p430) target = $region68
        $region67: #{_lambda_.5} parent=55 // pred_region
          %434 = dma.done [#allocation5], 512
        $region68: #{_lambda_.5} parent=55 // pred_fallthru
          _
        // Predicated region
        $region69: #{_lambda_.5} parent=55 // pred_check
          %p435 = pneg %p187
        $region70: #{_lambda_.5} parent=55 // pred_check_branch
          %437 = sbr.rel (%p435) target = $region72
        $region71: #{_lambda_.5} parent=55 // pred_region
          %439 = dma.done [#allocation8], 16
        $region72: #{_lambda_.5} parent=55 // pred_fallthru
          _
        // Predicated region
        $region73: #{_lambda_.5} parent=55 // pred_check
          %p440 = pneg %p208
        $region74: #{_lambda_.5} parent=55 // pred_check_branch
          %442 = sbr.rel (%p440) target = $region76
        $region75: #{_lambda_.5} parent=55 // pred_region
          %444 = dma.done [#allocation8], 512
        $region76: #{_lambda_.5} parent=55 // pred_fallthru
          _
        // Predicated region
        $region77: #{_lambda_.5} parent=55 // pred_check
          %p445 = pneg %p229
        $region78: #{_lambda_.5} parent=55 // pred_check_branch
          %447 = sbr.rel (%p445) target = $region80
        $region79: #{_lambda_.5} parent=55 // pred_region
          %449 = dma.done [#allocation11], 16
        $region80: #{_lambda_.5} parent=55 // pred_fallthru
          _
        %p450 = scmp.lt.s32.totalorder %s30, 1
        %s451 = scalar_select %p450, %s30, 1
        %s452 = smul.addr %s451, 8
        %s453 = scalar_lea.vmem %s0, %s452
        %p454 = pneg %p51
        %p455 = pneg %p48
        %s456 = sand.u32 %s64, 1
        %s457 = scalar_lea.sflag [#allocation3], %s456
        %s458 = sand.u32 %s64, 1
        %s459 = smul.addr %s458, 8
        %s460 = scalar_lea.vmem [#allocation2], %s459
        %p461 = pneg %p77
        %p462 = pneg %p74
        %s463 = sand.u32 %s30, 1
        %s464 = scalar_lea.sflag [#allocation5], %s463
        %s465 = sand.u32 %s90, 1
        %s466 = smul.addr %s465, 8
        %s467 = scalar_lea.vmem [#allocation4], %s466
        %p468 = pneg %p103
        %p469 = pneg %p100
        %p470 = pneg %p124
        %p471 = pneg %p121
        %p472 = pneg %p145
        %p473 = pneg %p142
        %p474 = pneg %p166
        %p475 = pneg %p163
        %p476 = pneg %p187
        %p477 = pneg %p184
        %p478 = pneg %p208
        %p479 = pneg %p205
        %p480 = pneg %p229
        %p481 = pneg %p226
        %p482 = pneg %p255
        %p483 = pneg %p252
        %p484 = scmp.lt.s32.totalorder %s30, 1
        %s485 = scalar_select %p484, %s30, 1
        %s486 = smul.addr %s485, 8
        %s487 = scalar_lea.vmem %s9, %s486
        %p488 = pneg %p281
        %p489 = pneg %p278
        %p490 = scmp.lt.s32.totalorder %s30, 1
        %s491 = scalar_select %p490, %s30, 1
        %s492 = smul.addr %s491, 8
        %s493 = scalar_lea.vmem %s10, %s492
        %p494 = scmp.lt.s32.totalorder %s30, 1
        %s495 = scalar_select %p494, %s30, 1
        %s496 = smul.addr %s495, 8
        %s497 = scalar_lea.vmem %s0, %s496
        %p498 = scmp.lt.s32.totalorder %s30, 1
        %s499 = scalar_select %p498, %s30, 1
        %s500 = smul.addr %s499, 8
        %s501 = scalar_lea.vmem %s9, %s500
        %p502 = scmp.lt.s32.totalorder %s30, 1
        %s503 = scalar_select %p502, %s30, 1
        %s504 = smul.addr %s503, 8
        %s505 = scalar_lea.vmem %s10, %s504
        %v506 = vld [vmem:[%s497] sm:$0xff]
        %v507 = vld [vmem:[%s414] sm:$0xff]
        %509 = vrot.lane.b32.xlu0 %v506, 96
        %v510 = vpop.permute.xlu0 %509
        %vm511 = vcmask 64512
        %v512 = vsel %vm511, %v506, 0
        %v514 = vsel %vm511, %v510, 0
        %516 = vmatpush.xpose.msra.mxu0 0.0
        %517 = vmatpush.xpose.msra.mxu0 0.0
        %518 = vmatpush.xpose.msra.mxu0 0.0
        %519 = vmatpush.xpose.msra.mxu0 0.0
        %520 = vmatpush.xpose.msra.mxu0 0.0
        %521 = vmatpush.xpose.msra.mxu0 0.0
        %522 = vmatpush.xpose.msra.mxu0 0.0
        %523 = vmatpush.xpose.msra.mxu0 0.0
        %524 = vmatpush.xpose.msra.mxu0 0.0
        %525 = vmatpush.xpose.msra.mxu0 0.0
        %526 = vmatpush.xpose.msra.mxu0 0.0
        %527 = vmatpush.xpose.msra.mxu0 0.0
        %528 = vmatpush.xpose.msra.mxu0 0.0
        %529 = vmatpush.xpose.msra.mxu0 0.0
        %530 = vmatpush.xpose.msra.mxu0 0.0
        %531 = vmatpush.xpose.msra.mxu0 %v514
        %532 = vmatmul.f32.gmra.mxu0 %v512
        %v533 = vpop.f32.mrf.mxu0
        %v534 = vadd.f32 0.0, %v533
        %535 = vdwg.mxu0
        %v536 = vmul.f32 %v534, 0.35355338
        %vm537 = vcmp.gt.f32.partialorder %v507, 0.0
        %v538 = vsel %vm537, %v536, -1e+09
        %v539 = vsel %vm511, %v538, -inf
        %540 = vmax.xlane.f32.xlu0 %v539
        %v541 = vpop.xlane.xlu0 %540
        %v542 = vsub.f32 %v538, %v541
        %v543 = vmul.f32 %v542, 1.442695
        %v544 = vpow.pop %v543
        %v545 = vsel %vm511, %v544, 0.0
        %546 = vadd.xlane.f32.xlu0 %v545
        %v547 = vpop.xlane.xlu0 %546
        %v548 = vrcp.pop %v547
        %v549 = vmul.f32 %v544, %v548
        %550 = vrot.lane.b32.xlu0 %v506, 64
        %v551 = vpop.permute.xlu0 %550
        %v554 = vsel %vm511, %v549, 0
        %556 = vmatpush.msra.mxu0 0.0
        %557 = vmatpush.msra.mxu0 0.0
        %558 = vmatpush.msra.mxu0 0.0
        %559 = vmatpush.msra.mxu0 0.0
        %560 = vmatpush.msra.mxu0 0.0
        %561 = vmatpush.msra.mxu0 0.0
        %562 = vmatpush.msra.mxu0 0.0
        %563 = vmatpush.msra.mxu0 0.0
        %564 = vmatpush.msra.mxu0 0.0
        %565 = vmatpush.msra.mxu0 0.0
        %566 = vmatpush.msra.mxu0 0.0
        %567 = vmatpush.msra.mxu0 0.0
        %568 = vmatpush.msra.mxu0 0.0
        %569 = vmatpush.msra.mxu0 0.0
        %570 = vmatpush.msra.mxu0 0.0
        %571 = vmatpush.msra.mxu0 %v551
        %572 = vmatmul.f32.gmra.mxu0 %v554
        %v573 = vpop.f32.mrf.mxu0
        %v574 = vadd.f32 0.0, %v573
        %575 = vdwg.mxu0
        %576 = vrot.lane.b32.xlu0 %v506, 120
        %v577 = vpop.permute.xlu0 %576
        %578 = vrot.lane.b32.xlu0 %v506, 88
        %v579 = vpop.permute.xlu0 %578
        %v580 = vsel %vm511, %v577, 0
        %v582 = vsel %vm511, %v579, 0
        %584 = vmatpush.xpose.msra.mxu0 0.0
        %585 = vmatpush.xpose.msra.mxu0 0.0
        %586 = vmatpush.xpose.msra.mxu0 0.0
        %587 = vmatpush.xpose.msra.mxu0 0.0
        %588 = vmatpush.xpose.msra.mxu0 0.0
        %589 = vmatpush.xpose.msra.mxu0 0.0
        %590 = vmatpush.xpose.msra.mxu0 0.0
        %591 = vmatpush.xpose.msra.mxu0 0.0
        %592 = vmatpush.xpose.msra.mxu0 0.0
        %593 = vmatpush.xpose.msra.mxu0 0.0
        %594 = vmatpush.xpose.msra.mxu0 0.0
        %595 = vmatpush.xpose.msra.mxu0 0.0
        %596 = vmatpush.xpose.msra.mxu0 0.0
        %597 = vmatpush.xpose.msra.mxu0 0.0
        %598 = vmatpush.xpose.msra.mxu0 0.0
        %599 = vmatpush.xpose.msra.mxu0 %v582
        %600 = vmatmul.f32.gmra.mxu0 %v580
        %v601 = vpop.f32.mrf.mxu0
        %v602 = vadd.f32 0.0, %v601
        %603 = vdwg.mxu0
        %v604 = vmul.f32 %v602, 0.35355338
        %v605 = vsel %vm537, %v604, -1e+09
        %v606 = vsel %vm511, %v605, -inf
        %607 = vmax.xlane.f32.xlu0 %v606
        %v608 = vpop.xlane.xlu0 %607
        %v609 = vsub.f32 %v605, %v608
        %v610 = vmul.f32 %v609, 1.442695
        %v611 = vpow.pop %v610
        %v612 = vsel %vm511, %v611, 0.0
        %613 = vadd.xlane.f32.xlu0 %v612
        %v614 = vpop.xlane.xlu0 %613
        %v615 = vrcp.pop %v614
        %v616 = vmul.f32 %v611, %v615
        %617 = vrot.lane.b32.xlu0 %v506, 56
        %v618 = vpop.permute.xlu0 %617
        %v621 = vsel %vm511, %v616, 0
        %623 = vmatpush.msra.mxu0 0.0
        %624 = vmatpush.msra.mxu0 0.0
        %625 = vmatpush.msra.mxu0 0.0
        %626 = vmatpush.msra.mxu0 0.0
        %627 = vmatpush.msra.mxu0 0.0
        %628 = vmatpush.msra.mxu0 0.0
        %629 = vmatpush.msra.mxu0 0.0
        %630 = vmatpush.msra.mxu0 0.0
        %631 = vmatpush.msra.mxu0 0.0
        %632 = vmatpush.msra.mxu0 0.0
        %633 = vmatpush.msra.mxu0 0.0
        %634 = vmatpush.msra.mxu0 0.0
        %635 = vmatpush.msra.mxu0 0.0
        %636 = vmatpush.msra.mxu0 0.0
        %637 = vmatpush.msra.mxu0 0.0
        %638 = vmatpush.msra.mxu0 %v618
        %639 = vmatmul.f32.gmra.mxu0 %v621
        %v640 = vpop.f32.mrf.mxu0
        %v641 = vadd.f32 0.0, %v640
        %642 = vdwg.mxu0
        %643 = vrot.lane.b32.xlu0 %v506, 112
        %v644 = vpop.permute.xlu0 %643
        %645 = vrot.lane.b32.xlu0 %v506, 80
        %v646 = vpop.permute.xlu0 %645
        %v647 = vsel %vm511, %v644, 0
        %v649 = vsel %vm511, %v646, 0
        %651 = vmatpush.xpose.msra.mxu0 0.0
        %652 = vmatpush.xpose.msra.mxu0 0.0
        %653 = vmatpush.xpose.msra.mxu0 0.0
        %654 = vmatpush.xpose.msra.mxu0 0.0
        %655 = vmatpush.xpose.msra.mxu0 0.0
        %656 = vmatpush.xpose.msra.mxu0 0.0
        %657 = vmatpush.xpose.msra.mxu0 0.0
        %658 = vmatpush.xpose.msra.mxu0 0.0
        %659 = vmatpush.xpose.msra.mxu0 0.0
        %660 = vmatpush.xpose.msra.mxu0 0.0
        %661 = vmatpush.xpose.msra.mxu0 0.0
        %662 = vmatpush.xpose.msra.mxu0 0.0
        %663 = vmatpush.xpose.msra.mxu0 0.0
        %664 = vmatpush.xpose.msra.mxu0 0.0
        %665 = vmatpush.xpose.msra.mxu0 0.0
        %666 = vmatpush.xpose.msra.mxu0 %v649
        %667 = vmatmul.f32.gmra.mxu0 %v647
        %v668 = vpop.f32.mrf.mxu0
        %v669 = vadd.f32 0.0, %v668
        %670 = vdwg.mxu0
        %v671 = vmul.f32 %v669, 0.35355338
        %v672 = vsel %vm537, %v671, -1e+09
        %v673 = vsel %vm511, %v672, -inf
        %674 = vmax.xlane.f32.xlu0 %v673
        %v675 = vpop.xlane.xlu0 %674
        %v676 = vsub.f32 %v672, %v675
        %v677 = vmul.f32 %v676, 1.442695
        %v678 = vpow.pop %v677
        %v679 = vsel %vm511, %v678, 0.0
        %680 = vadd.xlane.f32.xlu0 %v679
        %v681 = vpop.xlane.xlu0 %680
        %v682 = vrcp.pop %v681
        %v683 = vmul.f32 %v678, %v682
        %684 = vrot.lane.b32.xlu0 %v506, 48
        %v685 = vpop.permute.xlu0 %684
        %v688 = vsel %vm511, %v683, 0
        %690 = vmatpush.msra.mxu0 0.0
        %691 = vmatpush.msra.mxu0 0.0
        %692 = vmatpush.msra.mxu0 0.0
        %693 = vmatpush.msra.mxu0 0.0
        %694 = vmatpush.msra.mxu0 0.0
        %695 = vmatpush.msra.mxu0 0.0
        %696 = vmatpush.msra.mxu0 0.0
        %697 = vmatpush.msra.mxu0 0.0
        %698 = vmatpush.msra.mxu0 0.0
        %699 = vmatpush.msra.mxu0 0.0
        %700 = vmatpush.msra.mxu0 0.0
        %701 = vmatpush.msra.mxu0 0.0
        %702 = vmatpush.msra.mxu0 0.0
        %703 = vmatpush.msra.mxu0 0.0
        %704 = vmatpush.msra.mxu0 0.0
        %705 = vmatpush.msra.mxu0 %v685
        %706 = vmatmul.f32.gmra.mxu0 %v688
        %v707 = vpop.f32.mrf.mxu0
        %v708 = vadd.f32 0.0, %v707
        %709 = vdwg.mxu0
        %710 = vrot.lane.b32.xlu0 %v506, 104
        %v711 = vpop.permute.xlu0 %710
        %712 = vrot.lane.b32.xlu0 %v506, 72
        %v713 = vpop.permute.xlu0 %712
        %v714 = vsel %vm511, %v711, 0
        %v716 = vsel %vm511, %v713, 0
        %718 = vmatpush.xpose.msra.mxu0 0.0
        %719 = vmatpush.xpose.msra.mxu0 0.0
        %720 = vmatpush.xpose.msra.mxu0 0.0
        %721 = vmatpush.xpose.msra.mxu0 0.0
        %722 = vmatpush.xpose.msra.mxu0 0.0
        %723 = vmatpush.xpose.msra.mxu0 0.0
        %724 = vmatpush.xpose.msra.mxu0 0.0
        %725 = vmatpush.xpose.msra.mxu0 0.0
        %726 = vmatpush.xpose.msra.mxu0 0.0
        %727 = vmatpush.xpose.msra.mxu0 0.0
        %728 = vmatpush.xpose.msra.mxu0 0.0
        %729 = vmatpush.xpose.msra.mxu0 0.0
        %730 = vmatpush.xpose.msra.mxu0 0.0
        %731 = vmatpush.xpose.msra.mxu0 0.0
        %732 = vmatpush.xpose.msra.mxu0 0.0
        %733 = vmatpush.xpose.msra.mxu0 %v716
        %734 = vmatmul.f32.gmra.mxu0 %v714
        %v735 = vpop.f32.mrf.mxu0
        %v736 = vadd.f32 0.0, %v735
        %737 = vdwg.mxu0
        %v738 = vmul.f32 %v736, 0.35355338
        %v739 = vsel %vm537, %v738, -1e+09
        %v740 = vsel %vm511, %v739, -inf
        %741 = vmax.xlane.f32.xlu0 %v740
        %v742 = vpop.xlane.xlu0 %741
        %v743 = vsub.f32 %v739, %v742
        %v744 = vmul.f32 %v743, 1.442695
        %v745 = vpow.pop %v744
        %v746 = vsel %vm511, %v745, 0.0
        %747 = vadd.xlane.f32.xlu0 %v746
        %v748 = vpop.xlane.xlu0 %747
        %v749 = vrcp.pop %v748
        %v750 = vmul.f32 %v745, %v749
        %751 = vrot.lane.b32.xlu0 %v506, 40
        %v752 = vpop.permute.xlu0 %751
        %v755 = vsel %vm511, %v750, 0
        %757 = vmatpush.msra.mxu0 0.0
        %758 = vmatpush.msra.mxu0 0.0
        %759 = vmatpush.msra.mxu0 0.0
        %760 = vmatpush.msra.mxu0 0.0
        %761 = vmatpush.msra.mxu0 0.0
        %762 = vmatpush.msra.mxu0 0.0
        %763 = vmatpush.msra.mxu0 0.0
        %764 = vmatpush.msra.mxu0 0.0
        %765 = vmatpush.msra.mxu0 0.0
        %766 = vmatpush.msra.mxu0 0.0
        %767 = vmatpush.msra.mxu0 0.0
        %768 = vmatpush.msra.mxu0 0.0
        %769 = vmatpush.msra.mxu0 0.0
        %770 = vmatpush.msra.mxu0 0.0
        %771 = vmatpush.msra.mxu0 0.0
        %772 = vmatpush.msra.mxu0 %v752
        %773 = vmatmul.f32.gmra.mxu0 %v755
        %v774 = vpop.f32.mrf.mxu0
        %v775 = vadd.f32 0.0, %v774
        %776 = vdwg.mxu0
        %778 = vrot.lane.b32.xlu0 %v641, 8
        %v779 = vpop.permute.xlu0 %778
        %782 = vrot.lane.b32.xlu0 %v708, 16
        %v783 = vpop.permute.xlu0 %782
        %786 = vrot.lane.b32.xlu0 %v775, 24
        %v787 = vpop.permute.xlu0 %786
        %v789 = vsel %vm511, %v574, %v779
        %vm790 = vcmask 130048
        %v791 = vsel %vm790, %v789, %v783
        %vm792 = vcmask 195584
        %v793 = vsel %vm792, %v791, %v787
        %v794 = vld [vmem:[#allocation6] sm:$0xff]
        %v795 = vld [vmem:[#allocation6 + $0x8] sm:$0xff]
        %v796 = vld [vmem:[#allocation6 + $0x10] sm:$0xff]
        %v797 = vld [vmem:[#allocation6 + $0x18] sm:$0xff]
        %v798 = vld [vmem:[%s4] sm:$0x1]
        %v800 = vperm.slane %v798, 0
        %vm802 = vcmask 261120
        %v804 = vsel %vm802, %v793, 0
        %806 = vmatpush.msra.mxu0 0.0
        %807 = vmatpush.msra.mxu0 0.0
        %808 = vmatpush.msra.mxu0 0.0
        %809 = vmatpush.msra.mxu0 0.0
        %810 = vmatpush.msra.mxu0 0.0
        %811 = vmatpush.msra.mxu0 0.0
        %812 = vmatpush.msra.mxu0 0.0
        %813 = vmatpush.msra.mxu0 0.0
        %814 = vmatpush.msra.mxu0 0.0
        %815 = vmatpush.msra.mxu0 0.0
        %816 = vmatpush.msra.mxu0 0.0
        %817 = vmatpush.msra.mxu0 0.0
        %818 = vmatpush.msra.mxu0 %v797
        %819 = vmatpush.msra.mxu0 %v796
        %820 = vmatpush.msra.mxu0 %v795
        %821 = vmatpush.msra.mxu0 %v794
        %822 = vmatmul.f32.gmra.mxu0 %v804
        %v823 = vpop.f32.mrf.mxu0
        %v824 = vadd.f32 %v800, %v823
        %825 = vdwg.mxu0
        %v826 = vld [vmem:[%s424] sm:$0xff]
        %v827 = vadd.f32 %v824, %v826
        %v828 = vld [vmem:[%s5] sm:$0x1]
        %v829 = vld [vmem:[#allocation7] sm:$0x1]
        %v830 = vsel %vm802, %v827, 0.0
        %831 = vadd.xlane.f32.xlu0 %v830
        %v832 = vpop.xlane.xlu0 %831
        %v833 = vrcp.pop 32.0
        %v834 = vmul.f32 32.0, %v833
        %v835 = vsub.f32 1.0, %v834
        %v836 = vmul.f32 %v833, %v835
        %v837 = vadd.f32 %v833, %v836
        %vm838 = vweird.f32 %v833
        %v839 = vsel %vm838, %v833, %v837
        %v840 = vmul.f32 %v832, %v839
        %v841 = vsub.f32 %v827, %v840
        %v842 = vmul.f32 %v841, %v841
        %v843 = vsel %vm802, %v842, 0.0
        %844 = vadd.xlane.f32.xlu0 %v843
        %v845 = vpop.xlane.xlu0 %844
        %v846 = vmul.f32 %v845, %v839
        %v847 = vadd.f32 %v846, 1e-12
        %v848 = vrsqrt.pop %v847
        %v849 = vmul.f32 %v848, %v847
        %v850 = vmul.f32 %v849, %v848
        %v851 = vmul.f32 0.5, %v850
        %v852 = vsub.f32 1.5, %v851
        %v853 = vmul.f32 %v848, %v852
        %vm854 = vweird.f32 %v847
        %vm855 = vweird.f32 %v848
        %vm856 = vmor %vm854, %vm855
        %v857 = vsel %vm856, %v848, %v853
        %v858 = vmul.f32 %v841, %v857
        %v860 = vperm.slane %v828, 0
        %v862 = vmul.f32 %v858, %v860
        %v864 = vperm.slane %v829, 0
        %v866 = vadd.f32 %v862, %v864
        %867 = vst.msk [vmem:[%s501] sm:$0xff] %vm802, %v866
        %v868 = vld [vmem:[#allocation9] sm:$0xff]
        %v869 = vld [vmem:[#allocation9 + $0x8] sm:$0xff]
        %v870 = vld [vmem:[#allocation9 + $0x10] sm:$0xff]
        %v871 = vld [vmem:[#allocation9 + $0x18] sm:$0xff]
        %v872 = vld [vmem:[#allocation10] sm:$0x1]
        %v874 = vperm.slane %v872, 0
        %v877 = vsel %vm802, %v866, 0
        %879 = vmatpush.msra.mxu0 0.0
        %880 = vmatpush.msra.mxu0 0.0
        %881 = vmatpush.msra.mxu0 0.0
        %882 = vmatpush.msra.mxu0 0.0
        %883 = vmatpush.msra.mxu0 0.0
        %884 = vmatpush.msra.mxu0 0.0
        %885 = vmatpush.msra.mxu0 0.0
        %886 = vmatpush.msra.mxu0 0.0
        %887 = vmatpush.msra.mxu0 0.0
        %888 = vmatpush.msra.mxu0 0.0
        %889 = vmatpush.msra.mxu0 0.0
        %890 = vmatpush.msra.mxu0 0.0
        %891 = vmatpush.msra.mxu0 %v871
        %892 = vmatpush.msra.mxu0 %v870
        %893 = vmatpush.msra.mxu0 %v869
        %894 = vmatpush.msra.mxu0 %v868
        %895 = vmatmul.f32.gmra.mxu0 %v877
        %v896 = vpop.f32.mrf.mxu0
        %v897 = vadd.f32 %v874, %v896
        %898 = vdwg.mxu0
        %899 = vst.msk [vmem:[%s505] sm:$0xff] %vm802, %v897
        %p900 = scmp.lt.s32.totalorder %s30, 1
        %s901 = scalar_select %p900, %s30, 1
        %s902 = smul.addr %s901, 8
        %s903 = scalar_lea.vmem %s9, %s902
        %p904 = scmp.lt.s32.totalorder %s30, 1
        %s905 = scalar_select %p904, %s30, 1
        %s906 = smul.addr %s905, 8
        %s907 = scalar_lea.vmem %s10, %s906
        // Predicated region
        $region81: #{_lambda_.5} parent=55 // pred_check
          %p908 = pneg %p252
        $region82: #{_lambda_.5} parent=55 // pred_check_branch
          %910 = sbr.rel (%p908) target = $region84
        $region83: #{_lambda_.5} parent=55 // pred_region
          _
        $region84: #{_lambda_.5} parent=55 // pred_fallthru
          _
        // Predicated region
        $region85: #{_lambda_.5} parent=55 // pred_check
          %p911 = pneg %p278
        $region86: #{_lambda_.5} parent=55 // pred_check_branch
          %913 = sbr.rel (%p911) target = $region88
        $region87: #{_lambda_.5} parent=55 // pred_region
          _
        $region88: #{_lambda_.5} parent=55 // pred_fallthru
          _
      $region56: #{_lambda_.5} parent=5 // pred_fallthru
        _
      %p914 = scmp.le.s32.totalorder 2, %s25
      // Predicated region
      $region89: #{_lambda_.5} parent=5 // pred_check
        %p915 = pneg %p914
      $region90: #{_lambda_.5} parent=5 // pred_check_branch
        %917 = sbr.rel (%p915) target = $region92
      $region91: #{_lambda_.5} parent=5 // pred_region
        %s918 = ssub.s32 %s25, 2
        // Predicated region
        $region93: #{_lambda_.5} parent=91 // pred_check
          %p919 = pneg %p258
        $region94: #{_lambda_.5} parent=91 // pred_check_branch
          %921 = sbr.rel (%p919) target = $region96
        $region95: #{_lambda_.5} parent=91 // pred_region
          %p922 = scmp.lt.s32.totalorder %s31, 1
          %s923 = scalar_select %p922, %s31, 1
          %s924 = smul.addr %s923, 8
          %s925 = scalar_lea.vmem %s9, %s924
        $region96: #{_lambda_.5} parent=91 // pred_fallthru
          _
        // Predicated region
        $region97: #{_lambda_.5} parent=91 // pred_check
          %p926 = pneg %p284
        $region98: #{_lambda_.5} parent=91 // pred_check_branch
          %928 = sbr.rel (%p926) target = $region100
        $region99: #{_lambda_.5} parent=91 // pred_region
          %p929 = scmp.lt.s32.totalorder %s31, 1
          %s930 = scalar_select %p929, %s31, 1
          %s931 = smul.addr %s930, 8
          %s932 = scalar_lea.vmem %s10, %s931
        $region100: #{_lambda_.5} parent=91 // pred_fallthru
          _
      $region92: #{_lambda_.5} parent=5 // pred_fallthru
        _
    $region6: #{_lambda_.5} parent=1 // loop_footer
      %s29 = sadd.s32 1, %s25
    $region7: #{_lambda_.5} parent=1 // loop_footer_branch
      %24 = sbr.rel target = $region3
    $region8: #{_lambda_.5} parent=1 // loop_exit
      _
    %933 = vsyncpa [#allocation3], 1
    %s934 = scalar_lea.sflag [#allocation3], 1
    %935 = vsyncpa %s934, 1
    %936 = vsyncpa [#allocation5], 1
    %s937 = scalar_lea.sflag [#allocation5], 1
    %938 = vsyncpa %s937, 1
    %939 = vsyncpa [#allocation8], 1
    %940 = vsyncpa [#allocation11], 1

// kernel: _lambda_.7
$region0: #{_lambda_.7}
  #allocation0 [shape = 'u32[]', space=smem, size = 0x4, offset = 0x4, fixed_abs, tag = 'smem constant byte address 0x4 - core index']
  #allocation1 [shape = 'u32[72,128]{1,0:T(1,128)}', space=vmem, size = 0x9000, scoped, tag = 'internal scratch']
  %s0 = inlined_call_operand.vmem [shape: f32[2,8,32], index: 0, kind: input, shape index: {}]
  %s1 = inlined_call_operand.vmem [shape: f32[2,8,64], index: 1, kind: input, shape index: {}]
  %s2 = inlined_call_operand.vmem [shape: f32[2,1,8,8], index: 2, kind: input, shape index: {}]
  %s3 = inlined_call_operand.vmem [shape: f32[2,8,32], index: 3, kind: input, shape index: {}]
  %s4 = inlined_call_operand.vmem [shape: f32[32,32], index: 4, kind: input, shape index: {}]
  %s5 = inlined_call_operand.vmem [shape: f32[1,32], index: 5, kind: input, shape index: {}]
  %s6 = inlined_call_operand.vmem [shape: f32[1,32], index: 6, kind: input, shape index: {}]
  %s7 = inlined_call_operand.vmem [shape: f32[1,32], index: 7, kind: input, shape index: {}]
  %s8 = inlined_call_operand.vmem [shape: f32[32,64], index: 8, kind: input, shape index: {}]
  %s9 = inlined_call_operand.vmem [shape: f32[1,64], index: 9, kind: input, shape index: {}]
  %s10 = inlined_call_operand.vmem [shape: f32[64,32], index: 10, kind: input, shape index: {}]
  %s11 = inlined_call_operand.vmem [shape: f32[1,32], index: 11, kind: input, shape index: {}]
  %s12 = inlined_call_operand.vmem [shape: f32[1,32], index: 12, kind: input, shape index: {}]
  %s13 = inlined_call_operand.vmem [shape: f32[1,32], index: 13, kind: input, shape index: {}]
  %s14 = inlined_call_operand.hbm [shape: f32[2,8,32], index: 14, kind: output, shape index: {}]
  %s15 = sld [smem:[#allocation0]]
  $region89: #{_lambda_.7} parent=0
    _
  %s17 = ssub.s32 1, %s15
  %s18 = scalar_select 0, %s17, %s15
  $region1: #{_lambda_.7} parent=0
    #allocation2 [shape = 'u8[8192]{0}', space=vmem, size = 0x2000, scoped, tag = 'output window, operand 0']
    #allocation3 [shape = 's32[2]{0}', space=sflag, size = 0x8, scoped, tag = 'scoped memory for _lambda_.7']
    %19 = vsyncpa [#allocation3], 0
    %s20 = scalar_lea.sflag [#allocation3], 1
    %21 = vsyncpa %s20, 0
    loop: start=0, step=1, limit=4
    $region2: #{_lambda_.7} parent=1 // loop_pre_header
      _
    $region3: #{_lambda_.7} parent=1 // loop_header
      %s23 = sphi 0, %s27
      %p24 = scmp.ge.s32.totalorder %s23, 4
      %s33 = sphi 0, %s35
      %s36 = sphi 0, %s33
      %s37 = sphi 0, %s36
      %s53 = sphi 0, %s37
      %s59 = sphi 0, %s61
      %s62 = sphi 0, %s59
      %s63 = sphi 0, %s62
      %s79 = sphi 0, %s63
      %s85 = sphi 0, %s87
      %s88 = sphi 0, %s85
      %s89 = sphi 0, %s88
      %s105 = sphi 0, %s89
      %s111 = sphi 0, %s113
      %s114 = sphi 0, %s111
      %s115 = sphi 0, %s114
      %s131 = sphi 0, %s115
      %s135 = sphi 0, %s135
      %s137 = sphi 0, %s135
      %s138 = sphi 0, %s137
      %s152 = sphi 0, %s138
      %s156 = sphi 0, %s156
      %s158 = sphi 0, %s156
      %s159 = sphi 0, %s158
      %s173 = sphi 0, %s159
      %s177 = sphi 0, %s177
      %s179 = sphi 0, %s177
      %s180 = sphi 0, %s179
      %s194 = sphi 0, %s180
      %s198 = sphi 0, %s198
      %s200 = sphi 0, %s198
      %s201 = sphi 0, %s200
      %s215 = sphi 0, %s201
      %s219 = sphi 0, %s219
      %s221 = sphi 0, %s219
      %s222 = sphi 0, %s221
      %s236 = sphi 0, %s222
      %s240 = sphi 0, %s240
      %s242 = sphi 0, %s240
      %s243 = sphi 0, %s242
      %s257 = sphi 0, %s243
      %s261 = sphi 0, %s261
      %s263 = sphi 0, %s261
      %s264 = sphi 0, %s263
      %s278 = sphi 0, %s264
      %s282 = sphi 0, %s282
      %s284 = sphi 0, %s282
      %s285 = sphi 0, %s284
      %s299 = sphi 0, %s285
      %s303 = sphi 0, %s303
      %s305 = sphi 0, %s303
      %s306 = sphi 0, %s305
      %s320 = sphi 0, %s306
      %s324 = sphi 0, %s324
      %s326 = sphi 0, %s324
      %s327 = sphi 0, %s326
      %s341 = sphi 0, %s327
      %s347 = sphi 0, %s349
      %s350 = sphi 0, %s347
      %s351 = sphi 0, %s350
      %s367 = sphi 0, %s351
    $region4: #{_lambda_.7} parent=1 // loop_header_branch
      %26 = sbr.rel (%p24) target = $region8
    $region5: #{_lambda_.7} parent=1 // loop_body
      %s28 = ssub.s32 %s23, 1
      %s29 = ssub.s32 %s23, 2
      %s30 = sadd.s32 %s23, 1
      %s31 = ssub.s32 %s23, %s30
      %p32 = scmp.eq.s32.totalorder %s31, 0
      %s34 = sadd.s32 %s33, 1
      %s35 = scalar_select %p32, %s33, %s34
      %p38 = pneg %p32
      %p39 = scmp.eq.s32.totalorder %s23, 1
      %p40 = por %p38, %p39
      %p41 = scmp.ne.s32.totalorder %s33, %s36
      %p42 = scmp.eq.s32.totalorder %s23, 0
      %p43 = por %p41, %p42
      %p44 = scmp.ne.s32.totalorder %s33, %s36
      %p45 = scmp.eq.s32.totalorder %s28, 1
      %p46 = por %p44, %p45
      %p47 = scmp.ne.s32.totalorder %s36, %s37
      %p48 = scmp.eq.s32.totalorder %s28, 0
      %p49 = por %p47, %p48
      %p50 = scmp.ne.s32.totalorder %s36, %s37
      %p51 = scmp.eq.s32.totalorder %s29, 1
      %p52 = por %p50, %p51
      %p54 = scmp.ne.s32.totalorder %s37, %s53
      %p55 = scmp.eq.s32.totalorder %s29, 0
      %p56 = por %p54, %p55
      %s57 = ssub.s32 %s23, %s30
      %p58 = scmp.eq.s32.totalorder %s57, 0
      %s60 = sadd.s32 %s59, 1
      %s61 = scalar_select %p58, %s59, %s60
      %p64 = pneg %p58
      %p65 = scmp.eq.s32.totalorder %s23, 1
      %p66 = por %p64, %p65
      %p67 = scmp.ne.s32.totalorder %s59, %s62
      %p68 = scmp.eq.s32.totalorder %s23, 0
      %p69 = por %p67, %p68
      %p70 = scmp.ne.s32.totalorder %s59, %s62
      %p71 = scmp.eq.s32.totalorder %s28, 1
      %p72 = por %p70, %p71
      %p73 = scmp.ne.s32.totalorder %s62, %s63
      %p74 = scmp.eq.s32.totalorder %s28, 0
      %p75 = por %p73, %p74
      %p76 = scmp.ne.s32.totalorder %s62, %s63
      %p77 = scmp.eq.s32.totalorder %s29, 1
      %p78 = por %p76, %p77
      %p80 = scmp.ne.s32.totalorder %s63, %s79
      %p81 = scmp.eq.s32.totalorder %s29, 0
      %p82 = por %p80, %p81
      %s83 = ssub.s32 %s23, %s30
      %p84 = scmp.eq.s32.totalorder %s83, 0
      %s86 = sadd.s32 %s85, 1
      %s87 = scalar_select %p84, %s85, %s86
      %p90 = pneg %p84
      %p91 = scmp.eq.s32.totalorder %s23, 1
      %p92 = por %p90, %p91
      %p93 = scmp.ne.s32.totalorder %s85, %s88
      %p94 = scmp.eq.s32.totalorder %s23, 0
      %p95 = por %p93, %p94
      %p96 = scmp.ne.s32.totalorder %s85, %s88
      %p97 = scmp.eq.s32.totalorder %s28, 1
      %p98 = por %p96, %p97
      %p99 = scmp.ne.s32.totalorder %s88, %s89
      %p100 = scmp.eq.s32.totalorder %s28, 0
      %p101 = por %p99, %p100
      %p102 = scmp.ne.s32.totalorder %s88, %s89
      %p103 = scmp.eq.s32.totalorder %s29, 1
      %p104 = por %p102, %p103
      %p106 = scmp.ne.s32.totalorder %s89, %s105
      %p107 = scmp.eq.s32.totalorder %s29, 0
      %p108 = por %p106, %p107
      %s109 = ssub.s32 %s23, %s30
      %p110 = scmp.eq.s32.totalorder %s109, 0
      %s112 = sadd.s32 %s111, 1
      %s113 = scalar_select %p110, %s111, %s112
      %p116 = pneg %p110
      %p117 = scmp.eq.s32.totalorder %s23, 1
      %p118 = por %p116, %p117
      %p119 = scmp.ne.s32.totalorder %s111, %s114
      %p120 = scmp.eq.s32.totalorder %s23, 0
      %p121 = por %p119, %p120
      %p122 = scmp.ne.s32.totalorder %s111, %s114
      %p123 = scmp.eq.s32.totalorder %s28, 1
      %p124 = por %p122, %p123
      %p125 = scmp.ne.s32.totalorder %s114, %s115
      %p126 = scmp.eq.s32.totalorder %s28, 0
      %p127 = por %p125, %p126
      %p128 = scmp.ne.s32.totalorder %s114, %s115
      %p129 = scmp.eq.s32.totalorder %s29, 1
      %p130 = por %p128, %p129
      %p132 = scmp.ne.s32.totalorder %s115, %s131
      %p133 = scmp.eq.s32.totalorder %s29, 0
      %p134 = por %p132, %p133
      %s136 = sadd.s32 %s135, 1
      %p139 = scmp.eq.s32.totalorder %s23, 1
      %p140 = scmp.ne.s32.totalorder %s135, %s137
      %p141 = scmp.eq.s32.totalorder %s23, 0
      %p142 = por %p140, %p141
      %p143 = scmp.ne.s32.totalorder %s135, %s137
      %p144 = scmp.eq.s32.totalorder %s28, 1
      %p145 = por %p143, %p144
      %p146 = scmp.ne.s32.totalorder %s137, %s138
      %p147 = scmp.eq.s32.totalorder %s28, 0
      %p148 = por %p146, %p147
      %p149 = scmp.ne.s32.totalorder %s137, %s138
      %p150 = scmp.eq.s32.totalorder %s29, 1
      %p151 = por %p149, %p150
      %p153 = scmp.ne.s32.totalorder %s138, %s152
      %p154 = scmp.eq.s32.totalorder %s29, 0
      %p155 = por %p153, %p154
      %s157 = sadd.s32 %s156, 1
      %p160 = scmp.eq.s32.totalorder %s23, 1
      %p161 = scmp.ne.s32.totalorder %s156, %s158
      %p162 = scmp.eq.s32.totalorder %s23, 0
      %p163 = por %p161, %p162
      %p164 = scmp.ne.s32.totalorder %s156, %s158
      %p165 = scmp.eq.s32.totalorder %s28, 1
      %p166 = por %p164, %p165
      %p167 = scmp.ne.s32.totalorder %s158, %s159
      %p168 = scmp.eq.s32.totalorder %s28, 0
      %p169 = por %p167, %p168
      %p170 = scmp.ne.s32.totalorder %s158, %s159
      %p171 = scmp.eq.s32.totalorder %s29, 1
      %p172 = por %p170, %p171
      %p174 = scmp.ne.s32.totalorder %s159, %s173
      %p175 = scmp.eq.s32.totalorder %s29, 0
      %p176 = por %p174, %p175
      %s178 = sadd.s32 %s177, 1
      %p181 = scmp.eq.s32.totalorder %s23, 1
      %p182 = scmp.ne.s32.totalorder %s177, %s179
      %p183 = scmp.eq.s32.totalorder %s23, 0
      %p184 = por %p182, %p183
      %p185 = scmp.ne.s32.totalorder %s177, %s179
      %p186 = scmp.eq.s32.totalorder %s28, 1
      %p187 = por %p185, %p186
      %p188 = scmp.ne.s32.totalorder %s179, %s180
      %p189 = scmp.eq.s32.totalorder %s28, 0
      %p190 = por %p188, %p189
      %p191 = scmp.ne.s32.totalorder %s179, %s180
      %p192 = scmp.eq.s32.totalorder %s29, 1
      %p193 = por %p191, %p192
      %p195 = scmp.ne.s32.totalorder %s180, %s194
      %p196 = scmp.eq.s32.totalorder %s29, 0
      %p197 = por %p195, %p196
      %s199 = sadd.s32 %s198, 1
      %p202 = scmp.eq.s32.totalorder %s23, 1
      %p203 = scmp.ne.s32.totalorder %s198, %s200
      %p204 = scmp.eq.s32.totalorder %s23, 0
      %p205 = por %p203, %p204
      %p206 = scmp.ne.s32.totalorder %s198, %s200
      %p207 = scmp.eq.s32.totalorder %s28, 1
      %p208 = por %p206, %p207
      %p209 = scmp.ne.s32.totalorder %s200, %s201
      %p210 = scmp.eq.s32.totalorder %s28, 0
      %p211 = por %p209, %p210
      %p212 = scmp.ne.s32.totalorder %s200, %s201
      %p213 = scmp.eq.s32.totalorder %s29, 1
      %p214 = por %p212, %p213
      %p216 = scmp.ne.s32.totalorder %s201, %s215
      %p217 = scmp.eq.s32.totalorder %s29, 0
      %p218 = por %p216, %p217
      %s220 = sadd.s32 %s219, 1
      %p223 = scmp.eq.s32.totalorder %s23, 1
      %p224 = scmp.ne.s32.totalorder %s219, %s221
      %p225 = scmp.eq.s32.totalorder %s23, 0
      %p226 = por %p224, %p225
      %p227 = scmp.ne.s32.totalorder %s219, %s221
      %p228 = scmp.eq.s32.totalorder %s28, 1
      %p229 = por %p227, %p228
      %p230 = scmp.ne.s32.totalorder %s221, %s222
      %p231 = scmp.eq.s32.totalorder %s28, 0
      %p232 = por %p230, %p231
      %p233 = scmp.ne.s32.totalorder %s221, %s222
      %p234 = scmp.eq.s32.totalorder %s29, 1
      %p235 = por %p233, %p234
      %p237 = scmp.ne.s32.totalorder %s222, %s236
      %p238 = scmp.eq.s32.totalorder %s29, 0
      %p239 = por %p237, %p238
      %s241 = sadd.s32 %s240, 1
      %p244 = scmp.eq.s32.totalorder %s23, 1
      %p245 = scmp.ne.s32.totalorder %s240, %s242
      %p246 = scmp.eq.s32.totalorder %s23, 0
      %p247 = por %p245, %p246
      %p248 = scmp.ne.s32.totalorder %s240, %s242
      %p249 = scmp.eq.s32.totalorder %s28, 1
      %p250 = por %p248, %p249
      %p251 = scmp.ne.s32.totalorder %s242, %s243
      %p252 = scmp.eq.s32.totalorder %s28, 0
      %p253 = por %p251, %p252
      %p254 = scmp.ne.s32.totalorder %s242, %s243
      %p255 = scmp.eq.s32.totalorder %s29, 1
      %p256 = por %p254, %p255
      %p258 = scmp.ne.s32.totalorder %s243, %s257
      %p259 = scmp.eq.s32.totalorder %s29, 0
      %p260 = por %p258, %p259
      %s262 = sadd.s32 %s261, 1
      %p265 = scmp.eq.s32.totalorder %s23, 1
      %p266 = scmp.ne.s32.totalorder %s261, %s263
      %p267 = scmp.eq.s32.totalorder %s23, 0
      %p268 = por %p266, %p267
      %p269 = scmp.ne.s32.totalorder %s261, %s263
      %p270 = scmp.eq.s32.totalorder %s28, 1
      %p271 = por %p269, %p270
      %p272 = scmp.ne.s32.totalorder %s263, %s264
      %p273 = scmp.eq.s32.totalorder %s28, 0
      %p274 = por %p272, %p273
      %p275 = scmp.ne.s32.totalorder %s263, %s264
      %p276 = scmp.eq.s32.totalorder %s29, 1
      %p277 = por %p275, %p276
      %p279 = scmp.ne.s32.totalorder %s264, %s278
      %p280 = scmp.eq.s32.totalorder %s29, 0
      %p281 = por %p279, %p280
      %s283 = sadd.s32 %s282, 1
      %p286 = scmp.eq.s32.totalorder %s23, 1
      %p287 = scmp.ne.s32.totalorder %s282, %s284
      %p288 = scmp.eq.s32.totalorder %s23, 0
      %p289 = por %p287, %p288
      %p290 = scmp.ne.s32.totalorder %s282, %s284
      %p291 = scmp.eq.s32.totalorder %s28, 1
      %p292 = por %p290, %p291
      %p293 = scmp.ne.s32.totalorder %s284, %s285
      %p294 = scmp.eq.s32.totalorder %s28, 0
      %p295 = por %p293, %p294
      %p296 = scmp.ne.s32.totalorder %s284, %s285
      %p297 = scmp.eq.s32.totalorder %s29, 1
      %p298 = por %p296, %p297
      %p300 = scmp.ne.s32.totalorder %s285, %s299
      %p301 = scmp.eq.s32.totalorder %s29, 0
      %p302 = por %p300, %p301
      %s304 = sadd.s32 %s303, 1
      %p307 = scmp.eq.s32.totalorder %s23, 1
      %p308 = scmp.ne.s32.totalorder %s303, %s305
      %p309 = scmp.eq.s32.totalorder %s23, 0
      %p310 = por %p308, %p309
      %p311 = scmp.ne.s32.totalorder %s303, %s305
      %p312 = scmp.eq.s32.totalorder %s28, 1
      %p313 = por %p311, %p312
      %p314 = scmp.ne.s32.totalorder %s305, %s306
      %p315 = scmp.eq.s32.totalorder %s28, 0
      %p316 = por %p314, %p315
      %p317 = scmp.ne.s32.totalorder %s305, %s306
      %p318 = scmp.eq.s32.totalorder %s29, 1
      %p319 = por %p317, %p318
      %p321 = scmp.ne.s32.totalorder %s306, %s320
      %p322 = scmp.eq.s32.totalorder %s29, 0
      %p323 = por %p321, %p322
      %s325 = sadd.s32 %s324, 1
      %p328 = scmp.eq.s32.totalorder %s23, 1
      %p329 = scmp.ne.s32.totalorder %s324, %s326
      %p330 = scmp.eq.s32.totalorder %s23, 0
      %p331 = por %p329, %p330
      %p332 = scmp.ne.s32.totalorder %s324, %s326
      %p333 = scmp.eq.s32.totalorder %s28, 1
      %p334 = por %p332, %p333
      %p335 = scmp.ne.s32.totalorder %s326, %s327
      %p336 = scmp.eq.s32.totalorder %s28, 0
      %p337 = por %p335, %p336
      %p338 = scmp.ne.s32.totalorder %s326, %s327
      %p339 = scmp.eq.s32.totalorder %s29, 1
      %p340 = por %p338, %p339
      %p342 = scmp.ne.s32.totalorder %s327, %s341
      %p343 = scmp.eq.s32.totalorder %s29, 0
      %p344 = por %p342, %p343
      %s345 = ssub.s32 %s23, %s30
      %p346 = scmp.eq.s32.totalorder %s345, 0
      %s348 = sadd.s32 %s347, 1
      %s349 = scalar_select %p346, %s347, %s348
      %p352 = pneg %p346
      %p353 = scmp.eq.s32.totalorder %s23, 1
      %p354 = por %p352, %p353
      %p355 = scmp.ne.s32.totalorder %s347, %s350
      %p356 = scmp.eq.s32.totalorder %s23, 0
      %p357 = por %p355, %p356
      %p358 = scmp.ne.s32.totalorder %s347, %s350
      %p359 = scmp.eq.s32.totalorder %s28, 1
      %p360 = por %p358, %p359
      %p361 = scmp.ne.s32.totalorder %s350, %s351
      %p362 = scmp.eq.s32.totalorder %s28, 0
      %p363 = por %p361, %p362
      %p364 = scmp.ne.s32.totalorder %s350, %s351
      %p365 = scmp.eq.s32.totalorder %s29, 1
      %p366 = por %p364, %p365
      %p368 = scmp.ne.s32.totalorder %s351, %s367
      %p369 = scmp.eq.s32.totalorder %s29, 0
      %p370 = por %p368, %p369
      %p371 = scmp.le.s32.totalorder 1, %s23
      %p372 = scmp.lt.s32.totalorder %s23, 3
      %p373 = pnand %p371, %p372
      %p374 = pneg %p373
      // Predicated region
      $region9: #{_lambda_.7} parent=5 // pred_check
        _
      $region10: #{_lambda_.7} parent=5 // pred_check_branch
        %376 = sbr.rel (%p373) target = $region12
      $region11: #{_lambda_.7} parent=5 // pred_region
        %s377 = ssub.s32 %s23, 1
        // Predicated region
        $region13: #{_lambda_.7} parent=11 // pred_check
          %p378 = pneg %p148
        $region14: #{_lambda_.7} parent=11 // pred_check_branch
          %380 = sbr.rel (%p378) target = $region16
        $region15: #{_lambda_.7} parent=11 // pred_region
          _
        $region16: #{_lambda_.7} parent=11 // pred_fallthru
          _
        // Predicated region
        $region17: #{_lambda_.7} parent=11 // pred_check
          %p381 = pneg %p169
        $region18: #{_lambda_.7} parent=11 // pred_check_branch
          %383 = sbr.rel (%p381) target = $region20
        $region19: #{_lambda_.7} parent=11 // pred_region
          _
        $region20: #{_lambda_.7} parent=11 // pred_fallthru
          _
        // Predicated region
        $region21: #{_lambda_.7} parent=11 // pred_check
          %p384 = pneg %p190
        $region22: #{_lambda_.7} parent=11 // pred_check_branch
          %386 = sbr.rel (%p384) target = $region24
        $region23: #{_lambda_.7} parent=11 // pred_region
          _
        $region24: #{_lambda_.7} parent=11 // pred_fallthru
          _
        // Predicated region
        $region25: #{_lambda_.7} parent=11 // pred_check
          %p387 = pneg %p211
        $region26: #{_lambda_.7} parent=11 // pred_check_branch
          %389 = sbr.rel (%p387) target = $region28
        $region27: #{_lambda_.7} parent=11 // pred_region
          _
        $region28: #{_lambda_.7} parent=11 // pred_fallthru
          _
        // Predicated region
        $region29: #{_lambda_.7} parent=11 // pred_check
          %p390 = pneg %p232
        $region30: #{_lambda_.7} parent=11 // pred_check_branch
          %392 = sbr.rel (%p390) target = $region32
        $region31: #{_lambda_.7} parent=11 // pred_region
          _
        $region32: #{_lambda_.7} parent=11 // pred_fallthru
          _
        // Predicated region
        $region33: #{_lambda_.7} parent=11 // pred_check
          %p393 = pneg %p253
        $region34: #{_lambda_.7} parent=11 // pred_check_branch
          %395 = sbr.rel (%p393) target = $region36
        $region35: #{_lambda_.7} parent=11 // pred_region
          _
        $region36: #{_lambda_.7} parent=11 // pred_fallthru
          _
        // Predicated region
        $region37: #{_lambda_.7} parent=11 // pred_check
          %p396 = pneg %p274
        $region38: #{_lambda_.7} parent=11 // pred_check_branch
          %398 = sbr.rel (%p396) target = $region40
        $region39: #{_lambda_.7} parent=11 // pred_region
          _
        $region40: #{_lambda_.7} parent=11 // pred_fallthru
          _
        // Predicated region
        $region41: #{_lambda_.7} parent=11 // pred_check
          %p399 = pneg %p295
        $region42: #{_lambda_.7} parent=11 // pred_check_branch
          %401 = sbr.rel (%p399) target = $region44
        $region43: #{_lambda_.7} parent=11 // pred_region
          _
        $region44: #{_lambda_.7} parent=11 // pred_fallthru
          _
        // Predicated region
        $region45: #{_lambda_.7} parent=11 // pred_check
          %p402 = pneg %p316
        $region46: #{_lambda_.7} parent=11 // pred_check_branch
          %404 = sbr.rel (%p402) target = $region48
        $region47: #{_lambda_.7} parent=11 // pred_region
          _
        $region48: #{_lambda_.7} parent=11 // pred_fallthru
          _
        // Predicated region
        $region49: #{_lambda_.7} parent=11 // pred_check
          %p405 = pneg %p337
        $region50: #{_lambda_.7} parent=11 // pred_check_branch
          %407 = sbr.rel (%p405) target = $region52
        $region51: #{_lambda_.7} parent=11 // pred_region
          _
        $region52: #{_lambda_.7} parent=11 // pred_fallthru
          _
      $region12: #{_lambda_.7} parent=5 // pred_fallthru
        _
      %p408 = scmp.lt.s32.totalorder %s23, 2
      // Predicated region
      $region53: #{_lambda_.7} parent=5 // pred_check
        %p409 = pneg %p408
      $region54: #{_lambda_.7} parent=5 // pred_check_branch
        %411 = sbr.rel (%p409) target = $region56
      $region55: #{_lambda_.7} parent=5 // pred_region
        // Predicated region
        $region57: #{_lambda_.7} parent=55 // pred_check
          %p412 = pneg %p43
        $region58: #{_lambda_.7} parent=55 // pred_check_branch
          %414 = sbr.rel (%p412) target = $region60
        $region59: #{_lambda_.7} parent=55 // pred_region
          %p415 = scmp.lt.s32.totalorder %s23, 1
          %s416 = scalar_select %p415, %s23, 1
          %s417 = smul.addr %s416, 8
          %s418 = scalar_lea.vmem %s0, %s417
        $region60: #{_lambda_.7} parent=55 // pred_fallthru
          _
        // Predicated region
        $region61: #{_lambda_.7} parent=55 // pred_check
          %p419 = pneg %p69
        $region62: #{_lambda_.7} parent=55 // pred_check_branch
          %421 = sbr.rel (%p419) target = $region64
        $region63: #{_lambda_.7} parent=55 // pred_region
          %p422 = scmp.lt.s32.totalorder %s23, 1
          %s423 = scalar_select %p422, %s23, 1
          %s424 = smul.addr %s423, 8
          %s425 = scalar_lea.vmem %s1, %s424
        $region64: #{_lambda_.7} parent=55 // pred_fallthru
          _
        // Predicated region
        $region65: #{_lambda_.7} parent=55 // pred_check
          %p426 = pneg %p95
        $region66: #{_lambda_.7} parent=55 // pred_check_branch
          %428 = sbr.rel (%p426) target = $region68
        $region67: #{_lambda_.7} parent=55 // pred_region
          %p429 = scmp.lt.s32.totalorder %s23, 1
          %s430 = scalar_select %p429, %s23, 1
          %s431 = smul.addr %s430, 8
          %s432 = scalar_lea.vmem %s2, %s431
        $region68: #{_lambda_.7} parent=55 // pred_fallthru
          _
        // Predicated region
        $region69: #{_lambda_.7} parent=55 // pred_check
          %p433 = pneg %p121
        $region70: #{_lambda_.7} parent=55 // pred_check_branch
          %435 = sbr.rel (%p433) target = $region72
        $region71: #{_lambda_.7} parent=55 // pred_region
          %p436 = scmp.lt.s32.totalorder %s23, 1
          %s437 = scalar_select %p436, %s23, 1
          %s438 = smul.addr %s437, 8
          %s439 = scalar_lea.vmem %s3, %s438
        $region72: #{_lambda_.7} parent=55 // pred_fallthru
          _
      $region56: #{_lambda_.7} parent=5 // pred_fallthru
        _
      %p440 = scmp.le.s32.totalorder 1, %s23
      %p441 = scmp.lt.s32.totalorder %s23, 3
      %p442 = pnand %p440, %p441
      %p443 = pneg %p442
      // Predicated region
      $region73: #{_lambda_.7} parent=5 // pred_check
        _
      $region74: #{_lambda_.7} parent=5 // pred_check_branch
        %445 = sbr.rel (%p442) target = $region76
      $region75: #{_lambda_.7} parent=5 // pred_region
        %s446 = ssub.s32 %s23, 1
        %p447 = scmp.lt.s32.totalorder %s28, 1
        %s448 = scalar_select %p447, %s28, 1
        %s449 = smul.addr %s448, 8
        %s450 = scalar_lea.vmem %s0, %s449
        %p451 = pneg %p49
        %p452 = pneg %p46
        %p453 = scmp.lt.s32.totalorder %s28, 1
        %s454 = scalar_select %p453, %s28, 1
        %s455 = smul.addr %s454, 8
        %s456 = scalar_lea.vmem %s1, %s455
        %p457 = pneg %p75
        %p458 = pneg %p72
        %p459 = scmp.lt.s32.totalorder %s28, 1
        %s460 = scalar_select %p459, %s28, 1
        %s461 = smul.addr %s460, 8
        %s462 = scalar_lea.vmem %s2, %s461
        %p463 = pneg %p101
        %p464 = pneg %p98
        %p465 = scmp.lt.s32.totalorder %s28, 1
        %s466 = scalar_select %p465, %s28, 1
        %s467 = smul.addr %s466, 8
        %s468 = scalar_lea.vmem %s3, %s467
        %p469 = pneg %p127
        %p470 = pneg %p124
        %p471 = pneg %p148
        %p472 = pneg %p145
        %p473 = pneg %p169
        %p474 = pneg %p166
        %p475 = pneg %p190
        %p476 = pneg %p187
        %p477 = pneg %p211
        %p478 = pneg %p208
        %p479 = pneg %p232
        %p480 = pneg %p229
        %p481 = pneg %p253
        %p482 = pneg %p250
        %p483 = pneg %p274
        %p484 = pneg %p271
        %p485 = pneg %p295
        %p486 = pneg %p292
        %p487 = pneg %p316
        %p488 = pneg %p313
        %p489 = pneg %p337
        %p490 = pneg %p334
        %p491 = pneg %p363
        %p492 = pneg %p360
        %s493 = sand.u32 %s350, 1
        %s494 = scalar_lea.sflag [#allocation3], %s493
        %s495 = sand.u32 %s350, 1
        %s496 = smul.addr %s495, 8
        %s497 = scalar_lea.vmem [#allocation2], %s496
        %p498 = scmp.lt.s32.totalorder %s28, 1
        %s499 = scalar_select %p498, %s28, 1
        %s500 = smul.addr %s499, 8
        %s501 = scalar_lea.vmem %s0, %s500
        %p502 = scmp.lt.s32.totalorder %s28, 1
        %s503 = scalar_select %p502, %s28, 1
        %s504 = smul.addr %s503, 8
        %s505 = scalar_lea.vmem %s1, %s504
        %p506 = scmp.lt.s32.totalorder %s28, 1
        %s507 = scalar_select %p506, %s28, 1
        %s508 = smul.addr %s507, 8
        %s509 = scalar_lea.vmem %s2, %s508
        %p510 = scmp.lt.s32.totalorder %s28, 1
        %s511 = scalar_select %p510, %s28, 1
        %s512 = smul.addr %s511, 8
        %s513 = scalar_lea.vmem %s3, %s512
        %v514 = vld [vmem:[%s501] sm:$0xff]
        %v515 = vld [vmem:[%s505] sm:$0xff]
        %v516 = vld [vmem:[%s509] sm:$0xff]
        %vm517 = vcmask 64512
        %v519 = vsel %vm517, %v514, 0
        %v522 = vsel %vm517, %v515, 0
        %524 = vmatpush.xpose.msra.mxu0 0.0
        %525 = vmatpush.xpose.msra.mxu0 0.0
        %526 = vmatpush.xpose.msra.mxu0 0.0
        %527 = vmatpush.xpose.msra.mxu0 0.0
        %528 = vmatpush.xpose.msra.mxu0 0.0
        %529 = vmatpush.xpose.msra.mxu0 0.0
        %530 = vmatpush.xpose.msra.mxu0 0.0
        %531 = vmatpush.xpose.msra.mxu0 0.0
        %532 = vmatpush.xpose.msra.mxu0 0.0
        %533 = vmatpush.xpose.msra.mxu0 0.0
        %534 = vmatpush.xpose.msra.mxu0 0.0
        %535 = vmatpush.xpose.msra.mxu0 0.0
        %536 = vmatpush.xpose.msra.mxu0 0.0
        %537 = vmatpush.xpose.msra.mxu0 0.0
        %538 = vmatpush.xpose.msra.mxu0 0.0
        %539 = vmatpush.xpose.msra.mxu0 %v522
        %540 = vmatmul.f32.gmra.mxu0 %v519
        %v541 = vpop.f32.mrf.mxu0
        %v542 = vadd.f32 0.0, %v541
        %543 = vdwg.mxu0
        %v544 = vmul.f32 %v542, 0.35355338
        %vm545 = vcmp.gt.f32.partialorder %v516, 0.0
        %v546 = vsel %vm545, %v544, -1e+09
        %v547 = vsel %vm517, %v546, -inf
        %548 = vmax.xlane.f32.xlu0 %v547
        %v549 = vpop.xlane.xlu0 %548
        %v550 = vsub.f32 %v546, %v549
        %v551 = vmul.f32 %v550, 1.442695
        %v552 = vpow.pop %v551
        %v553 = vsel %vm517, %v552, 0.0
        %554 = vadd.xlane.f32.xlu0 %v553
        %v555 = vpop.xlane.xlu0 %554
        %v556 = vrcp.pop %v555
        %v557 = vmul.f32 %v552, %v556
        %558 = vrot.lane.b32.xlu0 %v515, 96
        %v559 = vpop.permute.xlu0 %558
        %v562 = vsel %vm517, %v557, 0
        %564 = vmatpush.msra.mxu0 0.0
        %565 = vmatpush.msra.mxu0 0.0
        %566 = vmatpush.msra.mxu0 0.0
        %567 = vmatpush.msra.mxu0 0.0
        %568 = vmatpush.msra.mxu0 0.0
        %569 = vmatpush.msra.mxu0 0.0
        %570 = vmatpush.msra.mxu0 0.0
        %571 = vmatpush.msra.mxu0 0.0
        %572 = vmatpush.msra.mxu0 0.0
        %573 = vmatpush.msra.mxu0 0.0
        %574 = vmatpush.msra.mxu0 0.0
        %575 = vmatpush.msra.mxu0 0.0
        %576 = vmatpush.msra.mxu0 0.0
        %577 = vmatpush.msra.mxu0 0.0
        %578 = vmatpush.msra.mxu0 0.0
        %579 = vmatpush.msra.mxu0 %v559
        %580 = vmatmul.f32.gmra.mxu0 %v562
        %v581 = vpop.f32.mrf.mxu0
        %v582 = vadd.f32 0.0, %v581
        %583 = vdwg.mxu0
        %584 = vrot.lane.b32.xlu0 %v514, 120
        %v585 = vpop.permute.xlu0 %584
        %586 = vrot.lane.b32.xlu0 %v515, 120
        %v587 = vpop.permute.xlu0 %586
        %v588 = vsel %vm517, %v585, 0
        %v590 = vsel %vm517, %v587, 0
        %592 = vmatpush.xpose.msra.mxu0 0.0
        %593 = vmatpush.xpose.msra.mxu0 0.0
        %594 = vmatpush.xpose.msra.mxu0 0.0
        %595 = vmatpush.xpose.msra.mxu0 0.0
        %596 = vmatpush.xpose.msra.mxu0 0.0
        %597 = vmatpush.xpose.msra.mxu0 0.0
        %598 = vmatpush.xpose.msra.mxu0 0.0
        %599 = vmatpush.xpose.msra.mxu0 0.0
        %600 = vmatpush.xpose.msra.mxu0 0.0
        %601 = vmatpush.xpose.msra.mxu0 0.0
        %602 = vmatpush.xpose.msra.mxu0 0.0
        %603 = vmatpush.xpose.msra.mxu0 0.0
        %604 = vmatpush.xpose.msra.mxu0 0.0
        %605 = vmatpush.xpose.msra.mxu0 0.0
        %606 = vmatpush.xpose.msra.mxu0 0.0
        %607 = vmatpush.xpose.msra.mxu0 %v590
        %608 = vmatmul.f32.gmra.mxu0 %v588
        %v609 = vpop.f32.mrf.mxu0
        %v610 = vadd.f32 0.0, %v609
        %611 = vdwg.mxu0
        %v612 = vmul.f32 %v610, 0.35355338
        %v613 = vsel %vm545, %v612, -1e+09
        %v614 = vsel %vm517, %v613, -inf
        %615 = vmax.xlane.f32.xlu0 %v614
        %v616 = vpop.xlane.xlu0 %615
        %v617 = vsub.f32 %v613, %v616
        %v618 = vmul.f32 %v617, 1.442695
        %v619 = vpow.pop %v618
        %v620 = vsel %vm517, %v619, 0.0
        %621 = vadd.xlane.f32.xlu0 %v620
        %v622 = vpop.xlane.xlu0 %621
        %v623 = vrcp.pop %v622
        %v624 = vmul.f32 %v619, %v623
        %625 = vrot.lane.b32.xlu0 %v515, 88
        %v626 = vpop.permute.xlu0 %625
        %v629 = vsel %vm517, %v624, 0
        %631 = vmatpush.msra.mxu0 0.0
        %632 = vmatpush.msra.mxu0 0.0
        %633 = vmatpush.msra.mxu0 0.0
        %634 = vmatpush.msra.mxu0 0.0
        %635 = vmatpush.msra.mxu0 0.0
        %636 = vmatpush.msra.mxu0 0.0
        %637 = vmatpush.msra.mxu0 0.0
        %638 = vmatpush.msra.mxu0 0.0
        %639 = vmatpush.msra.mxu0 0.0
        %640 = vmatpush.msra.mxu0 0.0
        %641 = vmatpush.msra.mxu0 0.0
        %642 = vmatpush.msra.mxu0 0.0
        %643 = vmatpush.msra.mxu0 0.0
        %644 = vmatpush.msra.mxu0 0.0
        %645 = vmatpush.msra.mxu0 0.0
        %646 = vmatpush.msra.mxu0 %v626
        %647 = vmatmul.f32.gmra.mxu0 %v629
        %v648 = vpop.f32.mrf.mxu0
        %v649 = vadd.f32 0.0, %v648
        %650 = vdwg.mxu0
        %651 = vrot.lane.b32.xlu0 %v514, 112
        %v652 = vpop.permute.xlu0 %651
        %653 = vrot.lane.b32.xlu0 %v515, 112
        %v654 = vpop.permute.xlu0 %653
        %v655 = vsel %vm517, %v652, 0
        %v657 = vsel %vm517, %v654, 0
        %659 = vmatpush.xpose.msra.mxu0 0.0
        %660 = vmatpush.xpose.msra.mxu0 0.0
        %661 = vmatpush.xpose.msra.mxu0 0.0
        %662 = vmatpush.xpose.msra.mxu0 0.0
        %663 = vmatpush.xpose.msra.mxu0 0.0
        %664 = vmatpush.xpose.msra.mxu0 0.0
        %665 = vmatpush.xpose.msra.mxu0 0.0
        %666 = vmatpush.xpose.msra.mxu0 0.0
        %667 = vmatpush.xpose.msra.mxu0 0.0
        %668 = vmatpush.xpose.msra.mxu0 0.0
        %669 = vmatpush.xpose.msra.mxu0 0.0
        %670 = vmatpush.xpose.msra.mxu0 0.0
        %671 = vmatpush.xpose.msra.mxu0 0.0
        %672 = vmatpush.xpose.msra.mxu0 0.0
        %673 = vmatpush.xpose.msra.mxu0 0.0
        %674 = vmatpush.xpose.msra.mxu0 %v657
        %675 = vmatmul.f32.gmra.mxu0 %v655
        %v676 = vpop.f32.mrf.mxu0
        %v677 = vadd.f32 0.0, %v676
        %678 = vdwg.mxu0
        %v679 = vmul.f32 %v677, 0.35355338
        %v680 = vsel %vm545, %v679, -1e+09
        %v681 = vsel %vm517, %v680, -inf
        %682 = vmax.xlane.f32.xlu0 %v681
        %v683 = vpop.xlane.xlu0 %682
        %v684 = vsub.f32 %v680, %v683
        %v685 = vmul.f32 %v684, 1.442695
        %v686 = vpow.pop %v685
        %v687 = vsel %vm517, %v686, 0.0
        %688 = vadd.xlane.f32.xlu0 %v687
        %v689 = vpop.xlane.xlu0 %688
        %v690 = vrcp.pop %v689
        %v691 = vmul.f32 %v686, %v690
        %692 = vrot.lane.b32.xlu0 %v515, 80
        %v693 = vpop.permute.xlu0 %692
        %v696 = vsel %vm517, %v691, 0
        %698 = vmatpush.msra.mxu0 0.0
        %699 = vmatpush.msra.mxu0 0.0
        %700 = vmatpush.msra.mxu0 0.0
        %701 = vmatpush.msra.mxu0 0.0
        %702 = vmatpush.msra.mxu0 0.0
        %703 = vmatpush.msra.mxu0 0.0
        %704 = vmatpush.msra.mxu0 0.0
        %705 = vmatpush.msra.mxu0 0.0
        %706 = vmatpush.msra.mxu0 0.0
        %707 = vmatpush.msra.mxu0 0.0
        %708 = vmatpush.msra.mxu0 0.0
        %709 = vmatpush.msra.mxu0 0.0
        %710 = vmatpush.msra.mxu0 0.0
        %711 = vmatpush.msra.mxu0 0.0
        %712 = vmatpush.msra.mxu0 0.0
        %713 = vmatpush.msra.mxu0 %v693
        %714 = vmatmul.f32.gmra.mxu0 %v696
        %v715 = vpop.f32.mrf.mxu0
        %v716 = vadd.f32 0.0, %v715
        %717 = vdwg.mxu0
        %718 = vrot.lane.b32.xlu0 %v514, 104
        %v719 = vpop.permute.xlu0 %718
        %720 = vrot.lane.b32.xlu0 %v515, 104
        %v721 = vpop.permute.xlu0 %720
        %v722 = vsel %vm517, %v719, 0
        %v724 = vsel %vm517, %v721, 0
        %726 = vmatpush.xpose.msra.mxu0 0.0
        %727 = vmatpush.xpose.msra.mxu0 0.0
        %728 = vmatpush.xpose.msra.mxu0 0.0
        %729 = vmatpush.xpose.msra.mxu0 0.0
        %730 = vmatpush.xpose.msra.mxu0 0.0
        %731 = vmatpush.xpose.msra.mxu0 0.0
        %732 = vmatpush.xpose.msra.mxu0 0.0
        %733 = vmatpush.xpose.msra.mxu0 0.0
        %734 = vmatpush.xpose.msra.mxu0 0.0
        %735 = vmatpush.xpose.msra.mxu0 0.0
        %736 = vmatpush.xpose.msra.mxu0 0.0
        %737 = vmatpush.xpose.msra.mxu0 0.0
        %738 = vmatpush.xpose.msra.mxu0 0.0
        %739 = vmatpush.xpose.msra.mxu0 0.0
        %740 = vmatpush.xpose.msra.mxu0 0.0
        %741 = vmatpush.xpose.msra.mxu0 %v724
        %742 = vmatmul.f32.gmra.mxu0 %v722
        %v743 = vpop.f32.mrf.mxu0
        %v744 = vadd.f32 0.0, %v743
        %745 = vdwg.mxu0
        %v746 = vmul.f32 %v744, 0.35355338
        %v747 = vsel %vm545, %v746, -1e+09
        %v748 = vsel %vm517, %v747, -inf
        %749 = vmax.xlane.f32.xlu0 %v748
        %v750 = vpop.xlane.xlu0 %749
        %v751 = vsub.f32 %v747, %v750
        %v752 = vmul.f32 %v751, 1.442695
        %v753 = vpow.pop %v752
        %v754 = vsel %vm517, %v753, 0.0
        %755 = vadd.xlane.f32.xlu0 %v754
        %v756 = vpop.xlane.xlu0 %755
        %v757 = vrcp.pop %v756
        %v758 = vmul.f32 %v753, %v757
        %759 = vrot.lane.b32.xlu0 %v515, 72
        %v760 = vpop.permute.xlu0 %759
        %v763 = vsel %vm517, %v758, 0
        %765 = vmatpush.msra.mxu0 0.0
        %766 = vmatpush.msra.mxu0 0.0
        %767 = vmatpush.msra.mxu0 0.0
        %768 = vmatpush.msra.mxu0 0.0
        %769 = vmatpush.msra.mxu0 0.0
        %770 = vmatpush.msra.mxu0 0.0
        %771 = vmatpush.msra.mxu0 0.0
        %772 = vmatpush.msra.mxu0 0.0
        %773 = vmatpush.msra.mxu0 0.0
        %774 = vmatpush.msra.mxu0 0.0
        %775 = vmatpush.msra.mxu0 0.0
        %776 = vmatpush.msra.mxu0 0.0
        %777 = vmatpush.msra.mxu0 0.0
        %778 = vmatpush.msra.mxu0 0.0
        %779 = vmatpush.msra.mxu0 0.0
        %780 = vmatpush.msra.mxu0 %v760
        %781 = vmatmul.f32.gmra.mxu0 %v763
        %v782 = vpop.f32.mrf.mxu0
        %v783 = vadd.f32 0.0, %v782
        %784 = vdwg.mxu0
        %786 = vrot.lane.b32.xlu0 %v649, 8
        %v787 = vpop.permute.xlu0 %786
        %790 = vrot.lane.b32.xlu0 %v716, 16
        %v791 = vpop.permute.xlu0 %790
        %794 = vrot.lane.b32.xlu0 %v783, 24
        %v795 = vpop.permute.xlu0 %794
        %v797 = vsel %vm517, %v582, %v787
        %vm798 = vcmask 130048
        %v799 = vsel %vm798, %v797, %v791
        %vm800 = vcmask 195584
        %v801 = vsel %vm800, %v799, %v795
        %v802 = vld [vmem:[%s4] sm:$0xff]
        %v803 = vld [vmem:[%s4 + $0x8] sm:$0xff]
        %v804 = vld [vmem:[%s4 + $0x10] sm:$0xff]
        %v805 = vld [vmem:[%s4 + $0x18] sm:$0xff]
        %v806 = vld [vmem:[%s5] sm:$0x1]
        %v808 = vperm.slane %v806, 0
        %vm810 = vcmask 261120
        %v812 = vsel %vm810, %v801, 0
        %814 = vmatpush.msra.mxu0 0.0
        %815 = vmatpush.msra.mxu0 0.0
        %816 = vmatpush.msra.mxu0 0.0
        %817 = vmatpush.msra.mxu0 0.0
        %818 = vmatpush.msra.mxu0 0.0
        %819 = vmatpush.msra.mxu0 0.0
        %820 = vmatpush.msra.mxu0 0.0
        %821 = vmatpush.msra.mxu0 0.0
        %822 = vmatpush.msra.mxu0 0.0
        %823 = vmatpush.msra.mxu0 0.0
        %824 = vmatpush.msra.mxu0 0.0
        %825 = vmatpush.msra.mxu0 0.0
        %826 = vmatpush.msra.mxu0 %v805
        %827 = vmatpush.msra.mxu0 %v804
        %828 = vmatpush.msra.mxu0 %v803
        %829 = vmatpush.msra.mxu0 %v802
        %830 = vmatmul.f32.gmra.mxu0 %v812
        %v831 = vpop.f32.mrf.mxu0
        %v832 = vadd.f32 %v808, %v831
        %833 = vdwg.mxu0
        %v834 = vld [vmem:[%s513] sm:$0xff]
        %v835 = vadd.f32 %v832, %v834
        %v836 = vld [vmem:[%s6] sm:$0x1]
        %v837 = vld [vmem:[%s7] sm:$0x1]
        %v838 = vsel %vm810, %v835, 0.0
        %839 = vadd.xlane.f32.xlu0 %v838
        %v840 = vpop.xlane.xlu0 %839
        %v841 = vrcp.pop 32.0
        %v842 = vmul.f32 32.0, %v841
        %v843 = vsub.f32 1.0, %v842
        %v844 = vmul.f32 %v841, %v843
        %v845 = vadd.f32 %v841, %v844
        %vm846 = vweird.f32 %v841
        %v847 = vsel %vm846, %v841, %v845
        %v848 = vmul.f32 %v840, %v847
        %v849 = vsub.f32 %v835, %v848
        %v850 = vmul.f32 %v849, %v849
        %v851 = vsel %vm810, %v850, 0.0
        %852 = vadd.xlane.f32.xlu0 %v851
        %v853 = vpop.xlane.xlu0 %852
        %v854 = vmul.f32 %v853, %v847
        %v855 = vadd.f32 %v854, 1e-12
        %v856 = vrsqrt.pop %v855
        %v857 = vmul.f32 %v856, %v855
        %v858 = vmul.f32 %v857, %v856
        %v859 = vmul.f32 0.5, %v858
        %v860 = vsub.f32 1.5, %v859
        %v861 = vmul.f32 %v856, %v860
        %vm862 = vweird.f32 %v855
        %vm863 = vweird.f32 %v856
        %vm864 = vmor %vm862, %vm863
        %v865 = vsel %vm864, %v856, %v861
        %v866 = vmul.f32 %v849, %v865
        %v868 = vperm.slane %v836, 0
        %v870 = vmul.f32 %v866, %v868
        %v872 = vperm.slane %v837, 0
        %v874 = vadd.f32 %v870, %v872
        %v875 = vld [vmem:[%s8] sm:$0xff]
        %v876 = vld [vmem:[%s8 + $0x8] sm:$0xff]
        %v877 = vld [vmem:[%s8 + $0x10] sm:$0xff]
        %v878 = vld [vmem:[%s8 + $0x18] sm:$0xff]
        %v879 = vld [vmem:[%s9] sm:$0x1]
        %v881 = vperm.slane %v879, 0
        %v884 = vsel %vm810, %v874, 0
        %886 = vmatpush.msra.mxu0 0.0
        %887 = vmatpush.msra.mxu0 0.0
        %888 = vmatpush.msra.mxu0 0.0
        %889 = vmatpush.msra.mxu0 0.0
        %890 = vmatpush.msra.mxu0 0.0
        %891 = vmatpush.msra.mxu0 0.0
        %892 = vmatpush.msra.mxu0 0.0
        %893 = vmatpush.msra.mxu0 0.0
        %894 = vmatpush.msra.mxu0 0.0
        %895 = vmatpush.msra.mxu0 0.0
        %896 = vmatpush.msra.mxu0 0.0
        %897 = vmatpush.msra.mxu0 0.0
        %898 = vmatpush.msra.mxu0 %v878
        %899 = vmatpush.msra.mxu0 %v877
        %900 = vmatpush.msra.mxu0 %v876
        %901 = vmatpush.msra.mxu0 %v875
        %902 = vmatmul.f32.gmra.mxu0 %v884
        %v903 = vpop.f32.mrf.mxu0
        %v904 = vadd.f32 %v881, %v903
        %905 = vdwg.mxu0
        %v906 = vmax.f32 %v904, 0.0
        %v907 = vld [vmem:[%s10] sm:$0xff]
        %v908 = vld [vmem:[%s10 + $0x8] sm:$0xff]
        %v909 = vld [vmem:[%s10 + $0x10] sm:$0xff]
        %v910 = vld [vmem:[%s10 + $0x18] sm:$0xff]
        %v911 = vld [vmem:[%s10 + $0x20] sm:$0xff]
        %v912 = vld [vmem:[%s10 + $0x28] sm:$0xff]
        %v913 = vld [vmem:[%s10 + $0x30] sm:$0xff]
        %v914 = vld [vmem:[%s10 + $0x38] sm:$0xff]
        %v915 = vld [vmem:[%s11] sm:$0x1]
        %v917 = vperm.slane %v915, 0
        %vm919 = vcmask 523264
        %v921 = vsel %vm919, %v906, 0
        %923 = vmatpush.msra.mxu0 0.0
        %924 = vmatpush.msra.mxu0 0.0
        %925 = vmatpush.msra.mxu0 0.0
        %926 = vmatpush.msra.mxu0 0.0
        %927 = vmatpush.msra.mxu0 0.0
        %928 = vmatpush.msra.mxu0 0.0
        %929 = vmatpush.msra.mxu0 0.0
        %930 = vmatpush.msra.mxu0 0.0
        %931 = vmatpush.msra.mxu0 %v914
        %932 = vmatpush.msra.mxu0 %v913
        %933 = vmatpush.msra.mxu0 %v912
        %934 = vmatpush.msra.mxu0 %v911
        %935 = vmatpush.msra.mxu0 %v910
        %936 = vmatpush.msra.mxu0 %v909
        %937 = vmatpush.msra.mxu0 %v908
        %938 = vmatpush.msra.mxu0 %v907
        %939 = vmatmul.f32.gmra.mxu0 %v921
        %v940 = vpop.f32.mrf.mxu0
        %v941 = vadd.f32 %v917, %v940
        %942 = vdwg.mxu0
        %v943 = vadd.f32 %v941, %v874
        %v944 = vld [vmem:[%s12] sm:$0x1]
        %v945 = vld [vmem:[%s13] sm:$0x1]
        %v946 = vsel %vm810, %v943, 0.0
        %947 = vadd.xlane.f32.xlu0 %v946
        %v948 = vpop.xlane.xlu0 %947
        %v949 = vmul.f32 %v948, %v847
        %v950 = vsub.f32 %v943, %v949
        %v951 = vmul.f32 %v950, %v950
        %v952 = vsel %vm810, %v951, 0.0
        %953 = vadd.xlane.f32.xlu0 %v952
        %v954 = vpop.xlane.xlu0 %953
        %v955 = vmul.f32 %v954, %v847
        %v956 = vadd.f32 %v955, 1e-12
        %v957 = vrsqrt.pop %v956
        %v958 = vmul.f32 %v957, %v956
        %v959 = vmul.f32 %v958, %v957
        %v960 = vmul.f32 0.5, %v959
        %v961 = vsub.f32 1.5, %v960
        %v962 = vmul.f32 %v957, %v961
        %vm963 = vweird.f32 %v956
        %vm964 = vweird.f32 %v957
        %vm965 = vmor %vm963, %vm964
        %v966 = vsel %vm965, %v957, %v962
        %v967 = vmul.f32 %v950, %v966
        %v969 = vperm.slane %v944, 0
        %v971 = vmul.f32 %v967, %v969
        %v973 = vperm.slane %v945, 0
        %v975 = vadd.f32 %v971, %v973
        %976 = vst.msk [vmem:[%s497] sm:$0xff] %vm810, %v975
        %s977 = sand.u32 %s350, 1
        %s978 = scalar_lea.sflag [#allocation3], %s977
        %s979 = sand.u32 %s350, 1
        %s980 = smul.addr %s979, 8
        %s981 = scalar_lea.vmem [#allocation2], %s980
        // Predicated region
        $region77: #{_lambda_.7} parent=75 // pred_check
          %p982 = pneg %p360
        $region78: #{_lambda_.7} parent=75 // pred_check_branch
          %984 = sbr.rel (%p982) target = $region80
        $region79: #{_lambda_.7} parent=75 // pred_region
          %986 = vsyncadd %s978, 0
          %s987 = smul.addr %s28, 8
          %s988 = scalar_lea.hbm %s14, %s987
          %s990 = sshll.u32 %s981, 4
          %s991 = int_to_ptr.vmem [resolvable:$true] %s990
          %s992 = sshll.u32 %s988, 4
          %s993 = int_to_ptr.hbm [resolvable:$true] %s992
          %995 = dma.vmem_to_hbm [thread:$0]  %s991, 128, %s993, %s978
        $region80: #{_lambda_.7} parent=75 // pred_fallthru
          _
      $region76: #{_lambda_.7} parent=5 // pred_fallthru
        _
      %p996 = scmp.le.s32.totalorder 2, %s23
      // Predicated region
      $region81: #{_lambda_.7} parent=5 // pred_check
        %p997 = pneg %p996
      $region82: #{_lambda_.7} parent=5 // pred_check_branch
        %999 = sbr.rel (%p997) target = $region84
      $region83: #{_lambda_.7} parent=5 // pred_region
        %s1000 = ssub.s32 %s23, 2
        // Predicated region
        $region85: #{_lambda_.7} parent=83 // pred_check
          %p1001 = pneg %p366
        $region86: #{_lambda_.7} parent=83 // pred_check_branch
          %1003 = sbr.rel (%p1001) target = $region88
        $region87: #{_lambda_.7} parent=83 // pred_region
          %s1004 = sand.u32 %s351, 1
          %s1005 = scalar_lea.sflag [#allocation3], %s1004
          %s1006 = sand.u32 %s351, 1
          %s1007 = smul.addr %s1006, 8
          %s1008 = scalar_lea.vmem [#allocation2], %s1007
          %1010 = dma.done %s1005, 128
        $region88: #{_lambda_.7} parent=83 // pred_fallthru
          _
      $region84: #{_lambda_.7} parent=5 // pred_fallthru
        _
    $region6: #{_lambda_.7} parent=1 // loop_footer
      %s27 = sadd.s32 1, %s23
    $region7: #{_lambda_.7} parent=1 // loop_footer_branch
      %22 = sbr.rel target = $region3
    $region8: #{_lambda_.7} parent=1 // loop_exit
      _
    %1011 = vsyncpa [#allocation3], 1
    %s1012 = scalar_lea.sflag [#allocation3], 1
    %1013 = vsyncpa %s1012, 1

</llo_original>
